<compile_context>
chip_gen: v7x
topology: tpu7x:2x2x1
jax: 0.10.0
libtpu: 0.0.40
codegen_flags: <defaults>
</compile_context>

<pallas_src>
import functools

import jax
import jax.numpy as jnp
from jax.experimental import pallas as pl
from jax.experimental.pallas import tpu as pltpu


DIM_FEEDFORWARD = 2048   # nn.TransformerEncoderLayer default
LN_EPS = 1e-5            # nn.LayerNorm default


def _pick_vmem_limit_bytes():
    # ~75% of physical VMEM, capped at 100 MiB (v5e/v6e: 128 MiB physical,
    # v7x: 64 MiB per TensorCore -> ~48 MiB scoped).
    try:
        cap = pltpu.get_tpu_info().vmem_capacity_bytes
    except Exception:
        cap = 128 * 1024 * 1024
    return int(min(cap * 3 // 4, 100 * 1024 * 1024))


_VMEM_LIMIT_BYTES = _pick_vmem_limit_bytes()


def _layer_norm(z, gamma, beta, eps):
    # PyTorch LayerNorm: biased variance, f32 statistics.
    mean = jnp.mean(z, axis=-1, keepdims=True)
    c = z - mean
    var = jnp.mean(c * c, axis=-1, keepdims=True)
    return c * jax.lax.rsqrt(var + eps) * gamma + beta


# ---------------------------------------------------------------------------
# Fused whole-forward kernel.  grid = (row_block, layer).
# Activations are batch-major rows: row n = b * S + s, so each sequence is a
# contiguous (S, D) slab; a row block holds `batch_block` whole sequences.
# ---------------------------------------------------------------------------
def _fused_forward_kernel(
    # inputs
    x_ref, ew_ref, eb_ref,
    inw_ref, inb_ref, outw_ref, outb_ref, ln1g_ref, ln1b_ref,
    ff1w_ref, ff1b_ref, ff2w_ref, ff2b_ref, ln2g_ref, ln2b_ref,
    fcw_ref, fcb_ref,
    # outputs
    y_ref,
    # scratch
    h_ref, attn_ref,
    *, batch_block, seq_len, n_heads, eps, ff_chunk):
    layer = pl.program_id(1)
    n_layers = pl.num_programs(1)

    rows, D = h_ref.shape
    dh = D // n_heads
    bf16 = jnp.bfloat16

    # ---- token embedding: first layer step of each row block ----
    @pl.when(layer == 0)
    def _():
        h_ref[...] = (
            jnp.dot(x_ref[...].astype(bf16), ew_ref[...],
                    preferred_element_type=jnp.float32)
            + eb_ref[...])

    h = h_ref[...]                                   # (rows, D) f32 residual stream
    h_bf = h.astype(bf16)

    # ---- multi-head self-attention (1/sqrt(dh) pre-folded into q weights) ----
    qkv = (jnp.dot(h_bf, inw_ref[...], preferred_element_type=jnp.float32)
           + inb_ref[...])                           # (rows, 3D) f32
    for hi in range(n_heads):
        lo = hi * dh
        qb = qkv[:, lo:lo + dh].reshape(batch_block, seq_len, dh).astype(bf16)
        kb = qkv[:, D + lo:D + lo + dh].reshape(batch_block, seq_len, dh).astype(bf16)
        vb = qkv[:, 2 * D + lo:2 * D + lo + dh].reshape(batch_block, seq_len, dh).astype(bf16)
        # scores: contract last dims of both operands, batched over sequences.
        s = jax.lax.dot_general(qb, kb, (((2,), (2,)), ((0,), (0,))),
                                preferred_element_type=jnp.float32)   # (b,S,S)
        s = s - jnp.max(s, axis=-1, keepdims=True)
        p = jnp.exp(s)
        p = p / jnp.sum(p, axis=-1, keepdims=True)                    # exact softmax
        o = jax.lax.dot_general(p.astype(bf16), vb,
                                (((2,), (1,)), ((0,), (0,))),
                                preferred_element_type=jnp.float32)   # (b,S,dh)
        # write this head's slice of the concatenated context into VMEM scratch
        attn_ref[:, lo:lo + dh] = o.reshape(rows, dh).astype(bf16)

    # single full-K (K = D) output projection instead of n_heads K=dh matmuls
    attn = (jnp.dot(attn_ref[...], outw_ref[...],
                    preferred_element_type=jnp.float32)
            + outb_ref[...])

    h = _layer_norm(h + attn, ln1g_ref[...], ln1b_ref[...], eps)      # post-norm 1
    h_bf = h.astype(bf16)

    # ---- feed-forward (ReLU), chunked along dim_feedforward ----
    dff = ff1b_ref.shape[-1]
    f = jnp.zeros((rows, D), jnp.float32)
    for c0 in range(0, dff, ff_chunk):
        z = (jnp.dot(h_bf, ff1w_ref[:, c0:c0 + ff_chunk],
                     preferred_element_type=jnp.float32)
             + ff1b_ref[:, c0:c0 + ff_chunk])
        z = jnp.maximum(z, 0.0).astype(bf16)
        f = f + jnp.dot(z, ff2w_ref[c0:c0 + ff_chunk, :],
                        preferred_element_type=jnp.float32)
    f = f + ff2b_ref[...]
    h = _layer_norm(h + f, ln2g_ref[...], ln2b_ref[...], eps)         # post-norm 2

    h_ref[...] = h

    # ---- output head: last layer step only (lane-dense padded columns) ----
    @pl.when(layer == n_layers - 1)
    def _():
        y_ref[...] = (
            jnp.dot(h.astype(bf16), fcw_ref[...],
                    preferred_element_type=jnp.float32)
            + fcb_ref[...]).astype(y_ref.dtype)


# ---------------------------------------------------------------------------
# Parameter init (deterministic, synthetic).  Per-layer weights are stacked
# along a leading layer axis; matmul operands are stored in bf16, biases and
# LayerNorm parameters in f32.  1/sqrt(dh) is folded into the q projection,
# and the output head is zero-padded to a 128-lane-dense width.
# ---------------------------------------------------------------------------
def init_params(key, input_dim, model_dim, n_heads, n_layers, output_dim,
                dim_feedforward=DIM_FEEDFORWARD):
    def w(k, shape, scale=0.05):
        return scale * jax.random.normal(k, shape, jnp.float32)

    keys = jax.random.split(key, 6)
    L, D = n_layers, model_dim
    dh = D // n_heads
    q_scale = 1.0 / (float(dh) ** 0.5)
    bf16 = jnp.bfloat16

    # fold 1/sqrt(dh) into the q columns of the in-projection (one-time).
    in_w = w(keys[2], (L, D, 3 * D))
    in_w = in_w.at[:, :, :D].multiply(q_scale)
    in_b = jnp.zeros((L, 1, 3 * D), jnp.float32)
    in_b = in_b.at[:, :, :D].multiply(q_scale)   # zeros here; kept for generality

    # lane-dense output head: pad output columns up to a multiple of 128 (zeros).
    out_pad = ((output_dim + 127) // 128) * 128
    fc_w = jnp.zeros((D, out_pad), jnp.float32).at[:, :output_dim].set(
        w(keys[1], (D, output_dim)))
    fc_b = jnp.zeros((1, out_pad), jnp.float32)

    return {
        "embed_w": w(keys[0], (input_dim, D)).astype(bf16),
        "embed_b": jnp.zeros((1, D), jnp.float32),
        "fc_w": fc_w.astype(bf16),
        "fc_b": fc_b,
        "in_w": in_w.astype(bf16),
        "in_b": in_b,
        "out_w": w(keys[3], (L, D, D)).astype(bf16),
        "out_b": jnp.zeros((L, 1, D), jnp.float32),
        "ln1_g": jnp.ones((L, 1, D), jnp.float32),
        "ln1_b": jnp.zeros((L, 1, D), jnp.float32),
        "ff1_w": w(keys[4], (L, D, dim_feedforward)).astype(bf16),
        "ff1_b": jnp.zeros((L, 1, dim_feedforward), jnp.float32),
        "ff2_w": w(keys[5], (L, dim_feedforward, D)).astype(bf16),
        "ff2_b": jnp.zeros((L, 1, D), jnp.float32),
        "ln2_g": jnp.ones((L, 1, D), jnp.float32),
        "ln2_b": jnp.zeros((L, 1, D), jnp.float32),
    }


# ---------------------------------------------------------------------------
# Forward pass: single fused pallas_call, grid = (row_blocks, layers).
# ---------------------------------------------------------------------------
@functools.partial(jax.jit,
                   static_argnames=("n_heads", "out_dim", "batch_block", "ff_chunk"))
def transformer_time_series_forward(params, x, n_heads, out_dim,
                                    batch_block=None, ff_chunk=512):
    S, B, F = x.shape
    N = S * B
    D = params["embed_w"].shape[1]
    out_pad = params["fc_w"].shape[1]
    L = params["in_w"].shape[0]
    dff = params["ff1_w"].shape[2]
    assert D % n_heads == 0

    # Row blocks hold whole sequences; >=2 blocks when possible so the
    # "parallel" grid axis can engage both v7x TensorCores.
    if batch_block is None:
        batch_block = B
        for cand in range(max(1, B // 2), 0, -1):
            if B % cand == 0:
                batch_block = cand
                break
    if (batch_block * S) % 8 != 0:
        batch_block = B          # full-extent block is always layout-legal
    rows = batch_block * S
    n_row_blocks = B // batch_block

    if dff % ff_chunk != 0:
        ff_chunk = dff

    # batch-major rows: each sequence is a contiguous (S, D) slab in-kernel.
    xb = x.transpose(1, 0, 2).reshape(N, F)

    def const2d_spec(arr):
        return pl.BlockSpec(tuple(arr.shape), lambda r, l: (0, 0))

    def row_spec(arr, row_block):
        return pl.BlockSpec((row_block, arr.shape[1]), lambda r, l: (r, 0))

    def layer_spec(arr):
        trail = (0,) * (arr.ndim - 1)
        return pl.BlockSpec((None,) + tuple(arr.shape[1:]),
                            lambda r, l, _t=trail: (l,) + _t)

    kernel = functools.partial(_fused_forward_kernel,
                               batch_block=batch_block, seq_len=S,
                               n_heads=n_heads, eps=LN_EPS, ff_chunk=ff_chunk)

    y = pl.pallas_call(
        kernel,
        out_shape=jax.ShapeDtypeStruct((N, out_pad), jnp.float32),
        grid=(n_row_blocks, L),
        in_specs=[
            row_spec(xb, rows),
            const2d_spec(params["embed_w"]), const2d_spec(params["embed_b"]),
            layer_spec(params["in_w"]), layer_spec(params["in_b"]),
            layer_spec(params["out_w"]), layer_spec(params["out_b"]),
            layer_spec(params["ln1_g"]), layer_spec(params["ln1_b"]),
            layer_spec(params["ff1_w"]), layer_spec(params["ff1_b"]),
            layer_spec(params["ff2_w"]), layer_spec(params["ff2_b"]),
            layer_spec(params["ln2_g"]), layer_spec(params["ln2_b"]),
            const2d_spec(params["fc_w"]), const2d_spec(params["fc_b"]),
        ],
        out_specs=pl.BlockSpec((rows, out_pad), lambda r, l: (r, 0)),
        scratch_shapes=[
            pltpu.VMEM((rows, D), jnp.float32),    # resident residual stream
            pltpu.VMEM((rows, D), jnp.bfloat16),   # per-layer head-concat buffer
        ],
        compiler_params=pltpu.CompilerParams(
            dimension_semantics=("parallel", "arbitrary"),
            vmem_limit_bytes=_VMEM_LIMIT_BYTES,
        ),
    )(xb, params["embed_w"], params["embed_b"],
      params["in_w"], params["in_b"],
      params["out_w"], params["out_b"],
      params["ln1_g"], params["ln1_b"],
      params["ff1_w"], params["ff1_b"],
      params["ff2_w"], params["ff2_b"],
      params["ln2_g"], params["ln2_b"],
      params["fc_w"], params["fc_b"])

    # strip lane padding, back to the PyTorch (S, B, output_dim) layout
    y = y[:, :out_dim]
    return y.reshape(B, S, out_dim).transpose(1, 0, 2)


if __name__ == "__main__":
    S, B = 8, 2
    input_dim, model_dim, n_heads, n_layers, output_dim = 4, 32, 4, 2, 1

    key = jax.random.PRNGKey(0)
    pkey, xkey = jax.random.split(key)
    params = init_params(pkey, input_dim, model_dim, n_heads, n_layers, output_dim)
    x = jax.random.normal(xkey, (S, B, input_dim), jnp.float32)

    y = transformer_time_series_forward(params, x, n_heads=n_heads, out_dim=output_dim)
    jax.block_until_ready(y)
    assert y.shape == (S, B, output_dim), y.shape
    assert bool(jnp.all(jnp.isfinite(y)))
    print("KERNEL_OK")
</pallas_src>

<mosaic_0001>
module attributes {stable_mosaic.version = 11 : i64} {
  func.func @_fused_forward_kernel(%arg0: i32, %arg1: i32, %arg2: memref<8x4xf32, #tpu.memory_space<vmem>>, %arg3: memref<4x32xbf16, #tpu.memory_space<vmem>>, %arg4: memref<1x32xf32, #tpu.memory_space<vmem>>, %arg5: memref<1x32x96xbf16, #tpu.memory_space<vmem>>, %arg6: memref<1x1x96xf32, #tpu.memory_space<vmem>>, %arg7: memref<1x32x32xbf16, #tpu.memory_space<vmem>>, %arg8: memref<1x1x32xf32, #tpu.memory_space<vmem>>, %arg9: memref<1x1x32xf32, #tpu.memory_space<vmem>>, %arg10: memref<1x1x32xf32, #tpu.memory_space<vmem>>, %arg11: memref<1x32x2048xbf16, #tpu.memory_space<vmem>>, %arg12: memref<1x1x2048xf32, #tpu.memory_space<vmem>>, %arg13: memref<1x2048x32xbf16, #tpu.memory_space<vmem>>, %arg14: memref<1x1x32xf32, #tpu.memory_space<vmem>>, %arg15: memref<1x1x32xf32, #tpu.memory_space<vmem>>, %arg16: memref<1x1x32xf32, #tpu.memory_space<vmem>>, %arg17: memref<32x128xbf16, #tpu.memory_space<vmem>>, %arg18: memref<1x128xf32, #tpu.memory_space<vmem>>, %arg19: memref<8x128xf32, #tpu.memory_space<vmem>>, %arg20: memref<8x32xf32, #tpu.memory_space<vmem>>, %arg21: memref<8x32xbf16, #tpu.memory_space<vmem>>) attributes {dimension_semantics = [#tpu.dimension_semantics<parallel>, #tpu.dimension_semantics<arbitrary>], iteration_bounds = array<i64: 2, 2>, scalar_prefetch = 0 : i64, scratch_operands = 2 : i64, tpu.core_type = #tpu.core_type<tc>, window_params = [{transform_indices = @transform_0, window_bounds = array<i64: 8, 4>}, {pipeline_mode = #tpu.pipeline_mode<synchronous>, transform_indices = @transform_1, window_bounds = array<i64: 4, 32>}, {pipeline_mode = #tpu.pipeline_mode<synchronous>, transform_indices = @transform_2, window_bounds = array<i64: 1, 32>}, {transform_indices = @transform_3, window_bounds = array<i64: 1, 32, 96>}, {transform_indices = @transform_4, window_bounds = array<i64: 1, 1, 96>}, {transform_indices = @transform_5, window_bounds = array<i64: 1, 32, 32>}, {transform_indices = @transform_6, window_bounds = array<i64: 1, 1, 32>}, {transform_indices = @transform_7, window_bounds = array<i64: 1, 1, 32>}, {transform_indices = @transform_8, window_bounds = array<i64: 1, 1, 32>}, {transform_indices = @transform_9, window_bounds = array<i64: 1, 32, 2048>}, {transform_indices = @transform_10, window_bounds = array<i64: 1, 1, 2048>}, {transform_indices = @transform_11, window_bounds = array<i64: 1, 2048, 32>}, {transform_indices = @transform_12, window_bounds = array<i64: 1, 1, 32>}, {transform_indices = @transform_13, window_bounds = array<i64: 1, 1, 32>}, {transform_indices = @transform_14, window_bounds = array<i64: 1, 1, 32>}, {pipeline_mode = #tpu.pipeline_mode<synchronous>, transform_indices = @transform_15, window_bounds = array<i64: 32, 128>}, {pipeline_mode = #tpu.pipeline_mode<synchronous>, transform_indices = @transform_16, window_bounds = array<i64: 1, 128>}, {transform_indices = @transform_17, window_bounds = array<i64: 8, 128>}]} {
    %c0_i32 = arith.constant 0 : i32
    %0 = arith.cmpi eq, %arg1, %c0_i32 : i32
    %1 = arith.extui %0 : i1 to i32
    %c0_i32_0 = arith.constant 0 : i32
    %2 = arith.cmpi ne, %1, %c0_i32_0 : i32
    scf.if %2 {
      %c0_112 = arith.constant 0 : index
      %c0_113 = arith.constant 0 : index
      %232 = vector.load %arg2[%c0_112, %c0_113] : memref<8x4xf32, #tpu.memory_space<vmem>>, vector<8x4xf32>
      %233 = arith.truncf %232 : vector<8x4xf32> to vector<8x4xbf16>
      %c0_114 = arith.constant 0 : index
      %c0_115 = arith.constant 0 : index
      %234 = vector.load %arg3[%c0_114, %c0_115] : memref<4x32xbf16, #tpu.memory_space<vmem>>, vector<4x32xbf16>
      %cst_116 = arith.constant dense<0.000000e+00> : vector<8x32xf32>
      %235 = tpu.matmul %233, %234, %cst_116 {dimension_numbers = #tpu.dot_dimension_numbers<[1], [0], [0], [1], [0, 0, 1, 1], [], []>} : vector<8x4xbf16>, vector<4x32xbf16>, vector<8x32xf32> -> vector<8x32xf32>
      %c0_117 = arith.constant 0 : index
      %c0_118 = arith.constant 0 : index
      %236 = vector.load %arg4[%c0_117, %c0_118] : memref<1x32xf32, #tpu.memory_space<vmem>>, vector<1x32xf32>
      %237 = vector.broadcast %236 : vector<1x32xf32> to vector<8x32xf32>
      %238 = arith.addf %235, %237 : vector<8x32xf32>
      %c0_119 = arith.constant 0 : index
      %c0_120 = arith.constant 0 : index
      %239 = vector.load %arg20[%c0_119, %c0_120] : memref<8x32xf32, #tpu.memory_space<vmem>>, vector<8x32xf32>
      tpu.vector_store %arg20[%c0_119, %c0_120], %238 {strides = array<i32>} : memref<8x32xf32, #tpu.memory_space<vmem>>, vector<8x32xf32>,
    } else {
    }
    %c0 = arith.constant 0 : index
    %c0_1 = arith.constant 0 : index
    %3 = vector.load %arg20[%c0, %c0_1] : memref<8x32xf32, #tpu.memory_space<vmem>>, vector<8x32xf32>
    %4 = arith.truncf %3 : vector<8x32xf32> to vector<8x32xbf16>
    %c0_2 = arith.constant 0 : index
    %c0_3 = arith.constant 0 : index
    %c0_4 = arith.constant 0 : index
    %5 = vector.load %arg5[%c0_2, %c0_3, %c0_4] : memref<1x32x96xbf16, #tpu.memory_space<vmem>>, vector<1x32x96xbf16>
    %6 = vector.shape_cast %5 : vector<1x32x96xbf16> to vector<32x96xbf16>
    %cst = arith.constant dense<0.000000e+00> : vector<8x96xf32>
    %7 = tpu.matmul %4, %6, %cst {dimension_numbers = #tpu.dot_dimension_numbers<[1], [0], [0], [1], [0, 0, 1, 1], [], []>} : vector<8x32xbf16>, vector<32x96xbf16>, vector<8x96xf32> -> vector<8x96xf32>
    %c0_5 = arith.constant 0 : index
    %c0_6 = arith.constant 0 : index
    %c0_7 = arith.constant 0 : index
    %8 = vector.load %arg6[%c0_5, %c0_6, %c0_7] : memref<1x1x96xf32, #tpu.memory_space<vmem>>, vector<1x1x96xf32>
    %9 = vector.shape_cast %8 : vector<1x1x96xf32> to vector<1x96xf32>
    %10 = vector.broadcast %9 : vector<1x96xf32> to vector<8x96xf32>
    %11 = arith.addf %7, %10 : vector<8x96xf32>
    %12 = vector.extract_strided_slice %11 {offsets = [0, 0], sizes = [8, 8], strides = [1, 1]} : vector<8x96xf32> to vector<8x8xf32>
    %13 = vector.shape_cast %12 : vector<8x8xf32> to vector<1x8x8xf32>
    %14 = arith.truncf %13 : vector<1x8x8xf32> to vector<1x8x8xbf16>
    %15 = vector.extract_strided_slice %11 {offsets = [0, 32], sizes = [8, 8], strides = [1, 1]} : vector<8x96xf32> to vector<8x8xf32>
    %16 = vector.shape_cast %15 : vector<8x8xf32> to vector<1x8x8xf32>
    %17 = arith.truncf %16 : vector<1x8x8xf32> to vector<1x8x8xbf16>
    %18 = vector.extract_strided_slice %11 {offsets = [0, 64], sizes = [8, 8], strides = [1, 1]} : vector<8x96xf32> to vector<8x8xf32>
    %19 = vector.shape_cast %18 : vector<8x8xf32> to vector<1x8x8xf32>
    %20 = arith.truncf %19 : vector<1x8x8xf32> to vector<1x8x8xbf16>
    %cst_8 = arith.constant dense<0.000000e+00> : vector<1x8x8xf32>
    %21 = tpu.matmul %14, %17, %cst_8 {dimension_numbers = #tpu.dot_dimension_numbers<[2], [2], [1], [1], [0, 0, 0, 1, 1, 1], [0], [0]>} : vector<1x8x8xbf16>, vector<1x8x8xbf16>, vector<1x8x8xf32> -> vector<1x8x8xf32>
    %cst_9 = arith.constant dense<0xFF800000> : vector<1x8xf32>
    %22 = vector.multi_reduction <maximumf>, %21, %cst_9 [2] : vector<1x8x8xf32> to vector<1x8xf32>
    %23 = vector.shape_cast %22 : vector<1x8xf32> to vector<1x8x1xf32>
    %24 = vector.broadcast %23 : vector<1x8x1xf32> to vector<1x8x8xf32>
    %25 = arith.subf %21, %24 : vector<1x8x8xf32>
    %26 = math.exp %25 : vector<1x8x8xf32>
    %cst_10 = arith.constant dense<0.000000e+00> : vector<1x8xf32>
    %27 = vector.multi_reduction <add>, %26, %cst_10 [2] : vector<1x8x8xf32> to vector<1x8xf32>
    %28 = vector.shape_cast %27 : vector<1x8xf32> to vector<1x8x1xf32>
    %29 = vector.broadcast %28 : vector<1x8x1xf32> to vector<1x8x8xf32>
    %30 = arith.divf %26, %29 : vector<1x8x8xf32>
    %31 = arith.truncf %30 : vector<1x8x8xf32> to vector<1x8x8xbf16>
    %cst_11 = arith.constant dense<0.000000e+00> : vector<1x8x8xf32>
    %32 = tpu.matmul %31, %20, %cst_11 {dimension_numbers = #tpu.dot_dimension_numbers<[2], [1], [1], [2], [0, 0, 0, 1, 1, 2], [0], [0]>} : vector<1x8x8xbf16>, vector<1x8x8xbf16>, vector<1x8x8xf32> -> vector<1x8x8xf32>
    %33 = vector.shape_cast %32 : vector<1x8x8xf32> to vector<8x8xf32>
    %34 = arith.truncf %33 : vector<8x8xf32> to vector<8x8xbf16>
    %c0_12 = arith.constant 0 : index
    %c0_13 = arith.constant 0 : index
    %35 = vector.load %arg21[%c0_12, %c0_13] : memref<8x32xbf16, #tpu.memory_space<vmem>>, vector<8x8xbf16>
    tpu.vector_store %arg21[%c0_12, %c0_13], %34 {strides = array<i32>} : memref<8x32xbf16, #tpu.memory_space<vmem>>, vector<8x8xbf16>,
    %36 = vector.extract_strided_slice %11 {offsets = [0, 8], sizes = [8, 8], strides = [1, 1]} : vector<8x96xf32> to vector<8x8xf32>
    %37 = vector.shape_cast %36 : vector<8x8xf32> to vector<1x8x8xf32>
    %38 = arith.truncf %37 : vector<1x8x8xf32> to vector<1x8x8xbf16>
    %39 = vector.extract_strided_slice %11 {offsets = [0, 40], sizes = [8, 8], strides = [1, 1]} : vector<8x96xf32> to vector<8x8xf32>
    %40 = vector.shape_cast %39 : vector<8x8xf32> to vector<1x8x8xf32>
    %41 = arith.truncf %40 : vector<1x8x8xf32> to vector<1x8x8xbf16>
    %42 = vector.extract_strided_slice %11 {offsets = [0, 72], sizes = [8, 8], strides = [1, 1]} : vector<8x96xf32> to vector<8x8xf32>
    %43 = vector.shape_cast %42 : vector<8x8xf32> to vector<1x8x8xf32>
    %44 = arith.truncf %43 : vector<1x8x8xf32> to vector<1x8x8xbf16>
    %cst_14 = arith.constant dense<0.000000e+00> : vector<1x8x8xf32>
    %45 = tpu.matmul %38, %41, %cst_14 {dimension_numbers = #tpu.dot_dimension_numbers<[2], [2], [1], [1], [0, 0, 0, 1, 1, 1], [0], [0]>} : vector<1x8x8xbf16>, vector<1x8x8xbf16>, vector<1x8x8xf32> -> vector<1x8x8xf32>
    %cst_15 = arith.constant dense<0xFF800000> : vector<1x8xf32>
    %46 = vector.multi_reduction <maximumf>, %45, %cst_15 [2] : vector<1x8x8xf32> to vector<1x8xf32>
    %47 = vector.shape_cast %46 : vector<1x8xf32> to vector<1x8x1xf32>
    %48 = vector.broadcast %47 : vector<1x8x1xf32> to vector<1x8x8xf32>
    %49 = arith.subf %45, %48 : vector<1x8x8xf32>
    %50 = math.exp %49 : vector<1x8x8xf32>
    %cst_16 = arith.constant dense<0.000000e+00> : vector<1x8xf32>
    %51 = vector.multi_reduction <add>, %50, %cst_16 [2] : vector<1x8x8xf32> to vector<1x8xf32>
    %52 = vector.shape_cast %51 : vector<1x8xf32> to vector<1x8x1xf32>
    %53 = vector.broadcast %52 : vector<1x8x1xf32> to vector<1x8x8xf32>
    %54 = arith.divf %50, %53 : vector<1x8x8xf32>
    %55 = arith.truncf %54 : vector<1x8x8xf32> to vector<1x8x8xbf16>
    %cst_17 = arith.constant dense<0.000000e+00> : vector<1x8x8xf32>
    %56 = tpu.matmul %55, %44, %cst_17 {dimension_numbers = #tpu.dot_dimension_numbers<[2], [1], [1], [2], [0, 0, 0, 1, 1, 2], [0], [0]>} : vector<1x8x8xbf16>, vector<1x8x8xbf16>, vector<1x8x8xf32> -> vector<1x8x8xf32>
    %57 = vector.shape_cast %56 : vector<1x8x8xf32> to vector<8x8xf32>
    %58 = arith.truncf %57 : vector<8x8xf32> to vector<8x8xbf16>
    %c0_18 = arith.constant 0 : index
    %c8 = arith.constant 8 : index
    %59 = vector.load %arg21[%c0_18, %c8] : memref<8x32xbf16, #tpu.memory_space<vmem>>, vector<8x8xbf16>
    tpu.vector_store %arg21[%c0_18, %c8], %58 {strides = array<i32>} : memref<8x32xbf16, #tpu.memory_space<vmem>>, vector<8x8xbf16>,
    %60 = vector.extract_strided_slice %11 {offsets = [0, 16], sizes = [8, 8], strides = [1, 1]} : vector<8x96xf32> to vector<8x8xf32>
    %61 = vector.shape_cast %60 : vector<8x8xf32> to vector<1x8x8xf32>
    %62 = arith.truncf %61 : vector<1x8x8xf32> to vector<1x8x8xbf16>
    %63 = vector.extract_strided_slice %11 {offsets = [0, 48], sizes = [8, 8], strides = [1, 1]} : vector<8x96xf32> to vector<8x8xf32>
    %64 = vector.shape_cast %63 : vector<8x8xf32> to vector<1x8x8xf32>
    %65 = arith.truncf %64 : vector<1x8x8xf32> to vector<1x8x8xbf16>
    %66 = vector.extract_strided_slice %11 {offsets = [0, 80], sizes = [8, 8], strides = [1, 1]} : vector<8x96xf32> to vector<8x8xf32>
    %67 = vector.shape_cast %66 : vector<8x8xf32> to vector<1x8x8xf32>
    %68 = arith.truncf %67 : vector<1x8x8xf32> to vector<1x8x8xbf16>
    %cst_19 = arith.constant dense<0.000000e+00> : vector<1x8x8xf32>
    %69 = tpu.matmul %62, %65, %cst_19 {dimension_numbers = #tpu.dot_dimension_numbers<[2], [2], [1], [1], [0, 0, 0, 1, 1, 1], [0], [0]>} : vector<1x8x8xbf16>, vector<1x8x8xbf16>, vector<1x8x8xf32> -> vector<1x8x8xf32>
    %cst_20 = arith.constant dense<0xFF800000> : vector<1x8xf32>
    %70 = vector.multi_reduction <maximumf>, %69, %cst_20 [2] : vector<1x8x8xf32> to vector<1x8xf32>
    %71 = vector.shape_cast %70 : vector<1x8xf32> to vector<1x8x1xf32>
    %72 = vector.broadcast %71 : vector<1x8x1xf32> to vector<1x8x8xf32>
    %73 = arith.subf %69, %72 : vector<1x8x8xf32>
    %74 = math.exp %73 : vector<1x8x8xf32>
    %cst_21 = arith.constant dense<0.000000e+00> : vector<1x8xf32>
    %75 = vector.multi_reduction <add>, %74, %cst_21 [2] : vector<1x8x8xf32> to vector<1x8xf32>
    %76 = vector.shape_cast %75 : vector<1x8xf32> to vector<1x8x1xf32>
    %77 = vector.broadcast %76 : vector<1x8x1xf32> to vector<1x8x8xf32>
    %78 = arith.divf %74, %77 : vector<1x8x8xf32>
    %79 = arith.truncf %78 : vector<1x8x8xf32> to vector<1x8x8xbf16>
    %cst_22 = arith.constant dense<0.000000e+00> : vector<1x8x8xf32>
    %80 = tpu.matmul %79, %68, %cst_22 {dimension_numbers = #tpu.dot_dimension_numbers<[2], [1], [1], [2], [0, 0, 0, 1, 1, 2], [0], [0]>} : vector<1x8x8xbf16>, vector<1x8x8xbf16>, vector<1x8x8xf32> -> vector<1x8x8xf32>
    %81 = vector.shape_cast %80 : vector<1x8x8xf32> to vector<8x8xf32>
    %82 = arith.truncf %81 : vector<8x8xf32> to vector<8x8xbf16>
    %c0_23 = arith.constant 0 : index
    %c16 = arith.constant 16 : index
    %83 = vector.load %arg21[%c0_23, %c16] : memref<8x32xbf16, #tpu.memory_space<vmem>>, vector<8x8xbf16>
    tpu.vector_store %arg21[%c0_23, %c16], %82 {strides = array<i32>} : memref<8x32xbf16, #tpu.memory_space<vmem>>, vector<8x8xbf16>,
    %84 = vector.extract_strided_slice %11 {offsets = [0, 24], sizes = [8, 8], strides = [1, 1]} : vector<8x96xf32> to vector<8x8xf32>
    %85 = vector.shape_cast %84 : vector<8x8xf32> to vector<1x8x8xf32>
    %86 = arith.truncf %85 : vector<1x8x8xf32> to vector<1x8x8xbf16>
    %87 = vector.extract_strided_slice %11 {offsets = [0, 56], sizes = [8, 8], strides = [1, 1]} : vector<8x96xf32> to vector<8x8xf32>
    %88 = vector.shape_cast %87 : vector<8x8xf32> to vector<1x8x8xf32>
    %89 = arith.truncf %88 : vector<1x8x8xf32> to vector<1x8x8xbf16>
    %90 = vector.extract_strided_slice %11 {offsets = [0, 88], sizes = [8, 8], strides = [1, 1]} : vector<8x96xf32> to vector<8x8xf32>
    %91 = vector.shape_cast %90 : vector<8x8xf32> to vector<1x8x8xf32>
    %92 = arith.truncf %91 : vector<1x8x8xf32> to vector<1x8x8xbf16>
    %cst_24 = arith.constant dense<0.000000e+00> : vector<1x8x8xf32>
    %93 = tpu.matmul %86, %89, %cst_24 {dimension_numbers = #tpu.dot_dimension_numbers<[2], [2], [1], [1], [0, 0, 0, 1, 1, 1], [0], [0]>} : vector<1x8x8xbf16>, vector<1x8x8xbf16>, vector<1x8x8xf32> -> vector<1x8x8xf32>
    %cst_25 = arith.constant dense<0xFF800000> : vector<1x8xf32>
    %94 = vector.multi_reduction <maximumf>, %93, %cst_25 [2] : vector<1x8x8xf32> to vector<1x8xf32>
    %95 = vector.shape_cast %94 : vector<1x8xf32> to vector<1x8x1xf32>
    %96 = vector.broadcast %95 : vector<1x8x1xf32> to vector<1x8x8xf32>
    %97 = arith.subf %93, %96 : vector<1x8x8xf32>
    %98 = math.exp %97 : vector<1x8x8xf32>
    %cst_26 = arith.constant dense<0.000000e+00> : vector<1x8xf32>
    %99 = vector.multi_reduction <add>, %98, %cst_26 [2] : vector<1x8x8xf32> to vector<1x8xf32>
    %100 = vector.shape_cast %99 : vector<1x8xf32> to vector<1x8x1xf32>
    %101 = vector.broadcast %100 : vector<1x8x1xf32> to vector<1x8x8xf32>
    %102 = arith.divf %98, %101 : vector<1x8x8xf32>
    %103 = arith.truncf %102 : vector<1x8x8xf32> to vector<1x8x8xbf16>
    %cst_27 = arith.constant dense<0.000000e+00> : vector<1x8x8xf32>
    %104 = tpu.matmul %103, %92, %cst_27 {dimension_numbers = #tpu.dot_dimension_numbers<[2], [1], [1], [2], [0, 0, 0, 1, 1, 2], [0], [0]>} : vector<1x8x8xbf16>, vector<1x8x8xbf16>, vector<1x8x8xf32> -> vector<1x8x8xf32>
    %105 = vector.shape_cast %104 : vector<1x8x8xf32> to vector<8x8xf32>
    %106 = arith.truncf %105 : vector<8x8xf32> to vector<8x8xbf16>
    %c0_28 = arith.constant 0 : index
    %c24 = arith.constant 24 : index
    %107 = vector.load %arg21[%c0_28, %c24] : memref<8x32xbf16, #tpu.memory_space<vmem>>, vector<8x8xbf16>
    tpu.vector_store %arg21[%c0_28, %c24], %106 {strides = array<i32>} : memref<8x32xbf16, #tpu.memory_space<vmem>>, vector<8x8xbf16>,
    %c0_29 = arith.constant 0 : index
    %c0_30 = arith.constant 0 : index
    %108 = vector.load %arg21[%c0_29, %c0_30] : memref<8x32xbf16, #tpu.memory_space<vmem>>, vector<8x32xbf16>
    %c0_31 = arith.constant 0 : index
    %c0_32 = arith.constant 0 : index
    %c0_33 = arith.constant 0 : index
    %109 = vector.load %arg7[%c0_31, %c0_32, %c0_33] : memref<1x32x32xbf16, #tpu.memory_space<vmem>>, vector<1x32x32xbf16>
    %110 = vector.shape_cast %109 : vector<1x32x32xbf16> to vector<32x32xbf16>
    %cst_34 = arith.constant dense<0.000000e+00> : vector<8x32xf32>
    %111 = tpu.matmul %108, %110, %cst_34 {dimension_numbers = #tpu.dot_dimension_numbers<[1], [0], [0], [1], [0, 0, 1, 1], [], []>} : vector<8x32xbf16>, vector<32x32xbf16>, vector<8x32xf32> -> vector<8x32xf32>
    %c0_35 = arith.constant 0 : index
    %c0_36 = arith.constant 0 : index
    %c0_37 = arith.constant 0 : index
    %112 = vector.load %arg8[%c0_35, %c0_36, %c0_37] : memref<1x1x32xf32, #tpu.memory_space<vmem>>, vector<1x1x32xf32>
    %113 = vector.shape_cast %112 : vector<1x1x32xf32> to vector<1x32xf32>
    %114 = vector.broadcast %113 : vector<1x32xf32> to vector<8x32xf32>
    %115 = arith.addf %111, %114 : vector<8x32xf32>
    %116 = arith.addf %3, %115 : vector<8x32xf32>
    %c0_38 = arith.constant 0 : index
    %c0_39 = arith.constant 0 : index
    %c0_40 = arith.constant 0 : index
    %117 = vector.load %arg9[%c0_38, %c0_39, %c0_40] : memref<1x1x32xf32, #tpu.memory_space<vmem>>, vector<1x1x32xf32>
    %118 = vector.shape_cast %117 : vector<1x1x32xf32> to vector<1x32xf32>
    %c0_41 = arith.constant 0 : index
    %c0_42 = arith.constant 0 : index
    %c0_43 = arith.constant 0 : index
    %119 = vector.load %arg10[%c0_41, %c0_42, %c0_43] : memref<1x1x32xf32, #tpu.memory_space<vmem>>, vector<1x1x32xf32>
    %120 = vector.shape_cast %119 : vector<1x1x32xf32> to vector<1x32xf32>
    %cst_44 = arith.constant dense<0.000000e+00> : vector<8xf32>
    %121 = vector.multi_reduction <add>, %116, %cst_44 [1] : vector<8x32xf32> to vector<8xf32>
    %122 = vector.shape_cast %121 : vector<8xf32> to vector<8x1xf32>
    %cst_45 = arith.constant 3.200000e+01 : f32
    %123 = vector.broadcast %cst_45 : f32 to vector<8x1xf32>
    %124 = arith.divf %122, %123 : vector<8x1xf32>
    %125 = vector.broadcast %124 : vector<8x1xf32> to vector<8x32xf32>
    %126 = arith.subf %116, %125 : vector<8x32xf32>
    %127 = arith.mulf %126, %126 : vector<8x32xf32>
    %cst_46 = arith.constant dense<0.000000e+00> : vector<8xf32>
    %128 = vector.multi_reduction <add>, %127, %cst_46 [1] : vector<8x32xf32> to vector<8xf32>
    %129 = vector.shape_cast %128 : vector<8xf32> to vector<8x1xf32>
    %cst_47 = arith.constant 3.200000e+01 : f32
    %130 = vector.broadcast %cst_47 : f32 to vector<8x1xf32>
    %131 = arith.divf %129, %130 : vector<8x1xf32>
    %cst_48 = arith.constant 9.99999974E-6 : f32
    %132 = vector.broadcast %cst_48 : f32 to vector<8x1xf32>
    %133 = arith.addf %131, %132 : vector<8x1xf32>
    %134 = math.rsqrt %133 : vector<8x1xf32>
    %135 = vector.broadcast %134 : vector<8x1xf32> to vector<8x32xf32>
    %136 = arith.mulf %126, %135 : vector<8x32xf32>
    %137 = vector.broadcast %118 : vector<1x32xf32> to vector<8x32xf32>
    %138 = arith.mulf %136, %137 : vector<8x32xf32>
    %139 = vector.broadcast %120 : vector<1x32xf32> to vector<8x32xf32>
    %140 = arith.addf %138, %139 : vector<8x32xf32>
    %141 = arith.truncf %140 : vector<8x32xf32> to vector<8x32xbf16>
    %cst_49 = arith.constant 0.000000e+00 : f32
    %142 = vector.broadcast %cst_49 : f32 to vector<8x32xf32>
    %c0_50 = arith.constant 0 : index
    %c0_51 = arith.constant 0 : index
    %c0_52 = arith.constant 0 : index
    %143 = vector.load %arg11[%c0_50, %c0_51, %c0_52] : memref<1x32x2048xbf16, #tpu.memory_space<vmem>>, vector<1x32x512xbf16>
    %144 = vector.shape_cast %143 : vector<1x32x512xbf16> to vector<32x512xbf16>
    %cst_53 = arith.constant dense<0.000000e+00> : vector<8x512xf32>
    %145 = tpu.matmul %141, %144, %cst_53 {dimension_numbers = #tpu.dot_dimension_numbers<[1], [0], [0], [1], [0, 0, 1, 1], [], []>} : vector<8x32xbf16>, vector<32x512xbf16>, vector<8x512xf32> -> vector<8x512xf32>
    %c0_54 = arith.constant 0 : index
    %c0_55 = arith.constant 0 : index
    %c0_56 = arith.constant 0 : index
    %146 = vector.load %arg12[%c0_54, %c0_55, %c0_56] : memref<1x1x2048xf32, #tpu.memory_space<vmem>>, vector<1x1x512xf32>
    %147 = vector.shape_cast %146 : vector<1x1x512xf32> to vector<1x512xf32>
    %148 = vector.broadcast %147 : vector<1x512xf32> to vector<8x512xf32>
    %149 = arith.addf %145, %148 : vector<8x512xf32>
    %cst_57 = arith.constant 0.000000e+00 : f32
    %150 = vector.broadcast %cst_57 : f32 to vector<8x512xf32>
    %151 = arith.maximumf %149, %150 : vector<8x512xf32>
    %152 = arith.truncf %151 : vector<8x512xf32> to vector<8x512xbf16>
    %c0_58 = arith.constant 0 : index
    %c0_59 = arith.constant 0 : index
    %c0_60 = arith.constant 0 : index
    %153 = vector.load %arg13[%c0_58, %c0_59, %c0_60] : memref<1x2048x32xbf16, #tpu.memory_space<vmem>>, vector<1x512x32xbf16>
    %154 = vector.shape_cast %153 : vector<1x512x32xbf16> to vector<512x32xbf16>
    %cst_61 = arith.constant dense<0.000000e+00> : vector<8x32xf32>
    %155 = tpu.matmul %152, %154, %cst_61 {dimension_numbers = #tpu.dot_dimension_numbers<[1], [0], [0], [1], [0, 0, 1, 1], [], []>} : vector<8x512xbf16>, vector<512x32xbf16>, vector<8x32xf32> -> vector<8x32xf32>
    %156 = arith.addf %142, %155 : vector<8x32xf32>
    %c0_62 = arith.constant 0 : index
    %c0_63 = arith.constant 0 : index
    %c512 = arith.constant 512 : index
    %157 = vector.load %arg11[%c0_62, %c0_63, %c512] : memref<1x32x2048xbf16, #tpu.memory_space<vmem>>, vector<1x32x512xbf16>
    %158 = vector.shape_cast %157 : vector<1x32x512xbf16> to vector<32x512xbf16>
    %cst_64 = arith.constant dense<0.000000e+00> : vector<8x512xf32>
    %159 = tpu.matmul %141, %158, %cst_64 {dimension_numbers = #tpu.dot_dimension_numbers<[1], [0], [0], [1], [0, 0, 1, 1], [], []>} : vector<8x32xbf16>, vector<32x512xbf16>, vector<8x512xf32> -> vector<8x512xf32>
    %c0_65 = arith.constant 0 : index
    %c0_66 = arith.constant 0 : index
    %c512_67 = arith.constant 512 : index
    %160 = vector.load %arg12[%c0_65, %c0_66, %c512_67] : memref<1x1x2048xf32, #tpu.memory_space<vmem>>, vector<1x1x512xf32>
    %161 = vector.shape_cast %160 : vector<1x1x512xf32> to vector<1x512xf32>
    %162 = vector.broadcast %161 : vector<1x512xf32> to vector<8x512xf32>
    %163 = arith.addf %159, %162 : vector<8x512xf32>
    %cst_68 = arith.constant 0.000000e+00 : f32
    %164 = vector.broadcast %cst_68 : f32 to vector<8x512xf32>
    %165 = arith.maximumf %163, %164 : vector<8x512xf32>
    %166 = arith.truncf %165 : vector<8x512xf32> to vector<8x512xbf16>
    %c0_69 = arith.constant 0 : index
    %c512_70 = arith.constant 512 : index
    %c0_71 = arith.constant 0 : index
    %167 = vector.load %arg13[%c0_69, %c512_70, %c0_71] : memref<1x2048x32xbf16, #tpu.memory_space<vmem>>, vector<1x512x32xbf16>
    %168 = vector.shape_cast %167 : vector<1x512x32xbf16> to vector<512x32xbf16>
    %cst_72 = arith.constant dense<0.000000e+00> : vector<8x32xf32>
    %169 = tpu.matmul %166, %168, %cst_72 {dimension_numbers = #tpu.dot_dimension_numbers<[1], [0], [0], [1], [0, 0, 1, 1], [], []>} : vector<8x512xbf16>, vector<512x32xbf16>, vector<8x32xf32> -> vector<8x32xf32>
    %170 = arith.addf %156, %169 : vector<8x32xf32>
    %c0_73 = arith.constant 0 : index
    %c0_74 = arith.constant 0 : index
    %c1024 = arith.constant 1024 : index
    %171 = vector.load %arg11[%c0_73, %c0_74, %c1024] : memref<1x32x2048xbf16, #tpu.memory_space<vmem>>, vector<1x32x512xbf16>
    %172 = vector.shape_cast %171 : vector<1x32x512xbf16> to vector<32x512xbf16>
    %cst_75 = arith.constant dense<0.000000e+00> : vector<8x512xf32>
    %173 = tpu.matmul %141, %172, %cst_75 {dimension_numbers = #tpu.dot_dimension_numbers<[1], [0], [0], [1], [0, 0, 1, 1], [], []>} : vector<8x32xbf16>, vector<32x512xbf16>, vector<8x512xf32> -> vector<8x512xf32>
    %c0_76 = arith.constant 0 : index
    %c0_77 = arith.constant 0 : index
    %c1024_78 = arith.constant 1024 : index
    %174 = vector.load %arg12[%c0_76, %c0_77, %c1024_78] : memref<1x1x2048xf32, #tpu.memory_space<vmem>>, vector<1x1x512xf32>
    %175 = vector.shape_cast %174 : vector<1x1x512xf32> to vector<1x512xf32>
    %176 = vector.broadcast %175 : vector<1x512xf32> to vector<8x512xf32>
    %177 = arith.addf %173, %176 : vector<8x512xf32>
    %cst_79 = arith.constant 0.000000e+00 : f32
    %178 = vector.broadcast %cst_79 : f32 to vector<8x512xf32>
    %179 = arith.maximumf %177, %178 : vector<8x512xf32>
    %180 = arith.truncf %179 : vector<8x512xf32> to vector<8x512xbf16>
    %c0_80 = arith.constant 0 : index
    %c1024_81 = arith.constant 1024 : index
    %c0_82 = arith.constant 0 : index
    %181 = vector.load %arg13[%c0_80, %c1024_81, %c0_82] : memref<1x2048x32xbf16, #tpu.memory_space<vmem>>, vector<1x512x32xbf16>
    %182 = vector.shape_cast %181 : vector<1x512x32xbf16> to vector<512x32xbf16>
    %cst_83 = arith.constant dense<0.000000e+00> : vector<8x32xf32>
    %183 = tpu.matmul %180, %182, %cst_83 {dimension_numbers = #tpu.dot_dimension_numbers<[1], [0], [0], [1], [0, 0, 1, 1], [], []>} : vector<8x512xbf16>, vector<512x32xbf16>, vector<8x32xf32> -> vector<8x32xf32>
    %184 = arith.addf %170, %183 : vector<8x32xf32>
    %c0_84 = arith.constant 0 : index
    %c0_85 = arith.constant 0 : index
    %c1536 = arith.constant 1536 : index
    %185 = vector.load %arg11[%c0_84, %c0_85, %c1536] : memref<1x32x2048xbf16, #tpu.memory_space<vmem>>, vector<1x32x512xbf16>
    %186 = vector.shape_cast %185 : vector<1x32x512xbf16> to vector<32x512xbf16>
    %cst_86 = arith.constant dense<0.000000e+00> : vector<8x512xf32>
    %187 = tpu.matmul %141, %186, %cst_86 {dimension_numbers = #tpu.dot_dimension_numbers<[1], [0], [0], [1], [0, 0, 1, 1], [], []>} : vector<8x32xbf16>, vector<32x512xbf16>, vector<8x512xf32> -> vector<8x512xf32>
    %c0_87 = arith.constant 0 : index
    %c0_88 = arith.constant 0 : index
    %c1536_89 = arith.constant 1536 : index
    %188 = vector.load %arg12[%c0_87, %c0_88, %c1536_89] : memref<1x1x2048xf32, #tpu.memory_space<vmem>>, vector<1x1x512xf32>
    %189 = vector.shape_cast %188 : vector<1x1x512xf32> to vector<1x512xf32>
    %190 = vector.broadcast %189 : vector<1x512xf32> to vector<8x512xf32>
    %191 = arith.addf %187, %190 : vector<8x512xf32>
    %cst_90 = arith.constant 0.000000e+00 : f32
    %192 = vector.broadcast %cst_90 : f32 to vector<8x512xf32>
    %193 = arith.maximumf %191, %192 : vector<8x512xf32>
    %194 = arith.truncf %193 : vector<8x512xf32> to vector<8x512xbf16>
    %c0_91 = arith.constant 0 : index
    %c1536_92 = arith.constant 1536 : index
    %c0_93 = arith.constant 0 : index
    %195 = vector.load %arg13[%c0_91, %c1536_92, %c0_93] : memref<1x2048x32xbf16, #tpu.memory_space<vmem>>, vector<1x512x32xbf16>
    %196 = vector.shape_cast %195 : vector<1x512x32xbf16> to vector<512x32xbf16>
    %cst_94 = arith.constant dense<0.000000e+00> : vector<8x32xf32>
    %197 = tpu.matmul %194, %196, %cst_94 {dimension_numbers = #tpu.dot_dimension_numbers<[1], [0], [0], [1], [0, 0, 1, 1], [], []>} : vector<8x512xbf16>, vector<512x32xbf16>, vector<8x32xf32> -> vector<8x32xf32>
    %198 = arith.addf %184, %197 : vector<8x32xf32>
    %c0_95 = arith.constant 0 : index
    %c0_96 = arith.constant 0 : index
    %c0_97 = arith.constant 0 : index
    %199 = vector.load %arg14[%c0_95, %c0_96, %c0_97] : memref<1x1x32xf32, #tpu.memory_space<vmem>>, vector<1x1x32xf32>
    %200 = vector.shape_cast %199 : vector<1x1x32xf32> to vector<1x32xf32>
    %201 = vector.broadcast %200 : vector<1x32xf32> to vector<8x32xf32>
    %202 = arith.addf %198, %201 : vector<8x32xf32>
    %203 = arith.addf %140, %202 : vector<8x32xf32>
    %c0_98 = arith.constant 0 : index
    %c0_99 = arith.constant 0 : index
    %c0_100 = arith.constant 0 : index
    %204 = vector.load %arg15[%c0_98, %c0_99, %c0_100] : memref<1x1x32xf32, #tpu.memory_space<vmem>>, vector<1x1x32xf32>
    %205 = vector.shape_cast %204 : vector<1x1x32xf32> to vector<1x32xf32>
    %c0_101 = arith.constant 0 : index
    %c0_102 = arith.constant 0 : index
    %c0_103 = arith.constant 0 : index
    %206 = vector.load %arg16[%c0_101, %c0_102, %c0_103] : memref<1x1x32xf32, #tpu.memory_space<vmem>>, vector<1x1x32xf32>
    %207 = vector.shape_cast %206 : vector<1x1x32xf32> to vector<1x32xf32>
    %cst_104 = arith.constant dense<0.000000e+00> : vector<8xf32>
    %208 = vector.multi_reduction <add>, %203, %cst_104 [1] : vector<8x32xf32> to vector<8xf32>
    %209 = vector.shape_cast %208 : vector<8xf32> to vector<8x1xf32>
    %cst_105 = arith.constant 3.200000e+01 : f32
    %210 = vector.broadcast %cst_105 : f32 to vector<8x1xf32>
    %211 = arith.divf %209, %210 : vector<8x1xf32>
    %212 = vector.broadcast %211 : vector<8x1xf32> to vector<8x32xf32>
    %213 = arith.subf %203, %212 : vector<8x32xf32>
    %214 = arith.mulf %213, %213 : vector<8x32xf32>
    %cst_106 = arith.constant dense<0.000000e+00> : vector<8xf32>
    %215 = vector.multi_reduction <add>, %214, %cst_106 [1] : vector<8x32xf32> to vector<8xf32>
    %216 = vector.shape_cast %215 : vector<8xf32> to vector<8x1xf32>
    %cst_107 = arith.constant 3.200000e+01 : f32
    %217 = vector.broadcast %cst_107 : f32 to vector<8x1xf32>
    %218 = arith.divf %216, %217 : vector<8x1xf32>
    %cst_108 = arith.constant 9.99999974E-6 : f32
    %219 = vector.broadcast %cst_108 : f32 to vector<8x1xf32>
    %220 = arith.addf %218, %219 : vector<8x1xf32>
    %221 = math.rsqrt %220 : vector<8x1xf32>
    %222 = vector.broadcast %221 : vector<8x1xf32> to vector<8x32xf32>
    %223 = arith.mulf %213, %222 : vector<8x32xf32>
    %224 = vector.broadcast %205 : vector<1x32xf32> to vector<8x32xf32>
    %225 = arith.mulf %223, %224 : vector<8x32xf32>
    %226 = vector.broadcast %207 : vector<1x32xf32> to vector<8x32xf32>
    %227 = arith.addf %225, %226 : vector<8x32xf32>
    %c0_109 = arith.constant 0 : index
    %c0_110 = arith.constant 0 : index
    %228 = vector.load %arg20[%c0_109, %c0_110] : memref<8x32xf32, #tpu.memory_space<vmem>>, vector<8x32xf32>
    tpu.vector_store %arg20[%c0_109, %c0_110], %227 {strides = array<i32>} : memref<8x32xf32, #tpu.memory_space<vmem>>, vector<8x32xf32>,
    %c1_i32 = arith.constant 1 : i32
    %229 = arith.cmpi eq, %arg1, %c1_i32 : i32
    %230 = arith.extui %229 : i1 to i32
    %c0_i32_111 = arith.constant 0 : i32
    %231 = arith.cmpi ne, %230, %c0_i32_111 : i32
    scf.if %231 {
      %232 = arith.truncf %227 : vector<8x32xf32> to vector<8x32xbf16>
      %c0_112 = arith.constant 0 : index
      %c0_113 = arith.constant 0 : index
      %233 = vector.load %arg17[%c0_112, %c0_113] : memref<32x128xbf16, #tpu.memory_space<vmem>>, vector<32x128xbf16>
      %cst_114 = arith.constant dense<0.000000e+00> : vector<8x128xf32>
      %234 = tpu.matmul %232, %233, %cst_114 {dimension_numbers = #tpu.dot_dimension_numbers<[1], [0], [0], [1], [0, 0, 1, 1], [], []>} : vector<8x32xbf16>, vector<32x128xbf16>, vector<8x128xf32> -> vector<8x128xf32>
      %c0_115 = arith.constant 0 : index
      %c0_116 = arith.constant 0 : index
      %235 = vector.load %arg18[%c0_115, %c0_116] : memref<1x128xf32, #tpu.memory_space<vmem>>, vector<1x128xf32>
      %236 = vector.broadcast %235 : vector<1x128xf32> to vector<8x128xf32>
      %237 = arith.addf %234, %236 : vector<8x128xf32>
      %c0_117 = arith.constant 0 : index
      %c0_118 = arith.constant 0 : index
      %238 = vector.load %arg19[%c0_117, %c0_118] : memref<8x128xf32, #tpu.memory_space<vmem>>, vector<8x128xf32>
      tpu.vector_store %arg19[%c0_117, %c0_118], %237 {strides = array<i32>} : memref<8x128xf32, #tpu.memory_space<vmem>>, vector<8x128xf32>,
    } else {
    }
    return
  }
  func.func @transform_0(%arg0: i32, %arg1: i32) -> (i32, i32) {
    %c0_i32 = arith.constant 0 : i32
    %c0_i32_0 = arith.constant 0 : i32
    return %arg0, %c0_i32 : i32, i32
  }
  func.func @transform_1(%arg0: i32, %arg1: i32) -> (i32, i32) {
    %c0_i32 = arith.constant 0 : i32
    %c0_i32_0 = arith.constant 0 : i32
    %c0_i32_1 = arith.constant 0 : i32
    return %c0_i32, %c0_i32_0 : i32, i32
  }
  func.func @transform_2(%arg0: i32, %arg1: i32) -> (i32, i32) {
    %c0_i32 = arith.constant 0 : i32
    %c0_i32_0 = arith.constant 0 : i32
    %c0_i32_1 = arith.constant 0 : i32
    return %c0_i32, %c0_i32_0 : i32, i32
  }
  func.func @transform_3(%arg0: i32, %arg1: i32) -> (i32, i32, i32) {
    %c0_i32 = arith.constant 0 : i32
    %c0_i32_0 = arith.constant 0 : i32
    %c0_i32_1 = arith.constant 0 : i32
    return %arg1, %c0_i32, %c0_i32_0 : i32, i32, i32
  }
  func.func @transform_4(%arg0: i32, %arg1: i32) -> (i32, i32, i32) {
    %c0_i32 = arith.constant 0 : i32
    %c0_i32_0 = arith.constant 0 : i32
    %c0_i32_1 = arith.constant 0 : i32
    return %arg1, %c0_i32, %c0_i32_0 : i32, i32, i32
  }
  func.func @transform_5(%arg0: i32, %arg1: i32) -> (i32, i32, i32) {
    %c0_i32 = arith.constant 0 : i32
    %c0_i32_0 = arith.constant 0 : i32
    %c0_i32_1 = arith.constant 0 : i32
    return %arg1, %c0_i32, %c0_i32_0 : i32, i32, i32
  }
  func.func @transform_6(%arg0: i32, %arg1: i32) -> (i32, i32, i32) {
    %c0_i32 = arith.constant 0 : i32
    %c0_i32_0 = arith.constant 0 : i32
    %c0_i32_1 = arith.constant 0 : i32
    return %arg1, %c0_i32, %c0_i32_0 : i32, i32, i32
  }
  func.func @transform_7(%arg0: i32, %arg1: i32) -> (i32, i32, i32) {
    %c0_i32 = arith.constant 0 : i32
    %c0_i32_0 = arith.constant 0 : i32
    %c0_i32_1 = arith.constant 0 : i32
    return %arg1, %c0_i32, %c0_i32_0 : i32, i32, i32
  }
  func.func @transform_8(%arg0: i32, %arg1: i32) -> (i32, i32, i32) {
    %c0_i32 = arith.constant 0 : i32
    %c0_i32_0 = arith.constant 0 : i32
    %c0_i32_1 = arith.constant 0 : i32
    return %arg1, %c0_i32, %c0_i32_0 : i32, i32, i32
  }
  func.func @transform_9(%arg0: i32, %arg1: i32) -> (i32, i32, i32) {
    %c0_i32 = arith.constant 0 : i32
    %c0_i32_0 = arith.constant 0 : i32
    %c0_i32_1 = arith.constant 0 : i32
    return %arg1, %c0_i32, %c0_i32_0 : i32, i32, i32
  }
  func.func @transform_10(%arg0: i32, %arg1: i32) -> (i32, i32, i32) {
    %c0_i32 = arith.constant 0 : i32
    %c0_i32_0 = arith.constant 0 : i32
    %c0_i32_1 = arith.constant 0 : i32
    return %arg1, %c0_i32, %c0_i32_0 : i32, i32, i32
  }
  func.func @transform_11(%arg0: i32, %arg1: i32) -> (i32, i32, i32) {
    %c0_i32 = arith.constant 0 : i32
    %c0_i32_0 = arith.constant 0 : i32
    %c0_i32_1 = arith.constant 0 : i32
    return %arg1, %c0_i32, %c0_i32_0 : i32, i32, i32
  }
  func.func @transform_12(%arg0: i32, %arg1: i32) -> (i32, i32, i32) {
    %c0_i32 = arith.constant 0 : i32
    %c0_i32_0 = arith.constant 0 : i32
    %c0_i32_1 = arith.constant 0 : i32
    return %arg1, %c0_i32, %c0_i32_0 : i32, i32, i32
  }
  func.func @transform_13(%arg0: i32, %arg1: i32) -> (i32, i32, i32) {
    %c0_i32 = arith.constant 0 : i32
    %c0_i32_0 = arith.constant 0 : i32
    %c0_i32_1 = arith.constant 0 : i32
    return %arg1, %c0_i32, %c0_i32_0 : i32, i32, i32
  }
  func.func @transform_14(%arg0: i32, %arg1: i32) -> (i32, i32, i32) {
    %c0_i32 = arith.constant 0 : i32
    %c0_i32_0 = arith.constant 0 : i32
    %c0_i32_1 = arith.constant 0 : i32
    return %arg1, %c0_i32, %c0_i32_0 : i32, i32, i32
  }
  func.func @transform_15(%arg0: i32, %arg1: i32) -> (i32, i32) {
    %c0_i32 = arith.constant 0 : i32
    %c0_i32_0 = arith.constant 0 : i32
    %c0_i32_1 = arith.constant 0 : i32
    return %c0_i32, %c0_i32_0 : i32, i32
  }
  func.func @transform_16(%arg0: i32, %arg1: i32) -> (i32, i32) {
    %c0_i32 = arith.constant 0 : i32
    %c0_i32_0 = arith.constant 0 : i32
    %c0_i32_1 = arith.constant 0 : i32
    return %c0_i32, %c0_i32_0 : i32, i32
  }
  func.func @transform_17(%arg0: i32, %arg1: i32) -> (i32, i32) {
    %c0_i32 = arith.constant 0 : i32
    %c0_i32_0 = arith.constant 0 : i32
    return %arg0, %c0_i32 : i32, i32
  }
}

</mosaic_0001>

<llo_original>
// kernel: transformer_time_series_forward.1
$region0: #{transformer_time_series_forward.1}
  #allocation0 [shape = 'u32[]', space=smem, size = 0x4, offset = 0x4, fixed_abs, tag = 'smem constant byte address 0x4 - core index']
  #allocation1 [shape = 'u32[144,128]{1,0:T(1,128)}', space=vmem, size = 0x12000, scoped, tag = 'internal scratch']
  #allocation2 [shape = 'f32[8,32]{1,0:T(8,128)}', space=vmem, size = 0x1000, scoped, tag = 'scratch operand']
  #allocation3 [shape = 'bf16[8,32]{1,0:T(8,128)(2,1)}', space=vmem, size = 0x800, scoped, tag = 'scratch operand']
  %s0 = inlined_call_operand.hbm [shape: f32[16,4], index: 0, kind: input, shape index: {}]
  %s1 = inlined_call_operand.hbm [shape: bf16[4,32], index: 1, kind: input, shape index: {}]
  %s2 = inlined_call_operand.hbm [shape: f32[1,32], index: 2, kind: input, shape index: {}]
  %s3 = inlined_call_operand.hbm [shape: bf16[2,32,96], index: 3, kind: input, shape index: {}]
  %s4 = inlined_call_operand.hbm [shape: f32[2,1,96], index: 4, kind: input, shape index: {}]
  %s5 = inlined_call_operand.hbm [shape: bf16[2,32,32], index: 5, kind: input, shape index: {}]
  %s6 = inlined_call_operand.hbm [shape: f32[2,1,32], index: 6, kind: input, shape index: {}]
  %s7 = inlined_call_operand.hbm [shape: f32[2,1,32], index: 7, kind: input, shape index: {}]
  %s8 = inlined_call_operand.hbm [shape: f32[2,1,32], index: 8, kind: input, shape index: {}]
  %s9 = inlined_call_operand.hbm [shape: bf16[2,32,2048], index: 9, kind: input, shape index: {}]
  %s10 = inlined_call_operand.hbm [shape: f32[2,1,2048], index: 10, kind: input, shape index: {}]
  %s11 = inlined_call_operand.hbm [shape: bf16[2,2048,32], index: 11, kind: input, shape index: {}]
  %s12 = inlined_call_operand.hbm [shape: f32[2,1,32], index: 12, kind: input, shape index: {}]
  %s13 = inlined_call_operand.hbm [shape: f32[2,1,32], index: 13, kind: input, shape index: {}]
  %s14 = inlined_call_operand.hbm [shape: f32[2,1,32], index: 14, kind: input, shape index: {}]
  %s15 = inlined_call_operand.hbm [shape: bf16[32,128], index: 15, kind: input, shape index: {}]
  %s16 = inlined_call_operand.hbm [shape: f32[1,128], index: 16, kind: input, shape index: {}]
  %s17 = inlined_call_operand.hbm [shape: f32[16,128], index: 17, kind: output, shape index: {}]
  %s18 = sld [smem:[#allocation0]]
  $region177: #{transformer_time_series_forward.1} parent=0
    _
  %s20 = ssub.s32 1, %s18
  %s21 = scalar_select 0, %s20, %s18
  $region1: #{transformer_time_series_forward.1} parent=0
    #allocation4 [shape = 'u8[8192]{0}', space=vmem, size = 0x2000, scoped, tag = 'input window, operand 0']
    #allocation5 [shape = 's32[2]{0}', space=sflag, size = 0x8, scoped, tag = 'scoped memory for transformer_time_series_forward.1']
    #allocation6 [shape = 's32[2]{0}', space=sflag, size = 0x8, scoped, tag = 'scoped memory for transformer_time_series_forward.1']
    #allocation7 [shape = 'u8[1024]{0}', space=vmem, size = 0x400, scoped, tag = 'input window, operand 1, single buffered']
    #allocation8 [shape = 's32[1]{0}', space=sflag, size = 0x4, scoped, tag = 'scoped memory for transformer_time_series_forward.1']
    #allocation9 [shape = 'u8[512]{0}', space=vmem, size = 0x400, scoped, tag = 'input window, operand 2, single buffered']
    #allocation10 [shape = 'u8[16384]{0}', space=vmem, size = 0x4000, scoped, tag = 'input window, operand 3']
    #allocation11 [shape = 's32[2]{0}', space=sflag, size = 0x8, scoped, tag = 'scoped memory for transformer_time_series_forward.1']
    #allocation12 [shape = 'u8[1024]{0}', space=vmem, size = 0x400, scoped, tag = 'input window, operand 4']
    #allocation13 [shape = 'u8[16384]{0}', space=vmem, size = 0x4000, scoped, tag = 'input window, operand 5']
    #allocation14 [shape = 's32[2]{0}', space=sflag, size = 0x8, scoped, tag = 'scoped memory for transformer_time_series_forward.1']
    #allocation15 [shape = 'u8[1024]{0}', space=vmem, size = 0x400, scoped, tag = 'input window, operand 6']
    #allocation16 [shape = 'u8[1024]{0}', space=vmem, size = 0x400, scoped, tag = 'input window, operand 7']
    #allocation17 [shape = 's32[2]{0}', space=sflag, size = 0x8, scoped, tag = 'scoped memory for transformer_time_series_forward.1']
    #allocation18 [shape = 'u8[1024]{0}', space=vmem, size = 0x400, scoped, tag = 'input window, operand 8']
    #allocation19 [shape = 'u8[262144]{0}', space=vmem, size = 0x40000, scoped, tag = 'input window, operand 9']
    #allocation20 [shape = 's32[2]{0}', space=sflag, size = 0x8, scoped, tag = 'scoped memory for transformer_time_series_forward.1']
    #allocation21 [shape = 'u8[16384]{0}', space=vmem, size = 0x4000, scoped, tag = 'input window, operand 10']
    #allocation22 [shape = 'u8[1048576]{0}', space=vmem, size = 0x100000, scoped, tag = 'input window, operand 11']
    #allocation23 [shape = 's32[2]{0}', space=sflag, size = 0x8, scoped, tag = 'scoped memory for transformer_time_series_forward.1']
    #allocation24 [shape = 'u8[1024]{0}', space=vmem, size = 0x400, scoped, tag = 'input window, operand 12']
    #allocation25 [shape = 'u8[1024]{0}', space=vmem, size = 0x400, scoped, tag = 'input window, operand 13']
    #allocation26 [shape = 's32[2]{0}', space=sflag, size = 0x8, scoped, tag = 'scoped memory for transformer_time_series_forward.1']
    #allocation27 [shape = 'u8[1024]{0}', space=vmem, size = 0x400, scoped, tag = 'input window, operand 14']
    #allocation28 [shape = 'u8[8192]{0}', space=vmem, size = 0x2000, scoped, tag = 'input window, operand 15, single buffered']
    #allocation29 [shape = 's32[1]{0}', space=sflag, size = 0x4, scoped, tag = 'scoped memory for transformer_time_series_forward.1']
    #allocation30 [shape = 'u8[512]{0}', space=vmem, size = 0x400, scoped, tag = 'input window, operand 16, single buffered']
    #allocation31 [shape = 'u8[8192]{0}', space=vmem, size = 0x2000, scoped, tag = 'output window, operand 0']
    %22 = vsyncpa [#allocation5], 0
    %s23 = scalar_lea.sflag [#allocation5], 1
    %24 = vsyncpa %s23, 0
    %25 = vsyncpa [#allocation8], 0
    %26 = vsyncpa [#allocation11], 0
    %s27 = scalar_lea.sflag [#allocation11], 1
    %28 = vsyncpa %s27, 0
    %29 = vsyncpa [#allocation14], 0
    %s30 = scalar_lea.sflag [#allocation14], 1
    %31 = vsyncpa %s30, 0
    %32 = vsyncpa [#allocation17], 0
    %s33 = scalar_lea.sflag [#allocation17], 1
    %34 = vsyncpa %s33, 0
    %35 = vsyncpa [#allocation20], 0
    %s36 = scalar_lea.sflag [#allocation20], 1
    %37 = vsyncpa %s36, 0
    %38 = vsyncpa [#allocation23], 0
    %s39 = scalar_lea.sflag [#allocation23], 1
    %40 = vsyncpa %s39, 0
    %41 = vsyncpa [#allocation26], 0
    %s42 = scalar_lea.sflag [#allocation26], 1
    %43 = vsyncpa %s42, 0
    %44 = vsyncpa [#allocation29], 0
    %45 = vsyncpa [#allocation6], 0
    %s46 = scalar_lea.sflag [#allocation6], 1
    %47 = vsyncpa %s46, 0
    loop: start=0, step=1, limit=6
    $region2: #{transformer_time_series_forward.1} parent=1 // loop_pre_header
      _
    $region3: #{transformer_time_series_forward.1} parent=1 // loop_header
      %s49 = sphi 0, %s53
      %p50 = scmp.ge.s32.totalorder %s49, 6
      %s56 = sphi 0, %s68
      %s57 = sphi 0, %s64
      %s58 = sphi 0, %s56
      %s59 = sphi 0, %s57
      %s60 = sphi 0, %s58
      %s61 = sphi 0, %s59
      %s71 = sphi 0, %s73
      %s74 = sphi 0, %s71
      %s75 = sphi 0, %s74
      %s91 = sphi 0, %s75
      %s95 = sphi 0, %s95
      %s97 = sphi 0, %s95
      %s98 = sphi 0, %s97
      %s112 = sphi 0, %s98
      %s116 = sphi 0, %s116
      %s118 = sphi 0, %s116
      %s119 = sphi 0, %s118
      %s133 = sphi 0, %s119
      %s139 = sphi 0, %s141
      %s142 = sphi 0, %s139
      %s143 = sphi 0, %s142
      %s159 = sphi 0, %s143
      %s165 = sphi 0, %s167
      %s168 = sphi 0, %s165
      %s169 = sphi 0, %s168
      %s185 = sphi 0, %s169
      %s191 = sphi 0, %s193
      %s194 = sphi 0, %s191
      %s195 = sphi 0, %s194
      %s211 = sphi 0, %s195
      %s217 = sphi 0, %s219
      %s220 = sphi 0, %s217
      %s221 = sphi 0, %s220
      %s237 = sphi 0, %s221
      %s243 = sphi 0, %s245
      %s246 = sphi 0, %s243
      %s247 = sphi 0, %s246
      %s263 = sphi 0, %s247
      %s269 = sphi 0, %s271
      %s272 = sphi 0, %s269
      %s273 = sphi 0, %s272
      %s289 = sphi 0, %s273
      %s295 = sphi 0, %s297
      %s298 = sphi 0, %s295
      %s299 = sphi 0, %s298
      %s315 = sphi 0, %s299
      %s321 = sphi 0, %s323
      %s324 = sphi 0, %s321
      %s325 = sphi 0, %s324
      %s341 = sphi 0, %s325
      %s347 = sphi 0, %s349
      %s350 = sphi 0, %s347
      %s351 = sphi 0, %s350
      %s367 = sphi 0, %s351
      %s373 = sphi 0, %s375
      %s376 = sphi 0, %s373
      %s377 = sphi 0, %s376
      %s393 = sphi 0, %s377
      %s399 = sphi 0, %s401
      %s402 = sphi 0, %s399
      %s403 = sphi 0, %s402
      %s419 = sphi 0, %s403
      %s425 = sphi 0, %s427
      %s428 = sphi 0, %s425
      %s429 = sphi 0, %s428
      %s445 = sphi 0, %s429
      %s449 = sphi 0, %s449
      %s451 = sphi 0, %s449
      %s452 = sphi 0, %s451
      %s466 = sphi 0, %s452
      %s470 = sphi 0, %s470
      %s472 = sphi 0, %s470
      %s473 = sphi 0, %s472
      %s487 = sphi 0, %s473
      %s493 = sphi 0, %s495
      %s496 = sphi 0, %s493
      %s497 = sphi 0, %s496
      %s513 = sphi 0, %s497
    $region4: #{transformer_time_series_forward.1} parent=1 // loop_header_branch
      %52 = sbr.rel (%p50) target = $region8
    $region5: #{transformer_time_series_forward.1} parent=1 // loop_body
      %s54 = ssub.s32 %s49, 1
      %s55 = ssub.s32 %s49, 2
      %s62 = sadd.s32 1, %s57
      %p63 = scmp.ge.s32.totalorder %s62, 2
      %s64 = scalar_select %p63, 0, %s62
      %s65 = sadd.s32 1, %s56
      %s66 = scalar_select %p63, %s65, %s56
      %p67 = scmp.ge.s32.totalorder %s66, 2
      %s68 = scalar_select %p67, 0, %s66
      %s69 = ssub.s32 %s56, %s68
      %p70 = scmp.eq.s32.totalorder %s69, 0
      %s72 = sadd.s32 %s71, 1
      %s73 = scalar_select %p70, %s71, %s72
      %p76 = pneg %p70
      %p77 = scmp.eq.s32.totalorder %s49, 3
      %p78 = por %p76, %p77
      %p79 = scmp.ne.s32.totalorder %s71, %s74
      %p80 = scmp.eq.s32.totalorder %s49, 0
      %p81 = por %p79, %p80
      %p82 = scmp.ne.s32.totalorder %s71, %s74
      %p83 = scmp.eq.s32.totalorder %s54, 3
      %p84 = por %p82, %p83
      %p85 = scmp.ne.s32.totalorder %s74, %s75
      %p86 = scmp.eq.s32.totalorder %s54, 0
      %p87 = por %p85, %p86
      %p88 = scmp.ne.s32.totalorder %s74, %s75
      %p89 = scmp.eq.s32.totalorder %s55, 3
      %p90 = por %p88, %p89
      %p92 = scmp.ne.s32.totalorder %s75, %s91
      %p93 = scmp.eq.s32.totalorder %s55, 0
      %p94 = por %p92, %p93
      %s96 = sadd.s32 %s95, 1
      %p99 = scmp.eq.s32.totalorder %s49, 3
      %p100 = scmp.ne.s32.totalorder %s95, %s97
      %p101 = scmp.eq.s32.totalorder %s49, 0
      %p102 = por %p100, %p101
      %p103 = scmp.ne.s32.totalorder %s95, %s97
      %p104 = scmp.eq.s32.totalorder %s54, 3
      %p105 = por %p103, %p104
      %p106 = scmp.ne.s32.totalorder %s97, %s98
      %p107 = scmp.eq.s32.totalorder %s54, 0
      %p108 = por %p106, %p107
      %p109 = scmp.ne.s32.totalorder %s97, %s98
      %p110 = scmp.eq.s32.totalorder %s55, 3
      %p111 = por %p109, %p110
      %p113 = scmp.ne.s32.totalorder %s98, %s112
      %p114 = scmp.eq.s32.totalorder %s55, 0
      %p115 = por %p113, %p114
      %s117 = sadd.s32 %s116, 1
      %p120 = scmp.eq.s32.totalorder %s49, 3
      %p121 = scmp.ne.s32.totalorder %s116, %s118
      %p122 = scmp.eq.s32.totalorder %s49, 0
      %p123 = por %p121, %p122
      %p124 = scmp.ne.s32.totalorder %s116, %s118
      %p125 = scmp.eq.s32.totalorder %s54, 3
      %p126 = por %p124, %p125
      %p127 = scmp.ne.s32.totalorder %s118, %s119
      %p128 = scmp.eq.s32.totalorder %s54, 0
      %p129 = por %p127, %p128
      %p130 = scmp.ne.s32.totalorder %s118, %s119
      %p131 = scmp.eq.s32.totalorder %s55, 3
      %p132 = por %p130, %p131
      %p134 = scmp.ne.s32.totalorder %s119, %s133
      %p135 = scmp.eq.s32.totalorder %s55, 0
      %p136 = por %p134, %p135
      %s137 = ssub.s32 %s57, %s64
      %p138 = scmp.eq.s32.totalorder %s137, 0
      %s140 = sadd.s32 %s139, 1
      %s141 = scalar_select %p138, %s139, %s140
      %p144 = pneg %p138
      %p145 = scmp.eq.s32.totalorder %s49, 3
      %p146 = por %p144, %p145
      %p147 = scmp.ne.s32.totalorder %s139, %s142
      %p148 = scmp.eq.s32.totalorder %s49, 0
      %p149 = por %p147, %p148
      %p150 = scmp.ne.s32.totalorder %s139, %s142
      %p151 = scmp.eq.s32.totalorder %s54, 3
      %p152 = por %p150, %p151
      %p153 = scmp.ne.s32.totalorder %s142, %s143
      %p154 = scmp.eq.s32.totalorder %s54, 0
      %p155 = por %p153, %p154
      %p156 = scmp.ne.s32.totalorder %s142, %s143
      %p157 = scmp.eq.s32.totalorder %s55, 3
      %p158 = por %p156, %p157
      %p160 = scmp.ne.s32.totalorder %s143, %s159
      %p161 = scmp.eq.s32.totalorder %s55, 0
      %p162 = por %p160, %p161
      %s163 = ssub.s32 %s57, %s64
      %p164 = scmp.eq.s32.totalorder %s163, 0
      %s166 = sadd.s32 %s165, 1
      %s167 = scalar_select %p164, %s165, %s166
      %p170 = pneg %p164
      %p171 = scmp.eq.s32.totalorder %s49, 3
      %p172 = por %p170, %p171
      %p173 = scmp.ne.s32.totalorder %s165, %s168
      %p174 = scmp.eq.s32.totalorder %s49, 0
      %p175 = por %p173, %p174
      %p176 = scmp.ne.s32.totalorder %s165, %s168
      %p177 = scmp.eq.s32.totalorder %s54, 3
      %p178 = por %p176, %p177
      %p179 = scmp.ne.s32.totalorder %s168, %s169
      %p180 = scmp.eq.s32.totalorder %s54, 0
      %p181 = por %p179, %p180
      %p182 = scmp.ne.s32.totalorder %s168, %s169
      %p183 = scmp.eq.s32.totalorder %s55, 3
      %p184 = por %p182, %p183
      %p186 = scmp.ne.s32.totalorder %s169, %s185
      %p187 = scmp.eq.s32.totalorder %s55, 0
      %p188 = por %p186, %p187
      %s189 = ssub.s32 %s57, %s64
      %p190 = scmp.eq.s32.totalorder %s189, 0
      %s192 = sadd.s32 %s191, 1
      %s193 = scalar_select %p190, %s191, %s192
      %p196 = pneg %p190
      %p197 = scmp.eq.s32.totalorder %s49, 3
      %p198 = por %p196, %p197
      %p199 = scmp.ne.s32.totalorder %s191, %s194
      %p200 = scmp.eq.s32.totalorder %s49, 0
      %p201 = por %p199, %p200
      %p202 = scmp.ne.s32.totalorder %s191, %s194
      %p203 = scmp.eq.s32.totalorder %s54, 3
      %p204 = por %p202, %p203
      %p205 = scmp.ne.s32.totalorder %s194, %s195
      %p206 = scmp.eq.s32.totalorder %s54, 0
      %p207 = por %p205, %p206
      %p208 = scmp.ne.s32.totalorder %s194, %s195
      %p209 = scmp.eq.s32.totalorder %s55, 3
      %p210 = por %p208, %p209
      %p212 = scmp.ne.s32.totalorder %s195, %s211
      %p213 = scmp.eq.s32.totalorder %s55, 0
      %p214 = por %p212, %p213
      %s215 = ssub.s32 %s57, %s64
      %p216 = scmp.eq.s32.totalorder %s215, 0
      %s218 = sadd.s32 %s217, 1
      %s219 = scalar_select %p216, %s217, %s218
      %p222 = pneg %p216
      %p223 = scmp.eq.s32.totalorder %s49, 3
      %p224 = por %p222, %p223
      %p225 = scmp.ne.s32.totalorder %s217, %s220
      %p226 = scmp.eq.s32.totalorder %s49, 0
      %p227 = por %p225, %p226
      %p228 = scmp.ne.s32.totalorder %s217, %s220
      %p229 = scmp.eq.s32.totalorder %s54, 3
      %p230 = por %p228, %p229
      %p231 = scmp.ne.s32.totalorder %s220, %s221
      %p232 = scmp.eq.s32.totalorder %s54, 0
      %p233 = por %p231, %p232
      %p234 = scmp.ne.s32.totalorder %s220, %s221
      %p235 = scmp.eq.s32.totalorder %s55, 3
      %p236 = por %p234, %p235
      %p238 = scmp.ne.s32.totalorder %s221, %s237
      %p239 = scmp.eq.s32.totalorder %s55, 0
      %p240 = por %p238, %p239
      %s241 = ssub.s32 %s57, %s64
      %p242 = scmp.eq.s32.totalorder %s241, 0
      %s244 = sadd.s32 %s243, 1
      %s245 = scalar_select %p242, %s243, %s244
      %p248 = pneg %p242
      %p249 = scmp.eq.s32.totalorder %s49, 3
      %p250 = por %p248, %p249
      %p251 = scmp.ne.s32.totalorder %s243, %s246
      %p252 = scmp.eq.s32.totalorder %s49, 0
      %p253 = por %p251, %p252
      %p254 = scmp.ne.s32.totalorder %s243, %s246
      %p255 = scmp.eq.s32.totalorder %s54, 3
      %p256 = por %p254, %p255
      %p257 = scmp.ne.s32.totalorder %s246, %s247
      %p258 = scmp.eq.s32.totalorder %s54, 0
      %p259 = por %p257, %p258
      %p260 = scmp.ne.s32.totalorder %s246, %s247
      %p261 = scmp.eq.s32.totalorder %s55, 3
      %p262 = por %p260, %p261
      %p264 = scmp.ne.s32.totalorder %s247, %s263
      %p265 = scmp.eq.s32.totalorder %s55, 0
      %p266 = por %p264, %p265
      %s267 = ssub.s32 %s57, %s64
      %p268 = scmp.eq.s32.totalorder %s267, 0
      %s270 = sadd.s32 %s269, 1
      %s271 = scalar_select %p268, %s269, %s270
      %p274 = pneg %p268
      %p275 = scmp.eq.s32.totalorder %s49, 3
      %p276 = por %p274, %p275
      %p277 = scmp.ne.s32.totalorder %s269, %s272
      %p278 = scmp.eq.s32.totalorder %s49, 0
      %p279 = por %p277, %p278
      %p280 = scmp.ne.s32.totalorder %s269, %s272
      %p281 = scmp.eq.s32.totalorder %s54, 3
      %p282 = por %p280, %p281
      %p283 = scmp.ne.s32.totalorder %s272, %s273
      %p284 = scmp.eq.s32.totalorder %s54, 0
      %p285 = por %p283, %p284
      %p286 = scmp.ne.s32.totalorder %s272, %s273
      %p287 = scmp.eq.s32.totalorder %s55, 3
      %p288 = por %p286, %p287
      %p290 = scmp.ne.s32.totalorder %s273, %s289
      %p291 = scmp.eq.s32.totalorder %s55, 0
      %p292 = por %p290, %p291
      %s293 = ssub.s32 %s57, %s64
      %p294 = scmp.eq.s32.totalorder %s293, 0
      %s296 = sadd.s32 %s295, 1
      %s297 = scalar_select %p294, %s295, %s296
      %p300 = pneg %p294
      %p301 = scmp.eq.s32.totalorder %s49, 3
      %p302 = por %p300, %p301
      %p303 = scmp.ne.s32.totalorder %s295, %s298
      %p304 = scmp.eq.s32.totalorder %s49, 0
      %p305 = por %p303, %p304
      %p306 = scmp.ne.s32.totalorder %s295, %s298
      %p307 = scmp.eq.s32.totalorder %s54, 3
      %p308 = por %p306, %p307
      %p309 = scmp.ne.s32.totalorder %s298, %s299
      %p310 = scmp.eq.s32.totalorder %s54, 0
      %p311 = por %p309, %p310
      %p312 = scmp.ne.s32.totalorder %s298, %s299
      %p313 = scmp.eq.s32.totalorder %s55, 3
      %p314 = por %p312, %p313
      %p316 = scmp.ne.s32.totalorder %s299, %s315
      %p317 = scmp.eq.s32.totalorder %s55, 0
      %p318 = por %p316, %p317
      %s319 = ssub.s32 %s57, %s64
      %p320 = scmp.eq.s32.totalorder %s319, 0
      %s322 = sadd.s32 %s321, 1
      %s323 = scalar_select %p320, %s321, %s322
      %p326 = pneg %p320
      %p327 = scmp.eq.s32.totalorder %s49, 3
      %p328 = por %p326, %p327
      %p329 = scmp.ne.s32.totalorder %s321, %s324
      %p330 = scmp.eq.s32.totalorder %s49, 0
      %p331 = por %p329, %p330
      %p332 = scmp.ne.s32.totalorder %s321, %s324
      %p333 = scmp.eq.s32.totalorder %s54, 3
      %p334 = por %p332, %p333
      %p335 = scmp.ne.s32.totalorder %s324, %s325
      %p336 = scmp.eq.s32.totalorder %s54, 0
      %p337 = por %p335, %p336
      %p338 = scmp.ne.s32.totalorder %s324, %s325
      %p339 = scmp.eq.s32.totalorder %s55, 3
      %p340 = por %p338, %p339
      %p342 = scmp.ne.s32.totalorder %s325, %s341
      %p343 = scmp.eq.s32.totalorder %s55, 0
      %p344 = por %p342, %p343
      %s345 = ssub.s32 %s57, %s64
      %p346 = scmp.eq.s32.totalorder %s345, 0
      %s348 = sadd.s32 %s347, 1
      %s349 = scalar_select %p346, %s347, %s348
      %p352 = pneg %p346
      %p353 = scmp.eq.s32.totalorder %s49, 3
      %p354 = por %p352, %p353
      %p355 = scmp.ne.s32.totalorder %s347, %s350
      %p356 = scmp.eq.s32.totalorder %s49, 0
      %p357 = por %p355, %p356
      %p358 = scmp.ne.s32.totalorder %s347, %s350
      %p359 = scmp.eq.s32.totalorder %s54, 3
      %p360 = por %p358, %p359
      %p361 = scmp.ne.s32.totalorder %s350, %s351
      %p362 = scmp.eq.s32.totalorder %s54, 0
      %p363 = por %p361, %p362
      %p364 = scmp.ne.s32.totalorder %s350, %s351
      %p365 = scmp.eq.s32.totalorder %s55, 3
      %p366 = por %p364, %p365
      %p368 = scmp.ne.s32.totalorder %s351, %s367
      %p369 = scmp.eq.s32.totalorder %s55, 0
      %p370 = por %p368, %p369
      %s371 = ssub.s32 %s57, %s64
      %p372 = scmp.eq.s32.totalorder %s371, 0
      %s374 = sadd.s32 %s373, 1
      %s375 = scalar_select %p372, %s373, %s374
      %p378 = pneg %p372
      %p379 = scmp.eq.s32.totalorder %s49, 3
      %p380 = por %p378, %p379
      %p381 = scmp.ne.s32.totalorder %s373, %s376
      %p382 = scmp.eq.s32.totalorder %s49, 0
      %p383 = por %p381, %p382
      %p384 = scmp.ne.s32.totalorder %s373, %s376
      %p385 = scmp.eq.s32.totalorder %s54, 3
      %p386 = por %p384, %p385
      %p387 = scmp.ne.s32.totalorder %s376, %s377
      %p388 = scmp.eq.s32.totalorder %s54, 0
      %p389 = por %p387, %p388
      %p390 = scmp.ne.s32.totalorder %s376, %s377
      %p391 = scmp.eq.s32.totalorder %s55, 3
      %p392 = por %p390, %p391
      %p394 = scmp.ne.s32.totalorder %s377, %s393
      %p395 = scmp.eq.s32.totalorder %s55, 0
      %p396 = por %p394, %p395
      %s397 = ssub.s32 %s57, %s64
      %p398 = scmp.eq.s32.totalorder %s397, 0
      %s400 = sadd.s32 %s399, 1
      %s401 = scalar_select %p398, %s399, %s400
      %p404 = pneg %p398
      %p405 = scmp.eq.s32.totalorder %s49, 3
      %p406 = por %p404, %p405
      %p407 = scmp.ne.s32.totalorder %s399, %s402
      %p408 = scmp.eq.s32.totalorder %s49, 0
      %p409 = por %p407, %p408
      %p410 = scmp.ne.s32.totalorder %s399, %s402
      %p411 = scmp.eq.s32.totalorder %s54, 3
      %p412 = por %p410, %p411
      %p413 = scmp.ne.s32.totalorder %s402, %s403
      %p414 = scmp.eq.s32.totalorder %s54, 0
      %p415 = por %p413, %p414
      %p416 = scmp.ne.s32.totalorder %s402, %s403
      %p417 = scmp.eq.s32.totalorder %s55, 3
      %p418 = por %p416, %p417
      %p420 = scmp.ne.s32.totalorder %s403, %s419
      %p421 = scmp.eq.s32.totalorder %s55, 0
      %p422 = por %p420, %p421
      %s423 = ssub.s32 %s57, %s64
      %p424 = scmp.eq.s32.totalorder %s423, 0
      %s426 = sadd.s32 %s425, 1
      %s427 = scalar_select %p424, %s425, %s426
      %p430 = pneg %p424
      %p431 = scmp.eq.s32.totalorder %s49, 3
      %p432 = por %p430, %p431
      %p433 = scmp.ne.s32.totalorder %s425, %s428
      %p434 = scmp.eq.s32.totalorder %s49, 0
      %p435 = por %p433, %p434
      %p436 = scmp.ne.s32.totalorder %s425, %s428
      %p437 = scmp.eq.s32.totalorder %s54, 3
      %p438 = por %p436, %p437
      %p439 = scmp.ne.s32.totalorder %s428, %s429
      %p440 = scmp.eq.s32.totalorder %s54, 0
      %p441 = por %p439, %p440
      %p442 = scmp.ne.s32.totalorder %s428, %s429
      %p443 = scmp.eq.s32.totalorder %s55, 3
      %p444 = por %p442, %p443
      %p446 = scmp.ne.s32.totalorder %s429, %s445
      %p447 = scmp.eq.s32.totalorder %s55, 0
      %p448 = por %p446, %p447
      %s450 = sadd.s32 %s449, 1
      %p453 = scmp.eq.s32.totalorder %s49, 3
      %p454 = scmp.ne.s32.totalorder %s449, %s451
      %p455 = scmp.eq.s32.totalorder %s49, 0
      %p456 = por %p454, %p455
      %p457 = scmp.ne.s32.totalorder %s449, %s451
      %p458 = scmp.eq.s32.totalorder %s54, 3
      %p459 = por %p457, %p458
      %p460 = scmp.ne.s32.totalorder %s451, %s452
      %p461 = scmp.eq.s32.totalorder %s54, 0
      %p462 = por %p460, %p461
      %p463 = scmp.ne.s32.totalorder %s451, %s452
      %p464 = scmp.eq.s32.totalorder %s55, 3
      %p465 = por %p463, %p464
      %p467 = scmp.ne.s32.totalorder %s452, %s466
      %p468 = scmp.eq.s32.totalorder %s55, 0
      %p469 = por %p467, %p468
      %s471 = sadd.s32 %s470, 1
      %p474 = scmp.eq.s32.totalorder %s49, 3
      %p475 = scmp.ne.s32.totalorder %s470, %s472
      %p476 = scmp.eq.s32.totalorder %s49, 0
      %p477 = por %p475, %p476
      %p478 = scmp.ne.s32.totalorder %s470, %s472
      %p479 = scmp.eq.s32.totalorder %s54, 3
      %p480 = por %p478, %p479
      %p481 = scmp.ne.s32.totalorder %s472, %s473
      %p482 = scmp.eq.s32.totalorder %s54, 0
      %p483 = por %p481, %p482
      %p484 = scmp.ne.s32.totalorder %s472, %s473
      %p485 = scmp.eq.s32.totalorder %s55, 3
      %p486 = por %p484, %p485
      %p488 = scmp.ne.s32.totalorder %s473, %s487
      %p489 = scmp.eq.s32.totalorder %s55, 0
      %p490 = por %p488, %p489
      %s491 = ssub.s32 %s56, %s68
      %p492 = scmp.eq.s32.totalorder %s491, 0
      %s494 = sadd.s32 %s493, 1
      %s495 = scalar_select %p492, %s493, %s494
      %p498 = pneg %p492
      %p499 = scmp.eq.s32.totalorder %s49, 3
      %p500 = por %p498, %p499
      %p501 = scmp.ne.s32.totalorder %s493, %s496
      %p502 = scmp.eq.s32.totalorder %s49, 0
      %p503 = por %p501, %p502
      %p504 = scmp.ne.s32.totalorder %s493, %s496
      %p505 = scmp.eq.s32.totalorder %s54, 3
      %p506 = por %p504, %p505
      %p507 = scmp.ne.s32.totalorder %s496, %s497
      %p508 = scmp.eq.s32.totalorder %s54, 0
      %p509 = por %p507, %p508
      %p510 = scmp.ne.s32.totalorder %s496, %s497
      %p511 = scmp.eq.s32.totalorder %s55, 3
      %p512 = por %p510, %p511
      %p514 = scmp.ne.s32.totalorder %s497, %s513
      %p515 = scmp.eq.s32.totalorder %s55, 0
      %p516 = por %p514, %p515
      %p517 = scmp.le.s32.totalorder 1, %s49
      %p518 = scmp.lt.s32.totalorder %s49, 5
      %p519 = pnand %p517, %p518
      %p520 = pneg %p519
      // Predicated region
      $region9: #{transformer_time_series_forward.1} parent=5 // pred_check
        _
      $region10: #{transformer_time_series_forward.1} parent=5 // pred_check_branch
        %522 = sbr.rel (%p519) target = $region12
      $region11: #{transformer_time_series_forward.1} parent=5 // pred_region
        %s523 = ssub.s32 %s49, 1
        // Predicated region
        $region13: #{transformer_time_series_forward.1} parent=11 // pred_check
          %p524 = pneg %p108
        $region14: #{transformer_time_series_forward.1} parent=11 // pred_check_branch
          %526 = sbr.rel (%p524) target = $region16
        $region15: #{transformer_time_series_forward.1} parent=11 // pred_region
          %s528 = ssub.s32 32, 32
          %529 = vsyncadd [#allocation8], %s528
          %s531 = sshll.u32 [#allocation7], 4
          %s532 = int_to_ptr.vmem [resolvable:$true] %s531
          %534 = dma.hbm_to_vmem [thread:$0]  %s1, 32, %s532, [#allocation8]
        $region16: #{transformer_time_series_forward.1} parent=11 // pred_fallthru
          _
        // Predicated region
        $region17: #{transformer_time_series_forward.1} parent=11 // pred_check
          %p535 = pneg %p129
        $region18: #{transformer_time_series_forward.1} parent=11 // pred_check_branch
          %537 = sbr.rel (%p535) target = $region20
        $region19: #{transformer_time_series_forward.1} parent=11 // pred_region
          %s539 = ssub.s32 16, 16
          %540 = vsyncadd [#allocation8], %s539
          %s542 = sshll.u32 [#allocation9], 4
          %s543 = int_to_ptr.vmem [resolvable:$true] %s542
          %545 = dma.hbm_to_vmem [thread:$0]  %s2, 16, %s543, [#allocation8]
        $region20: #{transformer_time_series_forward.1} parent=11 // pred_fallthru
          _
        // Predicated region
        $region21: #{transformer_time_series_forward.1} parent=11 // pred_check
          %p546 = pneg %p462
        $region22: #{transformer_time_series_forward.1} parent=11 // pred_check_branch
          %548 = sbr.rel (%p546) target = $region24
        $region23: #{transformer_time_series_forward.1} parent=11 // pred_region
          %s550 = ssub.s32 256, 256
          %551 = vsyncadd [#allocation29], %s550
          %s552 = sshll.u32 [#allocation28], 4
          %s553 = int_to_ptr.vmem [resolvable:$true] %s552
          %558 = dma.hbm_to_vmem [thread:$0]  %s15, 256, %s553, [#allocation29], 64, 64, 4
        $region24: #{transformer_time_series_forward.1} parent=11 // pred_fallthru
          _
        // Predicated region
        $region25: #{transformer_time_series_forward.1} parent=11 // pred_check
          %p559 = pneg %p483
        $region26: #{transformer_time_series_forward.1} parent=11 // pred_check_branch
          %561 = sbr.rel (%p559) target = $region28
        $region27: #{transformer_time_series_forward.1} parent=11 // pred_region
          %s563 = ssub.s32 16, 16
          %564 = vsyncadd [#allocation29], %s563
          %s566 = sshll.u32 [#allocation30], 4
          %s567 = int_to_ptr.vmem [resolvable:$true] %s566
          %569 = dma.hbm_to_vmem [thread:$0]  %s16, 16, %s567, [#allocation29]
        $region28: #{transformer_time_series_forward.1} parent=11 // pred_fallthru
          _
      $region12: #{transformer_time_series_forward.1} parent=5 // pred_fallthru
        _
      %p570 = scmp.lt.s32.totalorder %s49, 4
      // Predicated region
      $region29: #{transformer_time_series_forward.1} parent=5 // pred_check
        %p571 = pneg %p570
      $region30: #{transformer_time_series_forward.1} parent=5 // pred_check_branch
        %573 = sbr.rel (%p571) target = $region32
      $region31: #{transformer_time_series_forward.1} parent=5 // pred_region
        // Predicated region
        $region33: #{transformer_time_series_forward.1} parent=31 // pred_check
          %p574 = pneg %p81
        $region34: #{transformer_time_series_forward.1} parent=31 // pred_check_branch
          %576 = sbr.rel (%p574) target = $region36
        $region35: #{transformer_time_series_forward.1} parent=31 // pred_region
          %s577 = sand.u32 %s71, 1
          %s578 = scalar_lea.sflag [#allocation5], %s577
          %s579 = sand.u32 %s71, 1
          %s580 = smul.addr %s579, 8
          %s581 = scalar_lea.vmem [#allocation4], %s580
          %s583 = ssub.s32 128, 128
          %584 = vsyncadd %s578, %s583
          %s585 = smul.addr %s56, 128
          %s586 = scalar_lea.hbm %s0, %s585
          %s588 = sshll.u32 %s581, 4
          %s589 = int_to_ptr.vmem [resolvable:$true] %s588
          %591 = dma.hbm_to_vmem [thread:$0]  %s586, 128, %s589, %s578
        $region36: #{transformer_time_series_forward.1} parent=31 // pred_fallthru
          _
        // Predicated region
        $region37: #{transformer_time_series_forward.1} parent=31 // pred_check
          %p592 = pneg %p149
        $region38: #{transformer_time_series_forward.1} parent=31 // pred_check_branch
          %594 = sbr.rel (%p592) target = $region40
        $region39: #{transformer_time_series_forward.1} parent=31 // pred_region
          %s595 = sand.u32 %s49, 1
          %s596 = scalar_lea.sflag [#allocation11], %s595
          %s597 = sand.u32 %s139, 1
          %s598 = smul.addr %s597, 16
          %s599 = scalar_lea.vmem [#allocation10], %s598
          %s601 = ssub.s32 256, 256
          %602 = vsyncadd %s596, %s601
          %s603 = smul.addr %s57, 4
          %s604 = smul.addr %s603, 64
          %s605 = scalar_lea.hbm %s3, %s604
          %s606 = sshll.u32 %s599, 4
          %s607 = int_to_ptr.vmem [resolvable:$true] %s606
          %612 = dma.hbm_to_vmem [thread:$0]  %s605, 256, %s607, %s596, 64, 64, 4
        $region40: #{transformer_time_series_forward.1} parent=31 // pred_fallthru
          _
        // Predicated region
        $region41: #{transformer_time_series_forward.1} parent=31 // pred_check
          %p613 = pneg %p175
        $region42: #{transformer_time_series_forward.1} parent=31 // pred_check_branch
          %615 = sbr.rel (%p613) target = $region44
        $region43: #{transformer_time_series_forward.1} parent=31 // pred_region
          %s616 = sand.u32 %s49, 1
          %s617 = scalar_lea.sflag [#allocation11], %s616
          %s618 = sand.u32 %s165, 1
          %s619 = scalar_lea.vmem [#allocation12], %s618
          %s621 = ssub.s32 16, 16
          %622 = vsyncadd %s617, %s621
          %s623 = smul.addr %s57, 16
          %s624 = scalar_lea.hbm %s4, %s623
          %s626 = sshll.u32 %s619, 4
          %s627 = int_to_ptr.vmem [resolvable:$true] %s626
          %629 = dma.hbm_to_vmem [thread:$0]  %s624, 16, %s627, %s617
        $region44: #{transformer_time_series_forward.1} parent=31 // pred_fallthru
          _
        // Predicated region
        $region45: #{transformer_time_series_forward.1} parent=31 // pred_check
          %p630 = pneg %p201
        $region46: #{transformer_time_series_forward.1} parent=31 // pred_check_branch
          %632 = sbr.rel (%p630) target = $region48
        $region47: #{transformer_time_series_forward.1} parent=31 // pred_region
          %s633 = sand.u32 %s49, 1
          %s634 = scalar_lea.sflag [#allocation14], %s633
          %s635 = sand.u32 %s191, 1
          %s636 = smul.addr %s635, 16
          %s637 = scalar_lea.vmem [#allocation13], %s636
          %s639 = ssub.s32 256, 256
          %640 = vsyncadd %s634, %s639
          %s641 = smul.addr %s57, 4
          %s642 = smul.addr %s641, 64
          %s643 = scalar_lea.hbm %s5, %s642
          %s644 = sshll.u32 %s637, 4
          %s645 = int_to_ptr.vmem [resolvable:$true] %s644
          %650 = dma.hbm_to_vmem [thread:$0]  %s643, 256, %s645, %s634, 64, 64, 4
        $region48: #{transformer_time_series_forward.1} parent=31 // pred_fallthru
          _
        // Predicated region
        $region49: #{transformer_time_series_forward.1} parent=31 // pred_check
          %p651 = pneg %p227
        $region50: #{transformer_time_series_forward.1} parent=31 // pred_check_branch
          %653 = sbr.rel (%p651) target = $region52
        $region51: #{transformer_time_series_forward.1} parent=31 // pred_region
          %s654 = sand.u32 %s49, 1
          %s655 = scalar_lea.sflag [#allocation14], %s654
          %s656 = sand.u32 %s217, 1
          %s657 = scalar_lea.vmem [#allocation15], %s656
          %s659 = ssub.s32 16, 16
          %660 = vsyncadd %s655, %s659
          %s661 = smul.addr %s57, 16
          %s662 = scalar_lea.hbm %s6, %s661
          %s664 = sshll.u32 %s657, 4
          %s665 = int_to_ptr.vmem [resolvable:$true] %s664
          %667 = dma.hbm_to_vmem [thread:$0]  %s662, 16, %s665, %s655
        $region52: #{transformer_time_series_forward.1} parent=31 // pred_fallthru
          _
        // Predicated region
        $region53: #{transformer_time_series_forward.1} parent=31 // pred_check
          %p668 = pneg %p253
        $region54: #{transformer_time_series_forward.1} parent=31 // pred_check_branch
          %670 = sbr.rel (%p668) target = $region56
        $region55: #{transformer_time_series_forward.1} parent=31 // pred_region
          %s671 = sand.u32 %s49, 1
          %s672 = scalar_lea.sflag [#allocation17], %s671
          %s673 = sand.u32 %s243, 1
          %s674 = scalar_lea.vmem [#allocation16], %s673
          %s676 = ssub.s32 16, 16
          %677 = vsyncadd %s672, %s676
          %s678 = smul.addr %s57, 16
          %s679 = scalar_lea.hbm %s7, %s678
          %s681 = sshll.u32 %s674, 4
          %s682 = int_to_ptr.vmem [resolvable:$true] %s681
          %684 = dma.hbm_to_vmem [thread:$0]  %s679, 16, %s682, %s672
        $region56: #{transformer_time_series_forward.1} parent=31 // pred_fallthru
          _
        // Predicated region
        $region57: #{transformer_time_series_forward.1} parent=31 // pred_check
          %p685 = pneg %p279
        $region58: #{transformer_time_series_forward.1} parent=31 // pred_check_branch
          %687 = sbr.rel (%p685) target = $region60
        $region59: #{transformer_time_series_forward.1} parent=31 // pred_region
          %s688 = sand.u32 %s49, 1
          %s689 = scalar_lea.sflag [#allocation17], %s688
          %s690 = sand.u32 %s269, 1
          %s691 = scalar_lea.vmem [#allocation18], %s690
          %s693 = ssub.s32 16, 16
          %694 = vsyncadd %s689, %s693
          %s695 = smul.addr %s57, 16
          %s696 = scalar_lea.hbm %s8, %s695
          %s698 = sshll.u32 %s691, 4
          %s699 = int_to_ptr.vmem [resolvable:$true] %s698
          %701 = dma.hbm_to_vmem [thread:$0]  %s696, 16, %s699, %s689
        $region60: #{transformer_time_series_forward.1} parent=31 // pred_fallthru
          _
        // Predicated region
        $region61: #{transformer_time_series_forward.1} parent=31 // pred_check
          %p702 = pneg %p305
        $region62: #{transformer_time_series_forward.1} parent=31 // pred_check_branch
          %704 = sbr.rel (%p702) target = $region64
        $region63: #{transformer_time_series_forward.1} parent=31 // pred_region
          %s705 = sand.u32 %s49, 1
          %s706 = scalar_lea.sflag [#allocation20], %s705
          %s707 = sand.u32 %s295, 1
          %s708 = smul.addr %s707, 256
          %s709 = scalar_lea.vmem [#allocation19], %s708
          %s711 = ssub.s32 4096, 4096
          %712 = vsyncadd %s706, %s711
          %s713 = smul.addr %s57, 64
          %s714 = smul.addr %s713, 64
          %s715 = scalar_lea.hbm %s9, %s714
          %s716 = sshll.u32 %s709, 4
          %s717 = int_to_ptr.vmem [resolvable:$true] %s716
          %722 = dma.hbm_to_vmem [thread:$0]  %s715, 4096, %s717, %s706, 1024, 1024, 64
        $region64: #{transformer_time_series_forward.1} parent=31 // pred_fallthru
          _
        // Predicated region
        $region65: #{transformer_time_series_forward.1} parent=31 // pred_check
          %p723 = pneg %p331
        $region66: #{transformer_time_series_forward.1} parent=31 // pred_check_branch
          %725 = sbr.rel (%p723) target = $region68
        $region67: #{transformer_time_series_forward.1} parent=31 // pred_region
          %s726 = sand.u32 %s49, 1
          %s727 = scalar_lea.sflag [#allocation20], %s726
          %s728 = sand.u32 %s321, 1
          %s729 = smul.addr %s728, 16
          %s730 = scalar_lea.vmem [#allocation21], %s729
          %s732 = ssub.s32 256, 256
          %733 = vsyncadd %s727, %s732
          %s734 = smul.addr %s57, 16
          %s735 = smul.addr %s734, 16
          %s736 = scalar_lea.hbm %s10, %s735
          %s738 = sshll.u32 %s730, 4
          %s739 = int_to_ptr.vmem [resolvable:$true] %s738
          %741 = dma.hbm_to_vmem [thread:$0]  %s736, 256, %s739, %s727
        $region68: #{transformer_time_series_forward.1} parent=31 // pred_fallthru
          _
        // Predicated region
        $region69: #{transformer_time_series_forward.1} parent=31 // pred_check
          %p742 = pneg %p357
        $region70: #{transformer_time_series_forward.1} parent=31 // pred_check_branch
          %744 = sbr.rel (%p742) target = $region72
        $region71: #{transformer_time_series_forward.1} parent=31 // pred_region
          %s745 = sand.u32 %s49, 1
          %s746 = scalar_lea.sflag [#allocation23], %s745
          %s747 = sand.u32 %s347, 1
          %s748 = smul.addr %s747, 1024
          %s749 = scalar_lea.vmem [#allocation22], %s748
          %s751 = ssub.s32 16384, 16384
          %752 = vsyncadd %s746, %s751
          %s753 = smul.addr %s57, 256
          %s754 = smul.addr %s753, 64
          %s755 = scalar_lea.hbm %s11, %s754
          %s756 = sshll.u32 %s749, 4
          %s757 = int_to_ptr.vmem [resolvable:$true] %s756
          %762 = dma.hbm_to_vmem [thread:$0]  %s755, 16384, %s757, %s746, 64, 64, 4
        $region72: #{transformer_time_series_forward.1} parent=31 // pred_fallthru
          _
        // Predicated region
        $region73: #{transformer_time_series_forward.1} parent=31 // pred_check
          %p763 = pneg %p383
        $region74: #{transformer_time_series_forward.1} parent=31 // pred_check_branch
          %765 = sbr.rel (%p763) target = $region76
        $region75: #{transformer_time_series_forward.1} parent=31 // pred_region
          %s766 = sand.u32 %s49, 1
          %s767 = scalar_lea.sflag [#allocation23], %s766
          %s768 = sand.u32 %s373, 1
          %s769 = scalar_lea.vmem [#allocation24], %s768
          %s771 = ssub.s32 16, 16
          %772 = vsyncadd %s767, %s771
          %s773 = smul.addr %s57, 16
          %s774 = scalar_lea.hbm %s12, %s773
          %s776 = sshll.u32 %s769, 4
          %s777 = int_to_ptr.vmem [resolvable:$true] %s776
          %779 = dma.hbm_to_vmem [thread:$0]  %s774, 16, %s777, %s767
        $region76: #{transformer_time_series_forward.1} parent=31 // pred_fallthru
          _
        // Predicated region
        $region77: #{transformer_time_series_forward.1} parent=31 // pred_check
          %p780 = pneg %p409
        $region78: #{transformer_time_series_forward.1} parent=31 // pred_check_branch
          %782 = sbr.rel (%p780) target = $region80
        $region79: #{transformer_time_series_forward.1} parent=31 // pred_region
          %s783 = sand.u32 %s49, 1
          %s784 = scalar_lea.sflag [#allocation26], %s783
          %s785 = sand.u32 %s399, 1
          %s786 = scalar_lea.vmem [#allocation25], %s785
          %s788 = ssub.s32 16, 16
          %789 = vsyncadd %s784, %s788
          %s790 = smul.addr %s57, 16
          %s791 = scalar_lea.hbm %s13, %s790
          %s793 = sshll.u32 %s786, 4
          %s794 = int_to_ptr.vmem [resolvable:$true] %s793
          %796 = dma.hbm_to_vmem [thread:$0]  %s791, 16, %s794, %s784
        $region80: #{transformer_time_series_forward.1} parent=31 // pred_fallthru
          _
        // Predicated region
        $region81: #{transformer_time_series_forward.1} parent=31 // pred_check
          %p797 = pneg %p435
        $region82: #{transformer_time_series_forward.1} parent=31 // pred_check_branch
          %799 = sbr.rel (%p797) target = $region84
        $region83: #{transformer_time_series_forward.1} parent=31 // pred_region
          %s800 = sand.u32 %s49, 1
          %s801 = scalar_lea.sflag [#allocation26], %s800
          %s802 = sand.u32 %s425, 1
          %s803 = scalar_lea.vmem [#allocation27], %s802
          %s805 = ssub.s32 16, 16
          %806 = vsyncadd %s801, %s805
          %s807 = smul.addr %s57, 16
          %s808 = scalar_lea.hbm %s14, %s807
          %s810 = sshll.u32 %s803, 4
          %s811 = int_to_ptr.vmem [resolvable:$true] %s810
          %813 = dma.hbm_to_vmem [thread:$0]  %s808, 16, %s811, %s801
        $region84: #{transformer_time_series_forward.1} parent=31 // pred_fallthru
          _
      $region32: #{transformer_time_series_forward.1} parent=5 // pred_fallthru
        _
      %p814 = scmp.le.s32.totalorder 1, %s49
      %p815 = scmp.lt.s32.totalorder %s49, 5
      %p816 = pnand %p814, %p815
      %p817 = pneg %p816
      // Predicated region
      $region85: #{transformer_time_series_forward.1} parent=5 // pred_check
        _
      $region86: #{transformer_time_series_forward.1} parent=5 // pred_check_branch
        %819 = sbr.rel (%p816) target = $region88
      $region87: #{transformer_time_series_forward.1} parent=5 // pred_region
        %s820 = ssub.s32 %s49, 1
        %s821 = sand.u32 %s74, 1
        %s822 = scalar_lea.sflag [#allocation5], %s821
        %s823 = sand.u32 %s74, 1
        %s824 = smul.addr %s823, 8
        %s825 = scalar_lea.vmem [#allocation4], %s824
        // Predicated region
        $region89: #{transformer_time_series_forward.1} parent=87 // pred_check
          %p826 = pneg %p87
        $region90: #{transformer_time_series_forward.1} parent=87 // pred_check_branch
          %828 = sbr.rel (%p826) target = $region92
        $region91: #{transformer_time_series_forward.1} parent=87 // pred_region
          %829 = dma.done %s822, 128
        $region92: #{transformer_time_series_forward.1} parent=87 // pred_fallthru
          _
        // Predicated region
        $region93: #{transformer_time_series_forward.1} parent=87 // pred_check
          %p830 = pneg %p108
        $region94: #{transformer_time_series_forward.1} parent=87 // pred_check_branch
          %832 = sbr.rel (%p830) target = $region96
        $region95: #{transformer_time_series_forward.1} parent=87 // pred_region
          %833 = dma.done [#allocation8], 32
        $region96: #{transformer_time_series_forward.1} parent=87 // pred_fallthru
          _
        // Predicated region
        $region97: #{transformer_time_series_forward.1} parent=87 // pred_check
          %p834 = pneg %p129
        $region98: #{transformer_time_series_forward.1} parent=87 // pred_check_branch
          %836 = sbr.rel (%p834) target = $region100
        $region99: #{transformer_time_series_forward.1} parent=87 // pred_region
          %837 = dma.done [#allocation8], 16
        $region100: #{transformer_time_series_forward.1} parent=87 // pred_fallthru
          _
        %s838 = sand.u32 %s54, 1
        %s839 = scalar_lea.sflag [#allocation11], %s838
        %s840 = sand.u32 %s142, 1
        %s841 = smul.addr %s840, 16
        %s842 = scalar_lea.vmem [#allocation10], %s841
        // Predicated region
        $region101: #{transformer_time_series_forward.1} parent=87 // pred_check
          %p843 = pneg %p155
        $region102: #{transformer_time_series_forward.1} parent=87 // pred_check_branch
          %845 = sbr.rel (%p843) target = $region104
        $region103: #{transformer_time_series_forward.1} parent=87 // pred_region
          %846 = dma.done %s839, 256
        $region104: #{transformer_time_series_forward.1} parent=87 // pred_fallthru
          _
        %s847 = sand.u32 %s54, 1
        %s848 = scalar_lea.sflag [#allocation11], %s847
        %s849 = sand.u32 %s168, 1
        %s850 = scalar_lea.vmem [#allocation12], %s849
        // Predicated region
        $region105: #{transformer_time_series_forward.1} parent=87 // pred_check
          %p851 = pneg %p181
        $region106: #{transformer_time_series_forward.1} parent=87 // pred_check_branch
          %853 = sbr.rel (%p851) target = $region108
        $region107: #{transformer_time_series_forward.1} parent=87 // pred_region
          %854 = dma.done %s848, 16
        $region108: #{transformer_time_series_forward.1} parent=87 // pred_fallthru
          _
        %s855 = sand.u32 %s54, 1
        %s856 = scalar_lea.sflag [#allocation14], %s855
        %s857 = sand.u32 %s194, 1
        %s858 = smul.addr %s857, 16
        %s859 = scalar_lea.vmem [#allocation13], %s858
        // Predicated region
        $region109: #{transformer_time_series_forward.1} parent=87 // pred_check
          %p860 = pneg %p207
        $region110: #{transformer_time_series_forward.1} parent=87 // pred_check_branch
          %862 = sbr.rel (%p860) target = $region112
        $region111: #{transformer_time_series_forward.1} parent=87 // pred_region
          %863 = dma.done %s856, 256
        $region112: #{transformer_time_series_forward.1} parent=87 // pred_fallthru
          _
        %s864 = sand.u32 %s54, 1
        %s865 = scalar_lea.sflag [#allocation14], %s864
        %s866 = sand.u32 %s220, 1
        %s867 = scalar_lea.vmem [#allocation15], %s866
        // Predicated region
        $region113: #{transformer_time_series_forward.1} parent=87 // pred_check
          %p868 = pneg %p233
        $region114: #{transformer_time_series_forward.1} parent=87 // pred_check_branch
          %870 = sbr.rel (%p868) target = $region116
        $region115: #{transformer_time_series_forward.1} parent=87 // pred_region
          %871 = dma.done %s865, 16
        $region116: #{transformer_time_series_forward.1} parent=87 // pred_fallthru
          _
        %s872 = sand.u32 %s54, 1
        %s873 = scalar_lea.sflag [#allocation17], %s872
        %s874 = sand.u32 %s246, 1
        %s875 = scalar_lea.vmem [#allocation16], %s874
        // Predicated region
        $region117: #{transformer_time_series_forward.1} parent=87 // pred_check
          %p876 = pneg %p259
        $region118: #{transformer_time_series_forward.1} parent=87 // pred_check_branch
          %878 = sbr.rel (%p876) target = $region120
        $region119: #{transformer_time_series_forward.1} parent=87 // pred_region
          %879 = dma.done %s873, 16
        $region120: #{transformer_time_series_forward.1} parent=87 // pred_fallthru
          _
        %s880 = sand.u32 %s54, 1
        %s881 = scalar_lea.sflag [#allocation17], %s880
        %s882 = sand.u32 %s272, 1
        %s883 = scalar_lea.vmem [#allocation18], %s882
        // Predicated region
        $region121: #{transformer_time_series_forward.1} parent=87 // pred_check
          %p884 = pneg %p285
        $region122: #{transformer_time_series_forward.1} parent=87 // pred_check_branch
          %886 = sbr.rel (%p884) target = $region124
        $region123: #{transformer_time_series_forward.1} parent=87 // pred_region
          %887 = dma.done %s881, 16
        $region124: #{transformer_time_series_forward.1} parent=87 // pred_fallthru
          _
        %s888 = sand.u32 %s54, 1
        %s889 = scalar_lea.sflag [#allocation20], %s888
        %s890 = sand.u32 %s298, 1
        %s891 = smul.addr %s890, 256
        %s892 = scalar_lea.vmem [#allocation19], %s891
        // Predicated region
        $region125: #{transformer_time_series_forward.1} parent=87 // pred_check
          %p893 = pneg %p311
        $region126: #{transformer_time_series_forward.1} parent=87 // pred_check_branch
          %895 = sbr.rel (%p893) target = $region128
        $region127: #{transformer_time_series_forward.1} parent=87 // pred_region
          %896 = dma.done %s889, 4096
        $region128: #{transformer_time_series_forward.1} parent=87 // pred_fallthru
          _
        %s897 = sand.u32 %s54, 1
        %s898 = scalar_lea.sflag [#allocation20], %s897
        %s899 = sand.u32 %s324, 1
        %s900 = smul.addr %s899, 16
        %s901 = scalar_lea.vmem [#allocation21], %s900
        // Predicated region
        $region129: #{transformer_time_series_forward.1} parent=87 // pred_check
          %p902 = pneg %p337
        $region130: #{transformer_time_series_forward.1} parent=87 // pred_check_branch
          %904 = sbr.rel (%p902) target = $region132
        $region131: #{transformer_time_series_forward.1} parent=87 // pred_region
          %905 = dma.done %s898, 256
        $region132: #{transformer_time_series_forward.1} parent=87 // pred_fallthru
          _
        %s906 = sand.u32 %s54, 1
        %s907 = scalar_lea.sflag [#allocation23], %s906
        %s908 = sand.u32 %s350, 1
        %s909 = smul.addr %s908, 1024
        %s910 = scalar_lea.vmem [#allocation22], %s909
        // Predicated region
        $region133: #{transformer_time_series_forward.1} parent=87 // pred_check
          %p911 = pneg %p363
        $region134: #{transformer_time_series_forward.1} parent=87 // pred_check_branch
          %913 = sbr.rel (%p911) target = $region136
        $region135: #{transformer_time_series_forward.1} parent=87 // pred_region
          %914 = dma.done %s907, 16384
        $region136: #{transformer_time_series_forward.1} parent=87 // pred_fallthru
          _
        %s915 = sand.u32 %s54, 1
        %s916 = scalar_lea.sflag [#allocation23], %s915
        %s917 = sand.u32 %s376, 1
        %s918 = scalar_lea.vmem [#allocation24], %s917
        // Predicated region
        $region137: #{transformer_time_series_forward.1} parent=87 // pred_check
          %p919 = pneg %p389
        $region138: #{transformer_time_series_forward.1} parent=87 // pred_check_branch
          %921 = sbr.rel (%p919) target = $region140
        $region139: #{transformer_time_series_forward.1} parent=87 // pred_region
          %922 = dma.done %s916, 16
        $region140: #{transformer_time_series_forward.1} parent=87 // pred_fallthru
          _
        %s923 = sand.u32 %s54, 1
        %s924 = scalar_lea.sflag [#allocation26], %s923
        %s925 = sand.u32 %s402, 1
        %s926 = scalar_lea.vmem [#allocation25], %s925
        // Predicated region
        $region141: #{transformer_time_series_forward.1} parent=87 // pred_check
          %p927 = pneg %p415
        $region142: #{transformer_time_series_forward.1} parent=87 // pred_check_branch
          %929 = sbr.rel (%p927) target = $region144
        $region143: #{transformer_time_series_forward.1} parent=87 // pred_region
          %930 = dma.done %s924, 16
        $region144: #{transformer_time_series_forward.1} parent=87 // pred_fallthru
          _
        %s931 = sand.u32 %s54, 1
        %s932 = scalar_lea.sflag [#allocation26], %s931
        %s933 = sand.u32 %s428, 1
        %s934 = scalar_lea.vmem [#allocation27], %s933
        // Predicated region
        $region145: #{transformer_time_series_forward.1} parent=87 // pred_check
          %p935 = pneg %p441
        $region146: #{transformer_time_series_forward.1} parent=87 // pred_check_branch
          %937 = sbr.rel (%p935) target = $region148
        $region147: #{transformer_time_series_forward.1} parent=87 // pred_region
          %938 = dma.done %s932, 16
        $region148: #{transformer_time_series_forward.1} parent=87 // pred_fallthru
          _
        // Predicated region
        $region149: #{transformer_time_series_forward.1} parent=87 // pred_check
          %p939 = pneg %p462
        $region150: #{transformer_time_series_forward.1} parent=87 // pred_check_branch
          %941 = sbr.rel (%p939) target = $region152
        $region151: #{transformer_time_series_forward.1} parent=87 // pred_region
          %942 = dma.done [#allocation29], 256
        $region152: #{transformer_time_series_forward.1} parent=87 // pred_fallthru
          _
        // Predicated region
        $region153: #{transformer_time_series_forward.1} parent=87 // pred_check
          %p943 = pneg %p483
        $region154: #{transformer_time_series_forward.1} parent=87 // pred_check_branch
          %945 = sbr.rel (%p943) target = $region156
        $region155: #{transformer_time_series_forward.1} parent=87 // pred_region
          %946 = dma.done [#allocation29], 16
        $region156: #{transformer_time_series_forward.1} parent=87 // pred_fallthru
          _
        %s947 = sand.u32 %s74, 1
        %s948 = scalar_lea.sflag [#allocation5], %s947
        %s949 = sand.u32 %s74, 1
        %s950 = smul.addr %s949, 8
        %s951 = scalar_lea.vmem [#allocation4], %s950
        %p952 = pneg %p87
        %p953 = pneg %p84
        %p954 = pneg %p108
        %p955 = pneg %p105
        %p956 = pneg %p129
        %p957 = pneg %p126
        %s958 = sand.u32 %s54, 1
        %s959 = scalar_lea.sflag [#allocation11], %s958
        %s960 = sand.u32 %s142, 1
        %s961 = smul.addr %s960, 16
        %s962 = scalar_lea.vmem [#allocation10], %s961
        %p963 = pneg %p155
        %p964 = pneg %p152
        %s965 = sand.u32 %s54, 1
        %s966 = scalar_lea.sflag [#allocation11], %s965
        %s967 = sand.u32 %s168, 1
        %s968 = scalar_lea.vmem [#allocation12], %s967
        %p969 = pneg %p181
        %p970 = pneg %p178
        %s971 = sand.u32 %s54, 1
        %s972 = scalar_lea.sflag [#allocation14], %s971
        %s973 = sand.u32 %s194, 1
        %s974 = smul.addr %s973, 16
        %s975 = scalar_lea.vmem [#allocation13], %s974
        %p976 = pneg %p207
        %p977 = pneg %p204
        %s978 = sand.u32 %s54, 1
        %s979 = scalar_lea.sflag [#allocation14], %s978
        %s980 = sand.u32 %s220, 1
        %s981 = scalar_lea.vmem [#allocation15], %s980
        %p982 = pneg %p233
        %p983 = pneg %p230
        %s984 = sand.u32 %s54, 1
        %s985 = scalar_lea.sflag [#allocation17], %s984
        %s986 = sand.u32 %s246, 1
        %s987 = scalar_lea.vmem [#allocation16], %s986
        %p988 = pneg %p259
        %p989 = pneg %p256
        %s990 = sand.u32 %s54, 1
        %s991 = scalar_lea.sflag [#allocation17], %s990
        %s992 = sand.u32 %s272, 1
        %s993 = scalar_lea.vmem [#allocation18], %s992
        %p994 = pneg %p285
        %p995 = pneg %p282
        %s996 = sand.u32 %s54, 1
        %s997 = scalar_lea.sflag [#allocation20], %s996
        %s998 = sand.u32 %s298, 1
        %s999 = smul.addr %s998, 256
        %s1000 = scalar_lea.vmem [#allocation19], %s999
        %p1001 = pneg %p311
        %p1002 = pneg %p308
        %s1003 = sand.u32 %s54, 1
        %s1004 = scalar_lea.sflag [#allocation20], %s1003
        %s1005 = sand.u32 %s324, 1
        %s1006 = smul.addr %s1005, 16
        %s1007 = scalar_lea.vmem [#allocation21], %s1006
        %p1008 = pneg %p337
        %p1009 = pneg %p334
        %s1010 = sand.u32 %s54, 1
        %s1011 = scalar_lea.sflag [#allocation23], %s1010
        %s1012 = sand.u32 %s350, 1
        %s1013 = smul.addr %s1012, 1024
        %s1014 = scalar_lea.vmem [#allocation22], %s1013
        %p1015 = pneg %p363
        %p1016 = pneg %p360
        %s1017 = sand.u32 %s54, 1
        %s1018 = scalar_lea.sflag [#allocation23], %s1017
        %s1019 = sand.u32 %s376, 1
        %s1020 = scalar_lea.vmem [#allocation24], %s1019
        %p1021 = pneg %p389
        %p1022 = pneg %p386
        %s1023 = sand.u32 %s54, 1
        %s1024 = scalar_lea.sflag [#allocation26], %s1023
        %s1025 = sand.u32 %s402, 1
        %s1026 = scalar_lea.vmem [#allocation25], %s1025
        %p1027 = pneg %p415
        %p1028 = pneg %p412
        %s1029 = sand.u32 %s54, 1
        %s1030 = scalar_lea.sflag [#allocation26], %s1029
        %s1031 = sand.u32 %s428, 1
        %s1032 = scalar_lea.vmem [#allocation27], %s1031
        %p1033 = pneg %p441
        %p1034 = pneg %p438
        %p1035 = pneg %p462
        %p1036 = pneg %p459
        %p1037 = pneg %p483
        %p1038 = pneg %p480
        %p1039 = pneg %p509
        %p1040 = pneg %p506
        %s1041 = sand.u32 %s496, 1
        %s1042 = scalar_lea.sflag [#allocation6], %s1041
        %s1043 = sand.u32 %s496, 1
        %s1044 = smul.addr %s1043, 8
        %s1045 = scalar_lea.vmem [#allocation31], %s1044
        %p1047 = scmp.eq.s32.totalorder %s59, 0
        // Predicated region
        $region157: #{transformer_time_series_forward.1} parent=87 // pred_check
          %p1048 = pneg %p1047
        $region158: #{transformer_time_series_forward.1} parent=87 // pred_check_branch
          %1050 = sbr.rel (%p1048) target = $region160
        $region159: #{transformer_time_series_forward.1} parent=87 // pred_region
          %v1051 = vld [vmem:[%s825] sm:$0xff]
          %v1052 = vpack.c.bf16 %v1051, %v1051
          %v1053 = vld [vmem:[#allocation7] sm:$0x3]
          %v1054 = vld [vmem:[#allocation9] sm:$0x1]
          %v1056 = vlaneseq
          %v1057 = vshrl.u32 %v1056, 7
          %v1058 = vsub.s32 0, %v1057
          %v1059 = vrot.slane %v1054, %v1058
          %vm1061 = vcmask 31744
          %v1063 = vsel %vm1061, %v1052, 0
          %vm1065 = vcmask 1041408
          %v1067 = vsel %vm1065, %v1053, 0
          %1069 = vmatprep.subr.bf16.mxu0 0
          %1070 = vmatpush1.bf16.msra.mxu0 %v1067
          %1071 = vmatprep.subr.bf16.mxu0 0
          %1072 = vmatpush1.bf16.msra.mxu0 0
          %1073 = vmatprep.subr.bf16.mxu0 0
          %1074 = vmatpush1.bf16.msra.mxu0 0
          %1075 = vmatprep.subr.bf16.mxu0 0
          %1076 = vmatpush1.bf16.msra.mxu0 0
          %1077 = vmatprep.subr.bf16.mxu0 0
          %1078 = vmatpush1.bf16.msra.mxu0 0
          %1079 = vmatprep.subr.bf16.mxu0 0
          %1080 = vmatpush1.bf16.msra.mxu0 0
          %1081 = vmatprep.subr.bf16.mxu0 0
          %1082 = vmatpush1.bf16.msra.mxu0 0
          %1083 = vmatprep.subr.bf16.mxu0 0
          %1084 = vmatpush1.bf16.msra.mxu0 0
          %1085 = vmatprep.subr.bf16.mxu0 0
          %1086 = vmatpush1.bf16.msra.mxu0 0
          %1087 = vmatprep.subr.bf16.mxu0 0
          %1088 = vmatpush1.bf16.msra.mxu0 0
          %1089 = vmatprep.subr.bf16.mxu0 0
          %1090 = vmatpush1.bf16.msra.mxu0 0
          %1091 = vmatprep.subr.bf16.mxu0 0
          %1092 = vmatpush1.bf16.msra.mxu0 0
          %1093 = vmatprep.subr.bf16.mxu0 0
          %1094 = vmatpush1.bf16.msra.mxu0 0
          %1095 = vmatprep.subr.bf16.mxu0 0
          %1096 = vmatpush1.bf16.msra.mxu0 0
          %1097 = vmatprep.subr.bf16.mxu0 0
          %1098 = vmatpush1.bf16.msra.mxu0 0
          %1099 = vmatprep.subr.bf16.mxu0 0
          %1100 = vmatpush1.bf16.msra.mxu0 0
          %1101 = vmatprep.mubr.bf16.mxu0 0
          %1102 = vmatmul.mubr.bf16.gmra.mrb[0].mxu0 %v1063
          %v1103 = vpop.f32.mrb[0].mxu0
          %v1104 = vadd.f32 %v1059, %v1103
          %v1105 = vpop.f32.mrb[0].mxu0
          %v1106 = vpop.f32.mrb[0].mxu0
          %v1107 = vpop.f32.mrb[0].mxu0
          %1108 = vdwg.mxu0
          %vm1109 = vcmask 261120
          %1110 = vst.msk [vmem:[#allocation2] sm:$0xff] %vm1109, %v1104
        $region160: #{transformer_time_series_forward.1} parent=87 // pred_fallthru
          _
        %v1111 = vld [vmem:[#allocation2] sm:$0xff]
        %v1112 = vpack.c.bf16 %v1111, %v1111
        %v1113 = vld [vmem:[%s842] sm:$0xf]
        %v1114 = vld [vmem:[%s842 + $0x4] sm:$0xf]
        %v1115 = vld [vmem:[%s842 + $0x8] sm:$0xf]
        %v1116 = vld [vmem:[%s842 + $0xc] sm:$0xf]
        %v1117 = vld [vmem:[%s850] sm:$0x1]
        %v1119 = vlaneseq
        %v1120 = vshrl.u32 %v1119, 7
        %v1121 = vsub.s32 0, %v1120
        %v1122 = vrot.slane %v1117, %v1121
        %v1128 = vunpack.c.l.b16 %v1113
        %v1129 = vunpack.c.l.b16 %v1114
        %v1130 = vunpack.c.l.b16 %v1115
        %v1131 = vunpack.c.l.b16 %v1116
        %v1132 = vpack.c.b16 %v1129, %v1128
        %v1133 = vpack.c.b16 %v1131, %v1130
        %vm1136 = vcmask 261120
        %v1138 = vsel %vm1136, %v1112, 0
        %1140 = vmatprep.subr.bf16.mxu0 0
        %1141 = vmatpush1.bf16.msra.mxu0 %v1132
        %1142 = vmatprep.subr.bf16.mxu0 0
        %1143 = vmatpush1.bf16.msra.mxu0 %v1133
        %1144 = vmatprep.subr.bf16.mxu0 0
        %1145 = vmatpush1.bf16.msra.mxu0 0
        %1146 = vmatprep.subr.bf16.mxu0 0
        %1147 = vmatpush1.bf16.msra.mxu0 0
        %1148 = vmatprep.subr.bf16.mxu0 0
        %1149 = vmatpush1.bf16.msra.mxu0 0
        %1150 = vmatprep.subr.bf16.mxu0 0
        %1151 = vmatpush1.bf16.msra.mxu0 0
        %1152 = vmatprep.subr.bf16.mxu0 0
        %1153 = vmatpush1.bf16.msra.mxu0 0
        %1154 = vmatprep.subr.bf16.mxu0 0
        %1155 = vmatpush1.bf16.msra.mxu0 0
        %1156 = vmatprep.subr.bf16.mxu0 0
        %1157 = vmatpush1.bf16.msra.mxu0 0
        %1158 = vmatprep.subr.bf16.mxu0 0
        %1159 = vmatpush1.bf16.msra.mxu0 0
        %1160 = vmatprep.subr.bf16.mxu0 0
        %1161 = vmatpush1.bf16.msra.mxu0 0
        %1162 = vmatprep.subr.bf16.mxu0 0
        %1163 = vmatpush1.bf16.msra.mxu0 0
        %1164 = vmatprep.subr.bf16.mxu0 0
        %1165 = vmatpush1.bf16.msra.mxu0 0
        %1166 = vmatprep.subr.bf16.mxu0 0
        %1167 = vmatpush1.bf16.msra.mxu0 0
        %1168 = vmatprep.subr.bf16.mxu0 0
        %1169 = vmatpush1.bf16.msra.mxu0 0
        %1170 = vmatprep.subr.bf16.mxu0 0
        %1171 = vmatpush1.bf16.msra.mxu0 0
        %1172 = vmatprep.mubr.bf16.mxu0 0
        %1173 = vmatmul.mubr.bf16.gmra.mrb[0].mxu0 %v1138
        %v1174 = vpop.f32.mrb[0].mxu0
        %v1175 = vadd.f32 %v1122, %v1174
        %v1176 = vpop.f32.mrb[0].mxu0
        %v1177 = vpop.f32.mrb[0].mxu0
        %v1178 = vpop.f32.mrb[0].mxu0
        %1179 = vdwg.mxu0
        %v1180 = vpack.c.bf16 %v1175, %v1175
        %1182 = vrot.lane.b32.xlu0 %v1180, 96
        %v1183 = vpop.permute.xlu0 %1182
        %vm1184 = vcmask 64512
        %v1186 = vsel %vm1184, %v1180, 0
        %v1189 = vsel %vm1184, %v1183, 0
        %1191 = vmatprep.subr.bf16.mxu0 0
        %1192 = vmatpush1.bf16.xpose.msra.mxu0 %v1189
        %1193 = vmatprep.subr.bf16.mxu0 0
        %1194 = vmatpush1.bf16.xpose.msra.mxu0 0
        %1195 = vmatprep.subr.bf16.mxu0 0
        %1196 = vmatpush1.bf16.xpose.msra.mxu0 0
        %1197 = vmatprep.subr.bf16.mxu0 0
        %1198 = vmatpush1.bf16.xpose.msra.mxu0 0
        %1199 = vmatprep.subr.bf16.mxu0 0
        %1200 = vmatpush1.bf16.xpose.msra.mxu0 0
        %1201 = vmatprep.subr.bf16.mxu0 0
        %1202 = vmatpush1.bf16.xpose.msra.mxu0 0
        %1203 = vmatprep.subr.bf16.mxu0 0
        %1204 = vmatpush1.bf16.xpose.msra.mxu0 0
        %1205 = vmatprep.subr.bf16.mxu0 0
        %1206 = vmatpush1.bf16.xpose.msra.mxu0 0
        %1207 = vmatprep.subr.bf16.mxu0 0
        %1208 = vmatpush1.bf16.xpose.msra.mxu0 0
        %1209 = vmatprep.subr.bf16.mxu0 0
        %1210 = vmatpush1.bf16.xpose.msra.mxu0 0
        %1211 = vmatprep.subr.bf16.mxu0 0
        %1212 = vmatpush1.bf16.xpose.msra.mxu0 0
        %1213 = vmatprep.subr.bf16.mxu0 0
        %1214 = vmatpush1.bf16.xpose.msra.mxu0 0
        %1215 = vmatprep.subr.bf16.mxu0 0
        %1216 = vmatpush1.bf16.xpose.msra.mxu0 0
        %1217 = vmatprep.subr.bf16.mxu0 0
        %1218 = vmatpush1.bf16.xpose.msra.mxu0 0
        %1219 = vmatprep.subr.bf16.mxu0 0
        %1220 = vmatpush1.bf16.xpose.msra.mxu0 0
        %1221 = vmatprep.subr.bf16.mxu0 0
        %1222 = vmatpush1.bf16.xpose.msra.mxu0 0
        %1223 = vmatprep.mubr.bf16.mxu0 0
        %1224 = vmatmul.mubr.bf16.gmra.mrb[0].mxu0 %v1186
        %v1225 = vpop.f32.mrb[0].mxu0
        %v1226 = vadd.f32 0.0, %v1225
        %v1227 = vpop.f32.mrb[0].mxu0
        %v1228 = vpop.f32.mrb[0].mxu0
        %v1229 = vpop.f32.mrb[0].mxu0
        %1230 = vdwg.mxu0
        %v1231 = vsel %vm1184, %v1226, -inf
        %1232 = vmax.xlane.f32.xlu0 %v1231
        %v1233 = vpop.xlane.xlu0 %1232
        %v1234 = vsub.f32 %v1226, %v1233
        %v1235 = vmul.f32 %v1234, 1.442695
        %v1236 = vpow.pop %v1235
        %v1237 = vsel %vm1184, %v1236, 0.0
        %1238 = vadd.xlane.f32.xlu0 %v1237
        %v1239 = vpop.xlane.xlu0 %1238
        %v1240 = vrcp.pop %v1239
        %v1241 = vmul.f32 %v1236, %v1240
        %v1242 = vpack.c.bf16 %v1241, %v1241
        %1243 = vrot.lane.b32.xlu0 %v1180, 64
        %v1244 = vpop.permute.xlu0 %1243
        %v1246 = vsel %vm1184, %v1242, 0
        %vm1248 = vcmask 1043456
        %v1250 = vsel %vm1248, %v1244, 0
        %1252 = vmatprep.subr.bf16.mxu0 0
        %1253 = vmatpush1.bf16.msra.mxu0 %v1250
        %1254 = vmatprep.subr.bf16.mxu0 0
        %1255 = vmatpush1.bf16.msra.mxu0 0
        %1256 = vmatprep.subr.bf16.mxu0 0
        %1257 = vmatpush1.bf16.msra.mxu0 0
        %1258 = vmatprep.subr.bf16.mxu0 0
        %1259 = vmatpush1.bf16.msra.mxu0 0
        %1260 = vmatprep.subr.bf16.mxu0 0
        %1261 = vmatpush1.bf16.msra.mxu0 0
        %1262 = vmatprep.subr.bf16.mxu0 0
        %1263 = vmatpush1.bf16.msra.mxu0 0
        %1264 = vmatprep.subr.bf16.mxu0 0
        %1265 = vmatpush1.bf16.msra.mxu0 0
        %1266 = vmatprep.subr.bf16.mxu0 0
        %1267 = vmatpush1.bf16.msra.mxu0 0
        %1268 = vmatprep.subr.bf16.mxu0 0
        %1269 = vmatpush1.bf16.msra.mxu0 0
        %1270 = vmatprep.subr.bf16.mxu0 0
        %1271 = vmatpush1.bf16.msra.mxu0 0
        %1272 = vmatprep.subr.bf16.mxu0 0
        %1273 = vmatpush1.bf16.msra.mxu0 0
        %1274 = vmatprep.subr.bf16.mxu0 0
        %1275 = vmatpush1.bf16.msra.mxu0 0
        %1276 = vmatprep.subr.bf16.mxu0 0
        %1277 = vmatpush1.bf16.msra.mxu0 0
        %1278 = vmatprep.subr.bf16.mxu0 0
        %1279 = vmatpush1.bf16.msra.mxu0 0
        %1280 = vmatprep.subr.bf16.mxu0 0
        %1281 = vmatpush1.bf16.msra.mxu0 0
        %1282 = vmatprep.subr.bf16.mxu0 0
        %1283 = vmatpush1.bf16.msra.mxu0 0
        %1284 = vmatprep.mubr.bf16.mxu0 0
        %1285 = vmatmul.mubr.bf16.gmra.mrb[0].mxu0 %v1246
        %v1286 = vpop.f32.mrb[0].mxu0
        %v1287 = vadd.f32 0.0, %v1286
        %v1288 = vpop.f32.mrb[0].mxu0
        %v1289 = vpop.f32.mrb[0].mxu0
        %v1290 = vpop.f32.mrb[0].mxu0
        %1291 = vdwg.mxu0
        %v1292 = vpack.c.bf16 %v1287, %v1287
        %vm1293 = vcmask 60416
        %1294 = vst.msk [vmem:[#allocation3] sm:$0xf] %vm1293, %v1292
        %1295 = vrot.lane.b32.xlu0 %v1180, 120
        %v1296 = vpop.permute.xlu0 %1295
        %1297 = vrot.lane.b32.xlu0 %v1180, 88
        %v1298 = vpop.permute.xlu0 %1297
        %v1300 = vsel %vm1184, %v1296, 0
        %v1303 = vsel %vm1184, %v1298, 0
        %1305 = vmatprep.subr.bf16.mxu0 0
        %1306 = vmatpush1.bf16.xpose.msra.mxu0 %v1303
        %1307 = vmatprep.subr.bf16.mxu0 0
        %1308 = vmatpush1.bf16.xpose.msra.mxu0 0
        %1309 = vmatprep.subr.bf16.mxu0 0
        %1310 = vmatpush1.bf16.xpose.msra.mxu0 0
        %1311 = vmatprep.subr.bf16.mxu0 0
        %1312 = vmatpush1.bf16.xpose.msra.mxu0 0
        %1313 = vmatprep.subr.bf16.mxu0 0
        %1314 = vmatpush1.bf16.xpose.msra.mxu0 0
        %1315 = vmatprep.subr.bf16.mxu0 0
        %1316 = vmatpush1.bf16.xpose.msra.mxu0 0
        %1317 = vmatprep.subr.bf16.mxu0 0
        %1318 = vmatpush1.bf16.xpose.msra.mxu0 0
        %1319 = vmatprep.subr.bf16.mxu0 0
        %1320 = vmatpush1.bf16.xpose.msra.mxu0 0
        %1321 = vmatprep.subr.bf16.mxu0 0
        %1322 = vmatpush1.bf16.xpose.msra.mxu0 0
        %1323 = vmatprep.subr.bf16.mxu0 0
        %1324 = vmatpush1.bf16.xpose.msra.mxu0 0
        %1325 = vmatprep.subr.bf16.mxu0 0
        %1326 = vmatpush1.bf16.xpose.msra.mxu0 0
        %1327 = vmatprep.subr.bf16.mxu0 0
        %1328 = vmatpush1.bf16.xpose.msra.mxu0 0
        %1329 = vmatprep.subr.bf16.mxu0 0
        %1330 = vmatpush1.bf16.xpose.msra.mxu0 0
        %1331 = vmatprep.subr.bf16.mxu0 0
        %1332 = vmatpush1.bf16.xpose.msra.mxu0 0
        %1333 = vmatprep.subr.bf16.mxu0 0
        %1334 = vmatpush1.bf16.xpose.msra.mxu0 0
        %1335 = vmatprep.subr.bf16.mxu0 0
        %1336 = vmatpush1.bf16.xpose.msra.mxu0 0
        %1337 = vmatprep.mubr.bf16.mxu0 0
        %1338 = vmatmul.mubr.bf16.gmra.mrb[0].mxu0 %v1300
        %v1339 = vpop.f32.mrb[0].mxu0
        %v1340 = vadd.f32 0.0, %v1339
        %v1341 = vpop.f32.mrb[0].mxu0
        %v1342 = vpop.f32.mrb[0].mxu0
        %v1343 = vpop.f32.mrb[0].mxu0
        %1344 = vdwg.mxu0
        %v1345 = vsel %vm1184, %v1340, -inf
        %1346 = vmax.xlane.f32.xlu0 %v1345
        %v1347 = vpop.xlane.xlu0 %1346
        %v1348 = vsub.f32 %v1340, %v1347
        %v1349 = vmul.f32 %v1348, 1.442695
        %v1350 = vpow.pop %v1349
        %v1351 = vsel %vm1184, %v1350, 0.0
        %1352 = vadd.xlane.f32.xlu0 %v1351
        %v1353 = vpop.xlane.xlu0 %1352
        %v1354 = vrcp.pop %v1353
        %v1355 = vmul.f32 %v1350, %v1354
        %v1356 = vpack.c.bf16 %v1355, %v1355
        %1357 = vrot.lane.b32.xlu0 %v1180, 56
        %v1358 = vpop.permute.xlu0 %1357
        %v1360 = vsel %vm1184, %v1356, 0
        %v1363 = vsel %vm1248, %v1358, 0
        %1365 = vmatprep.subr.bf16.mxu0 0
        %1366 = vmatpush1.bf16.msra.mxu0 %v1363
        %1367 = vmatprep.subr.bf16.mxu0 0
        %1368 = vmatpush1.bf16.msra.mxu0 0
        %1369 = vmatprep.subr.bf16.mxu0 0
        %1370 = vmatpush1.bf16.msra.mxu0 0
        %1371 = vmatprep.subr.bf16.mxu0 0
        %1372 = vmatpush1.bf16.msra.mxu0 0
        %1373 = vmatprep.subr.bf16.mxu0 0
        %1374 = vmatpush1.bf16.msra.mxu0 0
        %1375 = vmatprep.subr.bf16.mxu0 0
        %1376 = vmatpush1.bf16.msra.mxu0 0
        %1377 = vmatprep.subr.bf16.mxu0 0
        %1378 = vmatpush1.bf16.msra.mxu0 0
        %1379 = vmatprep.subr.bf16.mxu0 0
        %1380 = vmatpush1.bf16.msra.mxu0 0
        %1381 = vmatprep.subr.bf16.mxu0 0
        %1382 = vmatpush1.bf16.msra.mxu0 0
        %1383 = vmatprep.subr.bf16.mxu0 0
        %1384 = vmatpush1.bf16.msra.mxu0 0
        %1385 = vmatprep.subr.bf16.mxu0 0
        %1386 = vmatpush1.bf16.msra.mxu0 0
        %1387 = vmatprep.subr.bf16.mxu0 0
        %1388 = vmatpush1.bf16.msra.mxu0 0
        %1389 = vmatprep.subr.bf16.mxu0 0
        %1390 = vmatpush1.bf16.msra.mxu0 0
        %1391 = vmatprep.subr.bf16.mxu0 0
        %1392 = vmatpush1.bf16.msra.mxu0 0
        %1393 = vmatprep.subr.bf16.mxu0 0
        %1394 = vmatpush1.bf16.msra.mxu0 0
        %1395 = vmatprep.subr.bf16.mxu0 0
        %1396 = vmatpush1.bf16.msra.mxu0 0
        %1397 = vmatprep.mubr.bf16.mxu0 0
        %1398 = vmatmul.mubr.bf16.gmra.mrb[0].mxu0 %v1360
        %v1399 = vpop.f32.mrb[0].mxu0
        %v1400 = vadd.f32 0.0, %v1399
        %v1401 = vpop.f32.mrb[0].mxu0
        %v1402 = vpop.f32.mrb[0].mxu0
        %v1403 = vpop.f32.mrb[0].mxu0
        %1404 = vdwg.mxu0
        %v1405 = vpack.c.bf16 %v1400, %v1400
        %v1407 = vunpack.c.l.b16 %v1405
        %v1408 = vpack.c.b16 %v1407, %v1407
        %1409 = vrot.lane.b32.xlu0 %v1408, 8
        %v1410 = vpop.permute.xlu0 %1409
        %vm1412 = vcmask 126016
        %1413 = vst.msk [vmem:[#allocation3] sm:$0xf] %vm1412, %v1410
        %1414 = vrot.lane.b32.xlu0 %v1180, 112
        %v1415 = vpop.permute.xlu0 %1414
        %1416 = vrot.lane.b32.xlu0 %v1180, 80
        %v1417 = vpop.permute.xlu0 %1416
        %v1419 = vsel %vm1184, %v1415, 0
        %v1422 = vsel %vm1184, %v1417, 0
        %1424 = vmatprep.subr.bf16.mxu0 0
        %1425 = vmatpush1.bf16.xpose.msra.mxu0 %v1422
        %1426 = vmatprep.subr.bf16.mxu0 0
        %1427 = vmatpush1.bf16.xpose.msra.mxu0 0
        %1428 = vmatprep.subr.bf16.mxu0 0
        %1429 = vmatpush1.bf16.xpose.msra.mxu0 0
        %1430 = vmatprep.subr.bf16.mxu0 0
        %1431 = vmatpush1.bf16.xpose.msra.mxu0 0
        %1432 = vmatprep.subr.bf16.mxu0 0
        %1433 = vmatpush1.bf16.xpose.msra.mxu0 0
        %1434 = vmatprep.subr.bf16.mxu0 0
        %1435 = vmatpush1.bf16.xpose.msra.mxu0 0
        %1436 = vmatprep.subr.bf16.mxu0 0
        %1437 = vmatpush1.bf16.xpose.msra.mxu0 0
        %1438 = vmatprep.subr.bf16.mxu0 0
        %1439 = vmatpush1.bf16.xpose.msra.mxu0 0
        %1440 = vmatprep.subr.bf16.mxu0 0
        %1441 = vmatpush1.bf16.xpose.msra.mxu0 0
        %1442 = vmatprep.subr.bf16.mxu0 0
        %1443 = vmatpush1.bf16.xpose.msra.mxu0 0
        %1444 = vmatprep.subr.bf16.mxu0 0
        %1445 = vmatpush1.bf16.xpose.msra.mxu0 0
        %1446 = vmatprep.subr.bf16.mxu0 0
        %1447 = vmatpush1.bf16.xpose.msra.mxu0 0
        %1448 = vmatprep.subr.bf16.mxu0 0
        %1449 = vmatpush1.bf16.xpose.msra.mxu0 0
        %1450 = vmatprep.subr.bf16.mxu0 0
        %1451 = vmatpush1.bf16.xpose.msra.mxu0 0
        %1452 = vmatprep.subr.bf16.mxu0 0
        %1453 = vmatpush1.bf16.xpose.msra.mxu0 0
        %1454 = vmatprep.subr.bf16.mxu0 0
        %1455 = vmatpush1.bf16.xpose.msra.mxu0 0
        %1456 = vmatprep.mubr.bf16.mxu0 0
        %1457 = vmatmul.mubr.bf16.gmra.mrb[0].mxu0 %v1419
        %v1458 = vpop.f32.mrb[0].mxu0
        %v1459 = vadd.f32 0.0, %v1458
        %v1460 = vpop.f32.mrb[0].mxu0
        %v1461 = vpop.f32.mrb[0].mxu0
        %v1462 = vpop.f32.mrb[0].mxu0
        %1463 = vdwg.mxu0
        %v1464 = vsel %vm1184, %v1459, -inf
        %1465 = vmax.xlane.f32.xlu0 %v1464
        %v1466 = vpop.xlane.xlu0 %1465
        %v1467 = vsub.f32 %v1459, %v1466
        %v1468 = vmul.f32 %v1467, 1.442695
        %v1469 = vpow.pop %v1468
        %v1470 = vsel %vm1184, %v1469, 0.0
        %1471 = vadd.xlane.f32.xlu0 %v1470
        %v1472 = vpop.xlane.xlu0 %1471
        %v1473 = vrcp.pop %v1472
        %v1474 = vmul.f32 %v1469, %v1473
        %v1475 = vpack.c.bf16 %v1474, %v1474
        %1476 = vrot.lane.b32.xlu0 %v1180, 48
        %v1477 = vpop.permute.xlu0 %1476
        %v1479 = vsel %vm1184, %v1475, 0
        %v1482 = vsel %vm1248, %v1477, 0
        %1484 = vmatprep.subr.bf16.mxu0 0
        %1485 = vmatpush1.bf16.msra.mxu0 %v1482
        %1486 = vmatprep.subr.bf16.mxu0 0
        %1487 = vmatpush1.bf16.msra.mxu0 0
        %1488 = vmatprep.subr.bf16.mxu0 0
        %1489 = vmatpush1.bf16.msra.mxu0 0
        %1490 = vmatprep.subr.bf16.mxu0 0
        %1491 = vmatpush1.bf16.msra.mxu0 0
        %1492 = vmatprep.subr.bf16.mxu0 0
        %1493 = vmatpush1.bf16.msra.mxu0 0
        %1494 = vmatprep.subr.bf16.mxu0 0
        %1495 = vmatpush1.bf16.msra.mxu0 0
        %1496 = vmatprep.subr.bf16.mxu0 0
        %1497 = vmatpush1.bf16.msra.mxu0 0
        %1498 = vmatprep.subr.bf16.mxu0 0
        %1499 = vmatpush1.bf16.msra.mxu0 0
        %1500 = vmatprep.subr.bf16.mxu0 0
        %1501 = vmatpush1.bf16.msra.mxu0 0
        %1502 = vmatprep.subr.bf16.mxu0 0
        %1503 = vmatpush1.bf16.msra.mxu0 0
        %1504 = vmatprep.subr.bf16.mxu0 0
        %1505 = vmatpush1.bf16.msra.mxu0 0
        %1506 = vmatprep.subr.bf16.mxu0 0
        %1507 = vmatpush1.bf16.msra.mxu0 0
        %1508 = vmatprep.subr.bf16.mxu0 0
        %1509 = vmatpush1.bf16.msra.mxu0 0
        %1510 = vmatprep.subr.bf16.mxu0 0
        %1511 = vmatpush1.bf16.msra.mxu0 0
        %1512 = vmatprep.subr.bf16.mxu0 0
        %1513 = vmatpush1.bf16.msra.mxu0 0
        %1514 = vmatprep.subr.bf16.mxu0 0
        %1515 = vmatpush1.bf16.msra.mxu0 0
        %1516 = vmatprep.mubr.bf16.mxu0 0
        %1517 = vmatmul.mubr.bf16.gmra.mrb[0].mxu0 %v1479
        %v1518 = vpop.f32.mrb[0].mxu0
        %v1519 = vadd.f32 0.0, %v1518
        %v1520 = vpop.f32.mrb[0].mxu0
        %v1521 = vpop.f32.mrb[0].mxu0
        %v1522 = vpop.f32.mrb[0].mxu0
        %1523 = vdwg.mxu0
        %v1524 = vpack.c.bf16 %v1519, %v1519
        %v1526 = vunpack.c.l.b16 %v1524
        %v1527 = vpack.c.b16 %v1526, %v1526
        %1528 = vrot.lane.b32.xlu0 %v1527, 16
        %v1529 = vpop.permute.xlu0 %1528
        %vm1531 = vcmask 191616
        %1532 = vst.msk [vmem:[#allocation3] sm:$0xf] %vm1531, %v1529
        %1533 = vrot.lane.b32.xlu0 %v1180, 104
        %v1534 = vpop.permute.xlu0 %1533
        %1535 = vrot.lane.b32.xlu0 %v1180, 72
        %v1536 = vpop.permute.xlu0 %1535
        %v1538 = vsel %vm1184, %v1534, 0
        %v1541 = vsel %vm1184, %v1536, 0
        %1543 = vmatprep.subr.bf16.mxu0 0
        %1544 = vmatpush1.bf16.xpose.msra.mxu0 %v1541
        %1545 = vmatprep.subr.bf16.mxu0 0
        %1546 = vmatpush1.bf16.xpose.msra.mxu0 0
        %1547 = vmatprep.subr.bf16.mxu0 0
        %1548 = vmatpush1.bf16.xpose.msra.mxu0 0
        %1549 = vmatprep.subr.bf16.mxu0 0
        %1550 = vmatpush1.bf16.xpose.msra.mxu0 0
        %1551 = vmatprep.subr.bf16.mxu0 0
        %1552 = vmatpush1.bf16.xpose.msra.mxu0 0
        %1553 = vmatprep.subr.bf16.mxu0 0
        %1554 = vmatpush1.bf16.xpose.msra.mxu0 0
        %1555 = vmatprep.subr.bf16.mxu0 0
        %1556 = vmatpush1.bf16.xpose.msra.mxu0 0
        %1557 = vmatprep.subr.bf16.mxu0 0
        %1558 = vmatpush1.bf16.xpose.msra.mxu0 0
        %1559 = vmatprep.subr.bf16.mxu0 0
        %1560 = vmatpush1.bf16.xpose.msra.mxu0 0
        %1561 = vmatprep.subr.bf16.mxu0 0
        %1562 = vmatpush1.bf16.xpose.msra.mxu0 0
        %1563 = vmatprep.subr.bf16.mxu0 0
        %1564 = vmatpush1.bf16.xpose.msra.mxu0 0
        %1565 = vmatprep.subr.bf16.mxu0 0
        %1566 = vmatpush1.bf16.xpose.msra.mxu0 0
        %1567 = vmatprep.subr.bf16.mxu0 0
        %1568 = vmatpush1.bf16.xpose.msra.mxu0 0
        %1569 = vmatprep.subr.bf16.mxu0 0
        %1570 = vmatpush1.bf16.xpose.msra.mxu0 0
        %1571 = vmatprep.subr.bf16.mxu0 0
        %1572 = vmatpush1.bf16.xpose.msra.mxu0 0
        %1573 = vmatprep.subr.bf16.mxu0 0
        %1574 = vmatpush1.bf16.xpose.msra.mxu0 0
        %1575 = vmatprep.mubr.bf16.mxu0 0
        %1576 = vmatmul.mubr.bf16.gmra.mrb[0].mxu0 %v1538
        %v1577 = vpop.f32.mrb[0].mxu0
        %v1578 = vadd.f32 0.0, %v1577
        %v1579 = vpop.f32.mrb[0].mxu0
        %v1580 = vpop.f32.mrb[0].mxu0
        %v1581 = vpop.f32.mrb[0].mxu0
        %1582 = vdwg.mxu0
        %v1583 = vsel %vm1184, %v1578, -inf
        %1584 = vmax.xlane.f32.xlu0 %v1583
        %v1585 = vpop.xlane.xlu0 %1584
        %v1586 = vsub.f32 %v1578, %v1585
        %v1587 = vmul.f32 %v1586, 1.442695
        %v1588 = vpow.pop %v1587
        %v1589 = vsel %vm1184, %v1588, 0.0
        %1590 = vadd.xlane.f32.xlu0 %v1589
        %v1591 = vpop.xlane.xlu0 %1590
        %v1592 = vrcp.pop %v1591
        %v1593 = vmul.f32 %v1588, %v1592
        %v1594 = vpack.c.bf16 %v1593, %v1593
        %1595 = vrot.lane.b32.xlu0 %v1180, 40
        %v1596 = vpop.permute.xlu0 %1595
        %v1598 = vsel %vm1184, %v1594, 0
        %v1601 = vsel %vm1248, %v1596, 0
        %1603 = vmatprep.subr.bf16.mxu0 0
        %1604 = vmatpush1.bf16.msra.mxu0 %v1601
        %1605 = vmatprep.subr.bf16.mxu0 0
        %1606 = vmatpush1.bf16.msra.mxu0 0
        %1607 = vmatprep.subr.bf16.mxu0 0
        %1608 = vmatpush1.bf16.msra.mxu0 0
        %1609 = vmatprep.subr.bf16.mxu0 0
        %1610 = vmatpush1.bf16.msra.mxu0 0
        %1611 = vmatprep.subr.bf16.mxu0 0
        %1612 = vmatpush1.bf16.msra.mxu0 0
        %1613 = vmatprep.subr.bf16.mxu0 0
        %1614 = vmatpush1.bf16.msra.mxu0 0
        %1615 = vmatprep.subr.bf16.mxu0 0
        %1616 = vmatpush1.bf16.msra.mxu0 0
        %1617 = vmatprep.subr.bf16.mxu0 0
        %1618 = vmatpush1.bf16.msra.mxu0 0
        %1619 = vmatprep.subr.bf16.mxu0 0
        %1620 = vmatpush1.bf16.msra.mxu0 0
        %1621 = vmatprep.subr.bf16.mxu0 0
        %1622 = vmatpush1.bf16.msra.mxu0 0
        %1623 = vmatprep.subr.bf16.mxu0 0
        %1624 = vmatpush1.bf16.msra.mxu0 0
        %1625 = vmatprep.subr.bf16.mxu0 0
        %1626 = vmatpush1.bf16.msra.mxu0 0
        %1627 = vmatprep.subr.bf16.mxu0 0
        %1628 = vmatpush1.bf16.msra.mxu0 0
        %1629 = vmatprep.subr.bf16.mxu0 0
        %1630 = vmatpush1.bf16.msra.mxu0 0
        %1631 = vmatprep.subr.bf16.mxu0 0
        %1632 = vmatpush1.bf16.msra.mxu0 0
        %1633 = vmatprep.subr.bf16.mxu0 0
        %1634 = vmatpush1.bf16.msra.mxu0 0
        %1635 = vmatprep.mubr.bf16.mxu0 0
        %1636 = vmatmul.mubr.bf16.gmra.mrb[0].mxu0 %v1598
        %v1637 = vpop.f32.mrb[0].mxu0
        %v1638 = vadd.f32 0.0, %v1637
        %v1639 = vpop.f32.mrb[0].mxu0
        %v1640 = vpop.f32.mrb[0].mxu0
        %v1641 = vpop.f32.mrb[0].mxu0
        %1642 = vdwg.mxu0
        %v1643 = vpack.c.bf16 %v1638, %v1638
        %v1645 = vunpack.c.l.b16 %v1643
        %v1646 = vpack.c.b16 %v1645, %v1645
        %1647 = vrot.lane.b32.xlu0 %v1646, 24
        %v1648 = vpop.permute.xlu0 %1647
        %vm1650 = vcmask 257216
        %1651 = vst.msk [vmem:[#allocation3] sm:$0xf] %vm1650, %v1648
        %v1652 = vld [vmem:[#allocation3] sm:$0xf]
        %v1653 = vld [vmem:[%s859] sm:$0xf]
        %v1654 = vld [vmem:[%s859 + $0x4] sm:$0xf]
        %v1655 = vld [vmem:[%s859 + $0x8] sm:$0xf]
        %v1656 = vld [vmem:[%s859 + $0xc] sm:$0xf]
        %v1657 = vld [vmem:[%s867] sm:$0x1]
        %v1659 = vlaneseq
        %v1660 = vshrl.u32 %v1659, 7
        %v1661 = vsub.s32 0, %v1660
        %v1662 = vrot.slane %v1657, %v1661
        %v1668 = vunpack.c.l.b16 %v1653
        %v1669 = vunpack.c.l.b16 %v1654
        %v1670 = vunpack.c.l.b16 %v1655
        %v1671 = vunpack.c.l.b16 %v1656
        %v1672 = vpack.c.b16 %v1669, %v1668
        %v1673 = vpack.c.b16 %v1671, %v1670
        %v1677 = vsel %vm1136, %v1652, 0
        %1679 = vmatprep.subr.bf16.mxu0 0
        %1680 = vmatpush1.bf16.msra.mxu0 %v1672
        %1681 = vmatprep.subr.bf16.mxu0 0
        %1682 = vmatpush1.bf16.msra.mxu0 %v1673
        %1683 = vmatprep.subr.bf16.mxu0 0
        %1684 = vmatpush1.bf16.msra.mxu0 0
        %1685 = vmatprep.subr.bf16.mxu0 0
        %1686 = vmatpush1.bf16.msra.mxu0 0
        %1687 = vmatprep.subr.bf16.mxu0 0
        %1688 = vmatpush1.bf16.msra.mxu0 0
        %1689 = vmatprep.subr.bf16.mxu0 0
        %1690 = vmatpush1.bf16.msra.mxu0 0
        %1691 = vmatprep.subr.bf16.mxu0 0
        %1692 = vmatpush1.bf16.msra.mxu0 0
        %1693 = vmatprep.subr.bf16.mxu0 0
        %1694 = vmatpush1.bf16.msra.mxu0 0
        %1695 = vmatprep.subr.bf16.mxu0 0
        %1696 = vmatpush1.bf16.msra.mxu0 0
        %1697 = vmatprep.subr.bf16.mxu0 0
        %1698 = vmatpush1.bf16.msra.mxu0 0
        %1699 = vmatprep.subr.bf16.mxu0 0
        %1700 = vmatpush1.bf16.msra.mxu0 0
        %1701 = vmatprep.subr.bf16.mxu0 0
        %1702 = vmatpush1.bf16.msra.mxu0 0
        %1703 = vmatprep.subr.bf16.mxu0 0
        %1704 = vmatpush1.bf16.msra.mxu0 0
        %1705 = vmatprep.subr.bf16.mxu0 0
        %1706 = vmatpush1.bf16.msra.mxu0 0
        %1707 = vmatprep.subr.bf16.mxu0 0
        %1708 = vmatpush1.bf16.msra.mxu0 0
        %1709 = vmatprep.subr.bf16.mxu0 0
        %1710 = vmatpush1.bf16.msra.mxu0 0
        %1711 = vmatprep.mubr.bf16.mxu0 0
        %1712 = vmatmul.mubr.bf16.gmra.mrb[0].mxu0 %v1677
        %v1713 = vpop.f32.mrb[0].mxu0
        %v1714 = vadd.f32 %v1662, %v1713
        %v1715 = vpop.f32.mrb[0].mxu0
        %v1716 = vpop.f32.mrb[0].mxu0
        %v1717 = vpop.f32.mrb[0].mxu0
        %1718 = vdwg.mxu0
        %v1719 = vadd.f32 %v1111, %v1714
        %v1720 = vld [vmem:[%s875] sm:$0x1]
        %v1721 = vld [vmem:[%s883] sm:$0x1]
        %v1722 = vsel %vm1136, %v1719, 0.0
        %1723 = vadd.xlane.f32.xlu0 %v1722
        %v1724 = vpop.xlane.xlu0 %1723
        %v1725 = vrcp.pop 32.0
        %v1726 = vmul.f32 %v1724, %v1725
        %v1727 = vsub.f32 %v1719, %v1726
        %v1728 = vmul.f32 %v1727, %v1727
        %v1729 = vsel %vm1136, %v1728, 0.0
        %1730 = vadd.xlane.f32.xlu0 %v1729
        %v1731 = vpop.xlane.xlu0 %1730
        %v1732 = vmul.f32 %v1731, %v1725
        %v1733 = vadd.f32 %v1732, 1e-05
        %v1734 = vrsqrt.pop %v1733
        %v1735 = vmul.f32 %v1727, %v1734
        %v1737 = vlaneseq
        %v1738 = vshrl.u32 %v1737, 7
        %v1739 = vsub.s32 0, %v1738
        %v1740 = vrot.slane %v1720, %v1739
        %v1742 = vmul.f32 %v1735, %v1740
        %v1744 = vlaneseq
        %v1745 = vshrl.u32 %v1744, 7
        %v1746 = vsub.s32 0, %v1745
        %v1747 = vrot.slane %v1721, %v1746
        %v1749 = vadd.f32 %v1742, %v1747
        %v1750 = vpack.c.bf16 %v1749, %v1749
        %v1751 = vld [vmem:[%s892] sm:$0xff]
        %v1752 = vld [vmem:[%s892 + $0x8] sm:$0xff]
        %v1753 = vld [vmem:[%s892 + $0x40] sm:$0xff]
        %v1754 = vld [vmem:[%s892 + $0x48] sm:$0xff]
        %v1755 = vld [vmem:[%s892 + $0x80] sm:$0xff]
        %v1756 = vld [vmem:[%s892 + $0x88] sm:$0xff]
        %v1757 = vld [vmem:[%s892 + $0xc0] sm:$0xff]
        %v1758 = vld [vmem:[%s892 + $0xc8] sm:$0xff]
        %v1759 = vld [vmem:[%s901] sm:$0xf]
        %v1761 = vlaneseq
        %v1762 = vshrl.u32 %v1761, 7
        %v1763 = vsub.s32 0, %v1762
        %v1764 = vrot.slane %v1759, %v1763
        %v1765 = vlaneseq
        %v1766 = vshrl.u32 %v1765, 7
        %v1767 = vsub.s32 1, %v1766
        %v1768 = vrot.slane %v1759, %v1767
        %v1769 = vlaneseq
        %v1770 = vshrl.u32 %v1769, 7
        %v1771 = vsub.s32 2, %v1770
        %v1772 = vrot.slane %v1759, %v1771
        %v1773 = vlaneseq
        %v1774 = vshrl.u32 %v1773, 7
        %v1775 = vsub.s32 3, %v1774
        %v1776 = vrot.slane %v1759, %v1775
        %v1789 = vunpack.c.l.b16 %v1751
        %v1790 = vunpack.c.h.b16 %v1751
        %v1791 = vunpack.c.l.b16 %v1752
        %v1792 = vunpack.c.h.b16 %v1752
        %v1793 = vunpack.c.l.b16 %v1753
        %v1794 = vunpack.c.h.b16 %v1753
        %v1795 = vunpack.c.l.b16 %v1754
        %v1796 = vunpack.c.h.b16 %v1754
        %v1797 = vunpack.c.l.b16 %v1755
        %v1798 = vunpack.c.h.b16 %v1755
        %v1799 = vunpack.c.l.b16 %v1756
        %v1800 = vunpack.c.h.b16 %v1756
        %v1801 = vunpack.c.l.b16 %v1757
        %v1802 = vunpack.c.h.b16 %v1757
        %v1803 = vunpack.c.l.b16 %v1758
        %v1804 = vunpack.c.h.b16 %v1758
        %v1805 = vpack.c.b16 %v1793, %v1789
        %v1806 = vpack.c.b16 %v1794, %v1790
        %v1807 = vpack.c.b16 %v1795, %v1791
        %v1808 = vpack.c.b16 %v1796, %v1792
        %v1809 = vpack.c.b16 %v1801, %v1797
        %v1810 = vpack.c.b16 %v1802, %v1798
        %v1811 = vpack.c.b16 %v1803, %v1799
        %v1812 = vpack.c.b16 %v1804, %v1800
        %v1822 = vsel %vm1136, %v1750, 0
        %1824 = vmatprep.subr.bf16.mxu0 %v1806
        %1825 = vmatpush1.bf16.msra.mxu0 %v1805
        %1826 = vmatprep.subr.bf16.mxu0 %v1810
        %1827 = vmatpush1.bf16.msra.mxu0 %v1809
        %1828 = vmatprep.subr.bf16.mxu0 0
        %1829 = vmatpush1.bf16.msra.mxu0 0
        %1830 = vmatprep.subr.bf16.mxu0 0
        %1831 = vmatpush1.bf16.msra.mxu0 0
        %1832 = vmatprep.subr.bf16.mxu0 0
        %1833 = vmatpush1.bf16.msra.mxu0 0
        %1834 = vmatprep.subr.bf16.mxu0 0
        %1835 = vmatpush1.bf16.msra.mxu0 0
        %1836 = vmatprep.subr.bf16.mxu0 0
        %1837 = vmatpush1.bf16.msra.mxu0 0
        %1838 = vmatprep.subr.bf16.mxu0 0
        %1839 = vmatpush1.bf16.msra.mxu0 0
        %1840 = vmatprep.subr.bf16.mxu0 0
        %1841 = vmatpush1.bf16.msra.mxu0 0
        %1842 = vmatprep.subr.bf16.mxu0 0
        %1843 = vmatpush1.bf16.msra.mxu0 0
        %1844 = vmatprep.subr.bf16.mxu0 0
        %1845 = vmatpush1.bf16.msra.mxu0 0
        %1846 = vmatprep.subr.bf16.mxu0 0
        %1847 = vmatpush1.bf16.msra.mxu0 0
        %1848 = vmatprep.subr.bf16.mxu0 0
        %1849 = vmatpush1.bf16.msra.mxu0 0
        %1850 = vmatprep.subr.bf16.mxu0 0
        %1851 = vmatpush1.bf16.msra.mxu0 0
        %1852 = vmatprep.subr.bf16.mxu0 0
        %1853 = vmatpush1.bf16.msra.mxu0 0
        %1854 = vmatprep.subr.bf16.mxu0 0
        %1855 = vmatpush1.bf16.msra.mxu0 0
        %1856 = vmatprep.mubr.bf16.mxu0 0
        %1857 = vmatmul.mubr.bf16.gmra.mrb[0].mxu0 %v1822
        %v1858 = vpop.f32.mrb[0].mxu0
        %v1859 = vadd.f32 %v1764, %v1858
        %v1860 = vpop.f32.mrb[0].mxu0
        %v1861 = vadd.f32 %v1768, %v1860
        %v1862 = vpop.f32.mrb[0].mxu0
        %v1863 = vpop.f32.mrb[0].mxu0
        %1864 = vdwg.mxu0
        %1865 = vmatprep.subr.bf16.mxu0 %v1808
        %1866 = vmatpush1.bf16.msra.mxu0 %v1807
        %1867 = vmatprep.subr.bf16.mxu0 %v1812
        %1868 = vmatpush1.bf16.msra.mxu0 %v1811
        %1869 = vmatprep.subr.bf16.mxu0 0
        %1870 = vmatpush1.bf16.msra.mxu0 0
        %1871 = vmatprep.subr.bf16.mxu0 0
        %1872 = vmatpush1.bf16.msra.mxu0 0
        %1873 = vmatprep.subr.bf16.mxu0 0
        %1874 = vmatpush1.bf16.msra.mxu0 0
        %1875 = vmatprep.subr.bf16.mxu0 0
        %1876 = vmatpush1.bf16.msra.mxu0 0
        %1877 = vmatprep.subr.bf16.mxu0 0
        %1878 = vmatpush1.bf16.msra.mxu0 0
        %1879 = vmatprep.subr.bf16.mxu0 0
        %1880 = vmatpush1.bf16.msra.mxu0 0
        %1881 = vmatprep.subr.bf16.mxu0 0
        %1882 = vmatpush1.bf16.msra.mxu0 0
        %1883 = vmatprep.subr.bf16.mxu0 0
        %1884 = vmatpush1.bf16.msra.mxu0 0
        %1885 = vmatprep.subr.bf16.mxu0 0
        %1886 = vmatpush1.bf16.msra.mxu0 0
        %1887 = vmatprep.subr.bf16.mxu0 0
        %1888 = vmatpush1.bf16.msra.mxu0 0
        %1889 = vmatprep.subr.bf16.mxu0 0
        %1890 = vmatpush1.bf16.msra.mxu0 0
        %1891 = vmatprep.subr.bf16.mxu0 0
        %1892 = vmatpush1.bf16.msra.mxu0 0
        %1893 = vmatprep.subr.bf16.mxu0 0
        %1894 = vmatpush1.bf16.msra.mxu0 0
        %1895 = vmatprep.subr.bf16.mxu0 0
        %1896 = vmatpush1.bf16.msra.mxu0 0
        %1897 = vmatprep.mubr.bf16.mxu0 0
        %1898 = vmatmul.mubr.bf16.gmra.mrb[0].mxu0 %v1822
        %v1899 = vpop.f32.mrb[0].mxu0
        %v1900 = vadd.f32 %v1772, %v1899
        %v1901 = vpop.f32.mrb[0].mxu0
        %v1902 = vadd.f32 %v1776, %v1901
        %v1903 = vpop.f32.mrb[0].mxu0
        %v1904 = vpop.f32.mrb[0].mxu0
        %1905 = vdwg.mxu0
        %v1906 = vmax.f32 %v1859, 0.0
        %v1907 = vmax.f32 %v1861, 0.0
        %v1908 = vmax.f32 %v1900, 0.0
        %v1909 = vmax.f32 %v1902, 0.0
        %v1910 = vpack.c.bf16 %v1906, %v1906
        %v1911 = vpack.c.bf16 %v1907, %v1907
        %v1912 = vpack.c.bf16 %v1908, %v1908
        %v1913 = vpack.c.bf16 %v1909, %v1909
        %v1914 = vld [vmem:[%s910] sm:$0xf]
        %v1915 = vld [vmem:[%s910 + $0x4] sm:$0xf]
        %v1916 = vld [vmem:[%s910 + $0x8] sm:$0xf]
        %v1917 = vld [vmem:[%s910 + $0xc] sm:$0xf]
        %v1918 = vld [vmem:[%s910 + $0x10] sm:$0xf]
        %v1919 = vld [vmem:[%s910 + $0x14] sm:$0xf]
        %v1920 = vld [vmem:[%s910 + $0x18] sm:$0xf]
        %v1921 = vld [vmem:[%s910 + $0x1c] sm:$0xf]
        %v1922 = vld [vmem:[%s910 + $0x20] sm:$0xf]
        %v1923 = vld [vmem:[%s910 + $0x24] sm:$0xf]
        %v1924 = vld [vmem:[%s910 + $0x28] sm:$0xf]
        %v1925 = vld [vmem:[%s910 + $0x2c] sm:$0xf]
        %v1926 = vld [vmem:[%s910 + $0x30] sm:$0xf]
        %v1927 = vld [vmem:[%s910 + $0x34] sm:$0xf]
        %v1928 = vld [vmem:[%s910 + $0x38] sm:$0xf]
        %v1929 = vld [vmem:[%s910 + $0x3c] sm:$0xf]
        %v1930 = vld [vmem:[%s910 + $0x40] sm:$0xf]
        %v1931 = vld [vmem:[%s910 + $0x44] sm:$0xf]
        %v1932 = vld [vmem:[%s910 + $0x48] sm:$0xf]
        %v1933 = vld [vmem:[%s910 + $0x4c] sm:$0xf]
        %v1934 = vld [vmem:[%s910 + $0x50] sm:$0xf]
        %v1935 = vld [vmem:[%s910 + $0x54] sm:$0xf]
        %v1936 = vld [vmem:[%s910 + $0x58] sm:$0xf]
        %v1937 = vld [vmem:[%s910 + $0x5c] sm:$0xf]
        %v1938 = vld [vmem:[%s910 + $0x60] sm:$0xf]
        %v1939 = vld [vmem:[%s910 + $0x64] sm:$0xf]
        %v1940 = vld [vmem:[%s910 + $0x68] sm:$0xf]
        %v1941 = vld [vmem:[%s910 + $0x6c] sm:$0xf]
        %v1942 = vld [vmem:[%s910 + $0x70] sm:$0xf]
        %v1943 = vld [vmem:[%s910 + $0x74] sm:$0xf]
        %v1944 = vld [vmem:[%s910 + $0x78] sm:$0xf]
        %v1945 = vld [vmem:[%s910 + $0x7c] sm:$0xf]
        %v1946 = vld [vmem:[%s910 + $0x80] sm:$0xf]
        %v1947 = vld [vmem:[%s910 + $0x84] sm:$0xf]
        %v1948 = vld [vmem:[%s910 + $0x88] sm:$0xf]
        %v1949 = vld [vmem:[%s910 + $0x8c] sm:$0xf]
        %v1950 = vld [vmem:[%s910 + $0x90] sm:$0xf]
        %v1951 = vld [vmem:[%s910 + $0x94] sm:$0xf]
        %v1952 = vld [vmem:[%s910 + $0x98] sm:$0xf]
        %v1953 = vld [vmem:[%s910 + $0x9c] sm:$0xf]
        %v1954 = vld [vmem:[%s910 + $0xa0] sm:$0xf]
        %v1955 = vld [vmem:[%s910 + $0xa4] sm:$0xf]
        %v1956 = vld [vmem:[%s910 + $0xa8] sm:$0xf]
        %v1957 = vld [vmem:[%s910 + $0xac] sm:$0xf]
        %v1958 = vld [vmem:[%s910 + $0xb0] sm:$0xf]
        %v1959 = vld [vmem:[%s910 + $0xb4] sm:$0xf]
        %v1960 = vld [vmem:[%s910 + $0xb8] sm:$0xf]
        %v1961 = vld [vmem:[%s910 + $0xbc] sm:$0xf]
        %v1962 = vld [vmem:[%s910 + $0xc0] sm:$0xf]
        %v1963 = vld [vmem:[%s910 + $0xc4] sm:$0xf]
        %v1964 = vld [vmem:[%s910 + $0xc8] sm:$0xf]
        %v1965 = vld [vmem:[%s910 + $0xcc] sm:$0xf]
        %v1966 = vld [vmem:[%s910 + $0xd0] sm:$0xf]
        %v1967 = vld [vmem:[%s910 + $0xd4] sm:$0xf]
        %v1968 = vld [vmem:[%s910 + $0xd8] sm:$0xf]
        %v1969 = vld [vmem:[%s910 + $0xdc] sm:$0xf]
        %v1970 = vld [vmem:[%s910 + $0xe0] sm:$0xf]
        %v1971 = vld [vmem:[%s910 + $0xe4] sm:$0xf]
        %v1972 = vld [vmem:[%s910 + $0xe8] sm:$0xf]
        %v1973 = vld [vmem:[%s910 + $0xec] sm:$0xf]
        %v1974 = vld [vmem:[%s910 + $0xf0] sm:$0xf]
        %v1975 = vld [vmem:[%s910 + $0xf4] sm:$0xf]
        %v1976 = vld [vmem:[%s910 + $0xf8] sm:$0xf]
        %v1977 = vld [vmem:[%s910 + $0xfc] sm:$0xf]
        %v1978 = vld [vmem:[%s892 + $0x10] sm:$0xff]
        %v1979 = vld [vmem:[%s892 + $0x18] sm:$0xff]
        %v1980 = vld [vmem:[%s892 + $0x50] sm:$0xff]
        %v1981 = vld [vmem:[%s892 + $0x58] sm:$0xff]
        %v1982 = vld [vmem:[%s892 + $0x90] sm:$0xff]
        %v1983 = vld [vmem:[%s892 + $0x98] sm:$0xff]
        %v1984 = vld [vmem:[%s892 + $0xd0] sm:$0xff]
        %v1985 = vld [vmem:[%s892 + $0xd8] sm:$0xff]
        %v1986 = vld [vmem:[%s901 + $0x4] sm:$0xf]
        %v1988 = vlaneseq
        %v1989 = vshrl.u32 %v1988, 7
        %v1990 = vsub.s32 0, %v1989
        %v1991 = vrot.slane %v1986, %v1990
        %v1992 = vlaneseq
        %v1993 = vshrl.u32 %v1992, 7
        %v1994 = vsub.s32 1, %v1993
        %v1995 = vrot.slane %v1986, %v1994
        %v1996 = vlaneseq
        %v1997 = vshrl.u32 %v1996, 7
        %v1998 = vsub.s32 2, %v1997
        %v1999 = vrot.slane %v1986, %v1998
        %v2000 = vlaneseq
        %v2001 = vshrl.u32 %v2000, 7
        %v2002 = vsub.s32 3, %v2001
        %v2003 = vrot.slane %v1986, %v2002
        %v2016 = vunpack.c.l.b16 %v1978
        %v2017 = vunpack.c.h.b16 %v1978
        %v2018 = vunpack.c.l.b16 %v1979
        %v2019 = vunpack.c.h.b16 %v1979
        %v2020 = vunpack.c.l.b16 %v1980
        %v2021 = vunpack.c.h.b16 %v1980
        %v2022 = vunpack.c.l.b16 %v1981
        %v2023 = vunpack.c.h.b16 %v1981
        %v2024 = vunpack.c.l.b16 %v1982
        %v2025 = vunpack.c.h.b16 %v1982
        %v2026 = vunpack.c.l.b16 %v1983
        %v2027 = vunpack.c.h.b16 %v1983
        %v2028 = vunpack.c.l.b16 %v1984
        %v2029 = vunpack.c.h.b16 %v1984
        %v2030 = vunpack.c.l.b16 %v1985
        %v2031 = vunpack.c.h.b16 %v1985
        %v2032 = vpack.c.b16 %v2020, %v2016
        %v2033 = vpack.c.b16 %v2021, %v2017
        %v2034 = vpack.c.b16 %v2022, %v2018
        %v2035 = vpack.c.b16 %v2023, %v2019
        %v2036 = vpack.c.b16 %v2028, %v2024
        %v2037 = vpack.c.b16 %v2029, %v2025
        %v2038 = vpack.c.b16 %v2030, %v2026
        %v2039 = vpack.c.b16 %v2031, %v2027
        %2048 = vmatprep.subr.bf16.mxu0 %v2033
        %2049 = vmatpush1.bf16.msra.mxu0 %v2032
        %2050 = vmatprep.subr.bf16.mxu0 %v2037
        %2051 = vmatpush1.bf16.msra.mxu0 %v2036
        %2052 = vmatprep.subr.bf16.mxu0 0
        %2053 = vmatpush1.bf16.msra.mxu0 0
        %2054 = vmatprep.subr.bf16.mxu0 0
        %2055 = vmatpush1.bf16.msra.mxu0 0
        %2056 = vmatprep.subr.bf16.mxu0 0
        %2057 = vmatpush1.bf16.msra.mxu0 0
        %2058 = vmatprep.subr.bf16.mxu0 0
        %2059 = vmatpush1.bf16.msra.mxu0 0
        %2060 = vmatprep.subr.bf16.mxu0 0
        %2061 = vmatpush1.bf16.msra.mxu0 0
        %2062 = vmatprep.subr.bf16.mxu0 0
        %2063 = vmatpush1.bf16.msra.mxu0 0
        %2064 = vmatprep.subr.bf16.mxu0 0
        %2065 = vmatpush1.bf16.msra.mxu0 0
        %2066 = vmatprep.subr.bf16.mxu0 0
        %2067 = vmatpush1.bf16.msra.mxu0 0
        %2068 = vmatprep.subr.bf16.mxu0 0
        %2069 = vmatpush1.bf16.msra.mxu0 0
        %2070 = vmatprep.subr.bf16.mxu0 0
        %2071 = vmatpush1.bf16.msra.mxu0 0
        %2072 = vmatprep.subr.bf16.mxu0 0
        %2073 = vmatpush1.bf16.msra.mxu0 0
        %2074 = vmatprep.subr.bf16.mxu0 0
        %2075 = vmatpush1.bf16.msra.mxu0 0
        %2076 = vmatprep.subr.bf16.mxu0 0
        %2077 = vmatpush1.bf16.msra.mxu0 0
        %2078 = vmatprep.subr.bf16.mxu0 0
        %2079 = vmatpush1.bf16.msra.mxu0 0
        %2080 = vmatprep.mubr.bf16.mxu0 0
        %2081 = vmatmul.mubr.bf16.gmra.mrb[0].mxu0 %v1822
        %v2082 = vpop.f32.mrb[0].mxu0
        %v2083 = vadd.f32 %v1991, %v2082
        %v2084 = vpop.f32.mrb[0].mxu0
        %v2085 = vadd.f32 %v1995, %v2084
        %v2086 = vpop.f32.mrb[0].mxu0
        %v2087 = vpop.f32.mrb[0].mxu0
        %2088 = vdwg.mxu0
        %2089 = vmatprep.subr.bf16.mxu0 %v2035
        %2090 = vmatpush1.bf16.msra.mxu0 %v2034
        %2091 = vmatprep.subr.bf16.mxu0 %v2039
        %2092 = vmatpush1.bf16.msra.mxu0 %v2038
        %2093 = vmatprep.subr.bf16.mxu0 0
        %2094 = vmatpush1.bf16.msra.mxu0 0
        %2095 = vmatprep.subr.bf16.mxu0 0
        %2096 = vmatpush1.bf16.msra.mxu0 0
        %2097 = vmatprep.subr.bf16.mxu0 0
        %2098 = vmatpush1.bf16.msra.mxu0 0
        %2099 = vmatprep.subr.bf16.mxu0 0
        %2100 = vmatpush1.bf16.msra.mxu0 0
        %2101 = vmatprep.subr.bf16.mxu0 0
        %2102 = vmatpush1.bf16.msra.mxu0 0
        %2103 = vmatprep.subr.bf16.mxu0 0
        %2104 = vmatpush1.bf16.msra.mxu0 0
        %2105 = vmatprep.subr.bf16.mxu0 0
        %2106 = vmatpush1.bf16.msra.mxu0 0
        %2107 = vmatprep.subr.bf16.mxu0 0
        %2108 = vmatpush1.bf16.msra.mxu0 0
        %2109 = vmatprep.subr.bf16.mxu0 0
        %2110 = vmatpush1.bf16.msra.mxu0 0
        %2111 = vmatprep.subr.bf16.mxu0 0
        %2112 = vmatpush1.bf16.msra.mxu0 0
        %2113 = vmatprep.subr.bf16.mxu0 0
        %2114 = vmatpush1.bf16.msra.mxu0 0
        %2115 = vmatprep.subr.bf16.mxu0 0
        %2116 = vmatpush1.bf16.msra.mxu0 0
        %2117 = vmatprep.subr.bf16.mxu0 0
        %2118 = vmatpush1.bf16.msra.mxu0 0
        %2119 = vmatprep.subr.bf16.mxu0 0
        %2120 = vmatpush1.bf16.msra.mxu0 0
        %2121 = vmatprep.mubr.bf16.mxu0 0
        %2122 = vmatmul.mubr.bf16.gmra.mrb[0].mxu0 %v1822
        %v2123 = vpop.f32.mrb[0].mxu0
        %v2124 = vadd.f32 %v1999, %v2123
        %v2125 = vpop.f32.mrb[0].mxu0
        %v2126 = vadd.f32 %v2003, %v2125
        %v2127 = vpop.f32.mrb[0].mxu0
        %v2128 = vpop.f32.mrb[0].mxu0
        %2129 = vdwg.mxu0
        %v2130 = vmax.f32 %v2083, 0.0
        %v2131 = vmax.f32 %v2085, 0.0
        %v2132 = vmax.f32 %v2124, 0.0
        %v2133 = vmax.f32 %v2126, 0.0
        %v2134 = vpack.c.bf16 %v2130, %v2130
        %v2135 = vpack.c.bf16 %v2131, %v2131
        %v2136 = vpack.c.bf16 %v2132, %v2132
        %v2137 = vpack.c.bf16 %v2133, %v2133
        %v2138 = vld [vmem:[%s910 + $0x100] sm:$0xf]
        %v2139 = vld [vmem:[%s910 + $0x104] sm:$0xf]
        %v2140 = vld [vmem:[%s910 + $0x108] sm:$0xf]
        %v2141 = vld [vmem:[%s910 + $0x10c] sm:$0xf]
        %v2142 = vld [vmem:[%s910 + $0x110] sm:$0xf]
        %v2143 = vld [vmem:[%s910 + $0x114] sm:$0xf]
        %v2144 = vld [vmem:[%s910 + $0x118] sm:$0xf]
        %v2145 = vld [vmem:[%s910 + $0x11c] sm:$0xf]
        %v2146 = vld [vmem:[%s910 + $0x120] sm:$0xf]
        %v2147 = vld [vmem:[%s910 + $0x124] sm:$0xf]
        %v2148 = vld [vmem:[%s910 + $0x128] sm:$0xf]
        %v2149 = vld [vmem:[%s910 + $0x12c] sm:$0xf]
        %v2150 = vld [vmem:[%s910 + $0x130] sm:$0xf]
        %v2151 = vld [vmem:[%s910 + $0x134] sm:$0xf]
        %v2152 = vld [vmem:[%s910 + $0x138] sm:$0xf]
        %v2153 = vld [vmem:[%s910 + $0x13c] sm:$0xf]
        %v2154 = vld [vmem:[%s910 + $0x140] sm:$0xf]
        %v2155 = vld [vmem:[%s910 + $0x144] sm:$0xf]
        %v2156 = vld [vmem:[%s910 + $0x148] sm:$0xf]
        %v2157 = vld [vmem:[%s910 + $0x14c] sm:$0xf]
        %v2158 = vld [vmem:[%s910 + $0x150] sm:$0xf]
        %v2159 = vld [vmem:[%s910 + $0x154] sm:$0xf]
        %v2160 = vld [vmem:[%s910 + $0x158] sm:$0xf]
        %v2161 = vld [vmem:[%s910 + $0x15c] sm:$0xf]
        %v2162 = vld [vmem:[%s910 + $0x160] sm:$0xf]
        %v2163 = vld [vmem:[%s910 + $0x164] sm:$0xf]
        %v2164 = vld [vmem:[%s910 + $0x168] sm:$0xf]
        %v2165 = vld [vmem:[%s910 + $0x16c] sm:$0xf]
        %v2166 = vld [vmem:[%s910 + $0x170] sm:$0xf]
        %v2167 = vld [vmem:[%s910 + $0x174] sm:$0xf]
        %v2168 = vld [vmem:[%s910 + $0x178] sm:$0xf]
        %v2169 = vld [vmem:[%s910 + $0x17c] sm:$0xf]
        %v2170 = vld [vmem:[%s910 + $0x180] sm:$0xf]
        %v2171 = vld [vmem:[%s910 + $0x184] sm:$0xf]
        %v2172 = vld [vmem:[%s910 + $0x188] sm:$0xf]
        %v2173 = vld [vmem:[%s910 + $0x18c] sm:$0xf]
        %v2174 = vld [vmem:[%s910 + $0x190] sm:$0xf]
        %v2175 = vld [vmem:[%s910 + $0x194] sm:$0xf]
        %v2176 = vld [vmem:[%s910 + $0x198] sm:$0xf]
        %v2177 = vld [vmem:[%s910 + $0x19c] sm:$0xf]
        %v2178 = vld [vmem:[%s910 + $0x1a0] sm:$0xf]
        %v2179 = vld [vmem:[%s910 + $0x1a4] sm:$0xf]
        %v2180 = vld [vmem:[%s910 + $0x1a8] sm:$0xf]
        %v2181 = vld [vmem:[%s910 + $0x1ac] sm:$0xf]
        %v2182 = vld [vmem:[%s910 + $0x1b0] sm:$0xf]
        %v2183 = vld [vmem:[%s910 + $0x1b4] sm:$0xf]
        %v2184 = vld [vmem:[%s910 + $0x1b8] sm:$0xf]
        %v2185 = vld [vmem:[%s910 + $0x1bc] sm:$0xf]
        %v2186 = vld [vmem:[%s910 + $0x1c0] sm:$0xf]
        %v2187 = vld [vmem:[%s910 + $0x1c4] sm:$0xf]
        %v2188 = vld [vmem:[%s910 + $0x1c8] sm:$0xf]
        %v2189 = vld [vmem:[%s910 + $0x1cc] sm:$0xf]
        %v2190 = vld [vmem:[%s910 + $0x1d0] sm:$0xf]
        %v2191 = vld [vmem:[%s910 + $0x1d4] sm:$0xf]
        %v2192 = vld [vmem:[%s910 + $0x1d8] sm:$0xf]
        %v2193 = vld [vmem:[%s910 + $0x1dc] sm:$0xf]
        %v2194 = vld [vmem:[%s910 + $0x1e0] sm:$0xf]
        %v2195 = vld [vmem:[%s910 + $0x1e4] sm:$0xf]
        %v2196 = vld [vmem:[%s910 + $0x1e8] sm:$0xf]
        %v2197 = vld [vmem:[%s910 + $0x1ec] sm:$0xf]
        %v2198 = vld [vmem:[%s910 + $0x1f0] sm:$0xf]
        %v2199 = vld [vmem:[%s910 + $0x1f4] sm:$0xf]
        %v2200 = vld [vmem:[%s910 + $0x1f8] sm:$0xf]
        %v2201 = vld [vmem:[%s910 + $0x1fc] sm:$0xf]
        %v2266 = vunpack.c.l.b16 %v2138
        %v2267 = vunpack.c.l.b16 %v2139
        %v2268 = vunpack.c.l.b16 %v2140
        %v2269 = vunpack.c.l.b16 %v2141
        %v2270 = vunpack.c.l.b16 %v2142
        %v2271 = vunpack.c.l.b16 %v2143
        %v2272 = vunpack.c.l.b16 %v2144
        %v2273 = vunpack.c.l.b16 %v2145
        %v2274 = vunpack.c.l.b16 %v2146
        %v2275 = vunpack.c.l.b16 %v2147
        %v2276 = vunpack.c.l.b16 %v2148
        %v2277 = vunpack.c.l.b16 %v2149
        %v2278 = vunpack.c.l.b16 %v2150
        %v2279 = vunpack.c.l.b16 %v2151
        %v2280 = vunpack.c.l.b16 %v2152
        %v2281 = vunpack.c.l.b16 %v2153
        %v2282 = vunpack.c.l.b16 %v2154
        %v2283 = vunpack.c.l.b16 %v2155
        %v2284 = vunpack.c.l.b16 %v2156
        %v2285 = vunpack.c.l.b16 %v2157
        %v2286 = vunpack.c.l.b16 %v2158
        %v2287 = vunpack.c.l.b16 %v2159
        %v2288 = vunpack.c.l.b16 %v2160
        %v2289 = vunpack.c.l.b16 %v2161
        %v2290 = vunpack.c.l.b16 %v2162
        %v2291 = vunpack.c.l.b16 %v2163
        %v2292 = vunpack.c.l.b16 %v2164
        %v2293 = vunpack.c.l.b16 %v2165
        %v2294 = vunpack.c.l.b16 %v2166
        %v2295 = vunpack.c.l.b16 %v2167
        %v2296 = vunpack.c.l.b16 %v2168
        %v2297 = vunpack.c.l.b16 %v2169
        %v2298 = vunpack.c.l.b16 %v2170
        %v2299 = vunpack.c.l.b16 %v2171
        %v2300 = vunpack.c.l.b16 %v2172
        %v2301 = vunpack.c.l.b16 %v2173
        %v2302 = vunpack.c.l.b16 %v2174
        %v2303 = vunpack.c.l.b16 %v2175
        %v2304 = vunpack.c.l.b16 %v2176
        %v2305 = vunpack.c.l.b16 %v2177
        %v2306 = vunpack.c.l.b16 %v2178
        %v2307 = vunpack.c.l.b16 %v2179
        %v2308 = vunpack.c.l.b16 %v2180
        %v2309 = vunpack.c.l.b16 %v2181
        %v2310 = vunpack.c.l.b16 %v2182
        %v2311 = vunpack.c.l.b16 %v2183
        %v2312 = vunpack.c.l.b16 %v2184
        %v2313 = vunpack.c.l.b16 %v2185
        %v2314 = vunpack.c.l.b16 %v2186
        %v2315 = vunpack.c.l.b16 %v2187
        %v2316 = vunpack.c.l.b16 %v2188
        %v2317 = vunpack.c.l.b16 %v2189
        %v2318 = vunpack.c.l.b16 %v2190
        %v2319 = vunpack.c.l.b16 %v2191
        %v2320 = vunpack.c.l.b16 %v2192
        %v2321 = vunpack.c.l.b16 %v2193
        %v2322 = vunpack.c.l.b16 %v2194
        %v2323 = vunpack.c.l.b16 %v2195
        %v2324 = vunpack.c.l.b16 %v2196
        %v2325 = vunpack.c.l.b16 %v2197
        %v2326 = vunpack.c.l.b16 %v2198
        %v2327 = vunpack.c.l.b16 %v2199
        %v2328 = vunpack.c.l.b16 %v2200
        %v2329 = vunpack.c.l.b16 %v2201
        %v2330 = vpack.c.b16 %v2267, %v2266
        %v2331 = vpack.c.b16 %v2269, %v2268
        %v2332 = vpack.c.b16 %v2271, %v2270
        %v2333 = vpack.c.b16 %v2273, %v2272
        %v2334 = vpack.c.b16 %v2275, %v2274
        %v2335 = vpack.c.b16 %v2277, %v2276
        %v2336 = vpack.c.b16 %v2279, %v2278
        %v2337 = vpack.c.b16 %v2281, %v2280
        %v2338 = vpack.c.b16 %v2283, %v2282
        %v2339 = vpack.c.b16 %v2285, %v2284
        %v2340 = vpack.c.b16 %v2287, %v2286
        %v2341 = vpack.c.b16 %v2289, %v2288
        %v2342 = vpack.c.b16 %v2291, %v2290
        %v2343 = vpack.c.b16 %v2293, %v2292
        %v2344 = vpack.c.b16 %v2295, %v2294
        %v2345 = vpack.c.b16 %v2297, %v2296
        %v2346 = vpack.c.b16 %v2299, %v2298
        %v2347 = vpack.c.b16 %v2301, %v2300
        %v2348 = vpack.c.b16 %v2303, %v2302
        %v2349 = vpack.c.b16 %v2305, %v2304
        %v2350 = vpack.c.b16 %v2307, %v2306
        %v2351 = vpack.c.b16 %v2309, %v2308
        %v2352 = vpack.c.b16 %v2311, %v2310
        %v2353 = vpack.c.b16 %v2313, %v2312
        %v2354 = vpack.c.b16 %v2315, %v2314
        %v2355 = vpack.c.b16 %v2317, %v2316
        %v2356 = vpack.c.b16 %v2319, %v2318
        %v2357 = vpack.c.b16 %v2321, %v2320
        %v2358 = vpack.c.b16 %v2323, %v2322
        %v2359 = vpack.c.b16 %v2325, %v2324
        %v2360 = vpack.c.b16 %v2327, %v2326
        %v2361 = vpack.c.b16 %v2329, %v2328
        %2394 = vmatprep.subr.bf16.mxu0 0
        %2395 = vmatpush1.bf16.msra.mxu0 %v2330
        %2396 = vmatprep.subr.bf16.mxu0 0
        %2397 = vmatpush1.bf16.msra.mxu0 %v2331
        %2398 = vmatprep.subr.bf16.mxu0 0
        %2399 = vmatpush1.bf16.msra.mxu0 %v2332
        %2400 = vmatprep.subr.bf16.mxu0 0
        %2401 = vmatpush1.bf16.msra.mxu0 %v2333
        %2402 = vmatprep.subr.bf16.mxu0 0
        %2403 = vmatpush1.bf16.msra.mxu0 %v2334
        %2404 = vmatprep.subr.bf16.mxu0 0
        %2405 = vmatpush1.bf16.msra.mxu0 %v2335
        %2406 = vmatprep.subr.bf16.mxu0 0
        %2407 = vmatpush1.bf16.msra.mxu0 %v2336
        %2408 = vmatprep.subr.bf16.mxu0 0
        %2409 = vmatpush1.bf16.msra.mxu0 %v2337
        %2410 = vmatprep.subr.bf16.mxu0 0
        %2411 = vmatpush1.bf16.msra.mxu0 %v2338
        %2412 = vmatprep.subr.bf16.mxu0 0
        %2413 = vmatpush1.bf16.msra.mxu0 %v2339
        %2414 = vmatprep.subr.bf16.mxu0 0
        %2415 = vmatpush1.bf16.msra.mxu0 %v2340
        %2416 = vmatprep.subr.bf16.mxu0 0
        %2417 = vmatpush1.bf16.msra.mxu0 %v2341
        %2418 = vmatprep.subr.bf16.mxu0 0
        %2419 = vmatpush1.bf16.msra.mxu0 %v2342
        %2420 = vmatprep.subr.bf16.mxu0 0
        %2421 = vmatpush1.bf16.msra.mxu0 %v2343
        %2422 = vmatprep.subr.bf16.mxu0 0
        %2423 = vmatpush1.bf16.msra.mxu0 %v2344
        %2424 = vmatprep.subr.bf16.mxu0 0
        %2425 = vmatpush1.bf16.msra.mxu0 %v2345
        %2426 = vmatprep.mubr.bf16.mxu0 %v2135
        %2427 = vmatmul.mubr.bf16.gmra.mrb[0].mxu0 %v2134
        %v2428 = vpop.f32.mrb[0].mxu0
        %v2429 = vadd.f32 0.0, %v2428
        %v2430 = vpop.f32.mrb[0].mxu0
        %v2431 = vpop.f32.mrb[0].mxu0
        %v2432 = vpop.f32.mrb[0].mxu0
        %2433 = vdwg.mxu0
        %2434 = vmatprep.subr.bf16.mxu0 0
        %2435 = vmatpush1.bf16.msra.mxu0 %v2346
        %2436 = vmatprep.subr.bf16.mxu0 0
        %2437 = vmatpush1.bf16.msra.mxu0 %v2347
        %2438 = vmatprep.subr.bf16.mxu0 0
        %2439 = vmatpush1.bf16.msra.mxu0 %v2348
        %2440 = vmatprep.subr.bf16.mxu0 0
        %2441 = vmatpush1.bf16.msra.mxu0 %v2349
        %2442 = vmatprep.subr.bf16.mxu0 0
        %2443 = vmatpush1.bf16.msra.mxu0 %v2350
        %2444 = vmatprep.subr.bf16.mxu0 0
        %2445 = vmatpush1.bf16.msra.mxu0 %v2351
        %2446 = vmatprep.subr.bf16.mxu0 0
        %2447 = vmatpush1.bf16.msra.mxu0 %v2352
        %2448 = vmatprep.subr.bf16.mxu0 0
        %2449 = vmatpush1.bf16.msra.mxu0 %v2353
        %2450 = vmatprep.subr.bf16.mxu0 0
        %2451 = vmatpush1.bf16.msra.mxu0 %v2354
        %2452 = vmatprep.subr.bf16.mxu0 0
        %2453 = vmatpush1.bf16.msra.mxu0 %v2355
        %2454 = vmatprep.subr.bf16.mxu0 0
        %2455 = vmatpush1.bf16.msra.mxu0 %v2356
        %2456 = vmatprep.subr.bf16.mxu0 0
        %2457 = vmatpush1.bf16.msra.mxu0 %v2357
        %2458 = vmatprep.subr.bf16.mxu0 0
        %2459 = vmatpush1.bf16.msra.mxu0 %v2358
        %2460 = vmatprep.subr.bf16.mxu0 0
        %2461 = vmatpush1.bf16.msra.mxu0 %v2359
        %2462 = vmatprep.subr.bf16.mxu0 0
        %2463 = vmatpush1.bf16.msra.mxu0 %v2360
        %2464 = vmatprep.subr.bf16.mxu0 0
        %2465 = vmatpush1.bf16.msra.mxu0 %v2361
        %2466 = vmatprep.mubr.bf16.mxu0 %v2137
        %2467 = vmatmul.mubr.bf16.gmra.mrb[0].mxu0 %v2136
        %v2468 = vpop.f32.mrb[0].mxu0
        %v2469 = vadd.f32 %v2429, %v2468
        %v2470 = vpop.f32.mrb[0].mxu0
        %v2471 = vpop.f32.mrb[0].mxu0
        %v2472 = vpop.f32.mrb[0].mxu0
        %2473 = vdwg.mxu0
        %v2538 = vunpack.c.l.b16 %v1914
        %v2539 = vunpack.c.l.b16 %v1915
        %v2540 = vunpack.c.l.b16 %v1916
        %v2541 = vunpack.c.l.b16 %v1917
        %v2542 = vunpack.c.l.b16 %v1918
        %v2543 = vunpack.c.l.b16 %v1919
        %v2544 = vunpack.c.l.b16 %v1920
        %v2545 = vunpack.c.l.b16 %v1921
        %v2546 = vunpack.c.l.b16 %v1922
        %v2547 = vunpack.c.l.b16 %v1923
        %v2548 = vunpack.c.l.b16 %v1924
        %v2549 = vunpack.c.l.b16 %v1925
        %v2550 = vunpack.c.l.b16 %v1926
        %v2551 = vunpack.c.l.b16 %v1927
        %v2552 = vunpack.c.l.b16 %v1928
        %v2553 = vunpack.c.l.b16 %v1929
        %v2554 = vunpack.c.l.b16 %v1930
        %v2555 = vunpack.c.l.b16 %v1931
        %v2556 = vunpack.c.l.b16 %v1932
        %v2557 = vunpack.c.l.b16 %v1933
        %v2558 = vunpack.c.l.b16 %v1934
        %v2559 = vunpack.c.l.b16 %v1935
        %v2560 = vunpack.c.l.b16 %v1936
        %v2561 = vunpack.c.l.b16 %v1937
        %v2562 = vunpack.c.l.b16 %v1938
        %v2563 = vunpack.c.l.b16 %v1939
        %v2564 = vunpack.c.l.b16 %v1940
        %v2565 = vunpack.c.l.b16 %v1941
        %v2566 = vunpack.c.l.b16 %v1942
        %v2567 = vunpack.c.l.b16 %v1943
        %v2568 = vunpack.c.l.b16 %v1944
        %v2569 = vunpack.c.l.b16 %v1945
        %v2570 = vunpack.c.l.b16 %v1946
        %v2571 = vunpack.c.l.b16 %v1947
        %v2572 = vunpack.c.l.b16 %v1948
        %v2573 = vunpack.c.l.b16 %v1949
        %v2574 = vunpack.c.l.b16 %v1950
        %v2575 = vunpack.c.l.b16 %v1951
        %v2576 = vunpack.c.l.b16 %v1952
        %v2577 = vunpack.c.l.b16 %v1953
        %v2578 = vunpack.c.l.b16 %v1954
        %v2579 = vunpack.c.l.b16 %v1955
        %v2580 = vunpack.c.l.b16 %v1956
        %v2581 = vunpack.c.l.b16 %v1957
        %v2582 = vunpack.c.l.b16 %v1958
        %v2583 = vunpack.c.l.b16 %v1959
        %v2584 = vunpack.c.l.b16 %v1960
        %v2585 = vunpack.c.l.b16 %v1961
        %v2586 = vunpack.c.l.b16 %v1962
        %v2587 = vunpack.c.l.b16 %v1963
        %v2588 = vunpack.c.l.b16 %v1964
        %v2589 = vunpack.c.l.b16 %v1965
        %v2590 = vunpack.c.l.b16 %v1966
        %v2591 = vunpack.c.l.b16 %v1967
        %v2592 = vunpack.c.l.b16 %v1968
        %v2593 = vunpack.c.l.b16 %v1969
        %v2594 = vunpack.c.l.b16 %v1970
        %v2595 = vunpack.c.l.b16 %v1971
        %v2596 = vunpack.c.l.b16 %v1972
        %v2597 = vunpack.c.l.b16 %v1973
        %v2598 = vunpack.c.l.b16 %v1974
        %v2599 = vunpack.c.l.b16 %v1975
        %v2600 = vunpack.c.l.b16 %v1976
        %v2601 = vunpack.c.l.b16 %v1977
        %v2602 = vpack.c.b16 %v2539, %v2538
        %v2603 = vpack.c.b16 %v2541, %v2540
        %v2604 = vpack.c.b16 %v2543, %v2542
        %v2605 = vpack.c.b16 %v2545, %v2544
        %v2606 = vpack.c.b16 %v2547, %v2546
        %v2607 = vpack.c.b16 %v2549, %v2548
        %v2608 = vpack.c.b16 %v2551, %v2550
        %v2609 = vpack.c.b16 %v2553, %v2552
        %v2610 = vpack.c.b16 %v2555, %v2554
        %v2611 = vpack.c.b16 %v2557, %v2556
        %v2612 = vpack.c.b16 %v2559, %v2558
        %v2613 = vpack.c.b16 %v2561, %v2560
        %v2614 = vpack.c.b16 %v2563, %v2562
        %v2615 = vpack.c.b16 %v2565, %v2564
        %v2616 = vpack.c.b16 %v2567, %v2566
        %v2617 = vpack.c.b16 %v2569, %v2568
        %v2618 = vpack.c.b16 %v2571, %v2570
        %v2619 = vpack.c.b16 %v2573, %v2572
        %v2620 = vpack.c.b16 %v2575, %v2574
        %v2621 = vpack.c.b16 %v2577, %v2576
        %v2622 = vpack.c.b16 %v2579, %v2578
        %v2623 = vpack.c.b16 %v2581, %v2580
        %v2624 = vpack.c.b16 %v2583, %v2582
        %v2625 = vpack.c.b16 %v2585, %v2584
        %v2626 = vpack.c.b16 %v2587, %v2586
        %v2627 = vpack.c.b16 %v2589, %v2588
        %v2628 = vpack.c.b16 %v2591, %v2590
        %v2629 = vpack.c.b16 %v2593, %v2592
        %v2630 = vpack.c.b16 %v2595, %v2594
        %v2631 = vpack.c.b16 %v2597, %v2596
        %v2632 = vpack.c.b16 %v2599, %v2598
        %v2633 = vpack.c.b16 %v2601, %v2600
        %2666 = vmatprep.subr.bf16.mxu0 0
        %2667 = vmatpush1.bf16.msra.mxu0 %v2602
        %2668 = vmatprep.subr.bf16.mxu0 0
        %2669 = vmatpush1.bf16.msra.mxu0 %v2603
        %2670 = vmatprep.subr.bf16.mxu0 0
        %2671 = vmatpush1.bf16.msra.mxu0 %v2604
        %2672 = vmatprep.subr.bf16.mxu0 0
        %2673 = vmatpush1.bf16.msra.mxu0 %v2605
        %2674 = vmatprep.subr.bf16.mxu0 0
        %2675 = vmatpush1.bf16.msra.mxu0 %v2606
        %2676 = vmatprep.subr.bf16.mxu0 0
        %2677 = vmatpush1.bf16.msra.mxu0 %v2607
        %2678 = vmatprep.subr.bf16.mxu0 0
        %2679 = vmatpush1.bf16.msra.mxu0 %v2608
        %2680 = vmatprep.subr.bf16.mxu0 0
        %2681 = vmatpush1.bf16.msra.mxu0 %v2609
        %2682 = vmatprep.subr.bf16.mxu0 0
        %2683 = vmatpush1.bf16.msra.mxu0 %v2610
        %2684 = vmatprep.subr.bf16.mxu0 0
        %2685 = vmatpush1.bf16.msra.mxu0 %v2611
        %2686 = vmatprep.subr.bf16.mxu0 0
        %2687 = vmatpush1.bf16.msra.mxu0 %v2612
        %2688 = vmatprep.subr.bf16.mxu0 0
        %2689 = vmatpush1.bf16.msra.mxu0 %v2613
        %2690 = vmatprep.subr.bf16.mxu0 0
        %2691 = vmatpush1.bf16.msra.mxu0 %v2614
        %2692 = vmatprep.subr.bf16.mxu0 0
        %2693 = vmatpush1.bf16.msra.mxu0 %v2615
        %2694 = vmatprep.subr.bf16.mxu0 0
        %2695 = vmatpush1.bf16.msra.mxu0 %v2616
        %2696 = vmatprep.subr.bf16.mxu0 0
        %2697 = vmatpush1.bf16.msra.mxu0 %v2617
        %2698 = vmatprep.mubr.bf16.mxu0 %v1911
        %2699 = vmatmul.mubr.bf16.gmra.mrb[0].mxu0 %v1910
        %v2700 = vpop.f32.mrb[0].mxu0
        %v2701 = vadd.f32 %v2469, %v2700
        %v2702 = vpop.f32.mrb[0].mxu0
        %v2703 = vpop.f32.mrb[0].mxu0
        %v2704 = vpop.f32.mrb[0].mxu0
        %2705 = vdwg.mxu0
        %2706 = vmatprep.subr.bf16.mxu0 0
        %2707 = vmatpush1.bf16.msra.mxu0 %v2618
        %2708 = vmatprep.subr.bf16.mxu0 0
        %2709 = vmatpush1.bf16.msra.mxu0 %v2619
        %2710 = vmatprep.subr.bf16.mxu0 0
        %2711 = vmatpush1.bf16.msra.mxu0 %v2620
        %2712 = vmatprep.subr.bf16.mxu0 0
        %2713 = vmatpush1.bf16.msra.mxu0 %v2621
        %2714 = vmatprep.subr.bf16.mxu0 0
        %2715 = vmatpush1.bf16.msra.mxu0 %v2622
        %2716 = vmatprep.subr.bf16.mxu0 0
        %2717 = vmatpush1.bf16.msra.mxu0 %v2623
        %2718 = vmatprep.subr.bf16.mxu0 0
        %2719 = vmatpush1.bf16.msra.mxu0 %v2624
        %2720 = vmatprep.subr.bf16.mxu0 0
        %2721 = vmatpush1.bf16.msra.mxu0 %v2625
        %2722 = vmatprep.subr.bf16.mxu0 0
        %2723 = vmatpush1.bf16.msra.mxu0 %v2626
        %2724 = vmatprep.subr.bf16.mxu0 0
        %2725 = vmatpush1.bf16.msra.mxu0 %v2627
        %2726 = vmatprep.subr.bf16.mxu0 0
        %2727 = vmatpush1.bf16.msra.mxu0 %v2628
        %2728 = vmatprep.subr.bf16.mxu0 0
        %2729 = vmatpush1.bf16.msra.mxu0 %v2629
        %2730 = vmatprep.subr.bf16.mxu0 0
        %2731 = vmatpush1.bf16.msra.mxu0 %v2630
        %2732 = vmatprep.subr.bf16.mxu0 0
        %2733 = vmatpush1.bf16.msra.mxu0 %v2631
        %2734 = vmatprep.subr.bf16.mxu0 0
        %2735 = vmatpush1.bf16.msra.mxu0 %v2632
        %2736 = vmatprep.subr.bf16.mxu0 0
        %2737 = vmatpush1.bf16.msra.mxu0 %v2633
        %2738 = vmatprep.mubr.bf16.mxu0 %v1913
        %2739 = vmatmul.mubr.bf16.gmra.mrb[0].mxu0 %v1912
        %v2740 = vpop.f32.mrb[0].mxu0
        %v2741 = vadd.f32 %v2701, %v2740
        %v2742 = vpop.f32.mrb[0].mxu0
        %v2743 = vpop.f32.mrb[0].mxu0
        %v2744 = vpop.f32.mrb[0].mxu0
        %2745 = vdwg.mxu0
        %v2746 = vld [vmem:[%s892 + $0x20] sm:$0xff]
        %v2747 = vld [vmem:[%s892 + $0x28] sm:$0xff]
        %v2748 = vld [vmem:[%s892 + $0x60] sm:$0xff]
        %v2749 = vld [vmem:[%s892 + $0x68] sm:$0xff]
        %v2750 = vld [vmem:[%s892 + $0xa0] sm:$0xff]
        %v2751 = vld [vmem:[%s892 + $0xa8] sm:$0xff]
        %v2752 = vld [vmem:[%s892 + $0xe0] sm:$0xff]
        %v2753 = vld [vmem:[%s892 + $0xe8] sm:$0xff]
        %v2754 = vld [vmem:[%s901 + $0x8] sm:$0xf]
        %v2756 = vlaneseq
        %v2757 = vshrl.u32 %v2756, 7
        %v2758 = vsub.s32 0, %v2757
        %v2759 = vrot.slane %v2754, %v2758
        %v2760 = vlaneseq
        %v2761 = vshrl.u32 %v2760, 7
        %v2762 = vsub.s32 1, %v2761
        %v2763 = vrot.slane %v2754, %v2762
        %v2764 = vlaneseq
        %v2765 = vshrl.u32 %v2764, 7
        %v2766 = vsub.s32 2, %v2765
        %v2767 = vrot.slane %v2754, %v2766
        %v2768 = vlaneseq
        %v2769 = vshrl.u32 %v2768, 7
        %v2770 = vsub.s32 3, %v2769
        %v2771 = vrot.slane %v2754, %v2770
        %v2784 = vunpack.c.l.b16 %v2746
        %v2785 = vunpack.c.h.b16 %v2746
        %v2786 = vunpack.c.l.b16 %v2747
        %v2787 = vunpack.c.h.b16 %v2747
        %v2788 = vunpack.c.l.b16 %v2748
        %v2789 = vunpack.c.h.b16 %v2748
        %v2790 = vunpack.c.l.b16 %v2749
        %v2791 = vunpack.c.h.b16 %v2749
        %v2792 = vunpack.c.l.b16 %v2750
        %v2793 = vunpack.c.h.b16 %v2750
        %v2794 = vunpack.c.l.b16 %v2751
        %v2795 = vunpack.c.h.b16 %v2751
        %v2796 = vunpack.c.l.b16 %v2752
        %v2797 = vunpack.c.h.b16 %v2752
        %v2798 = vunpack.c.l.b16 %v2753
        %v2799 = vunpack.c.h.b16 %v2753
        %v2800 = vpack.c.b16 %v2788, %v2784
        %v2801 = vpack.c.b16 %v2789, %v2785
        %v2802 = vpack.c.b16 %v2790, %v2786
        %v2803 = vpack.c.b16 %v2791, %v2787
        %v2804 = vpack.c.b16 %v2796, %v2792
        %v2805 = vpack.c.b16 %v2797, %v2793
        %v2806 = vpack.c.b16 %v2798, %v2794
        %v2807 = vpack.c.b16 %v2799, %v2795
        %2816 = vmatprep.subr.bf16.mxu0 %v2801
        %2817 = vmatpush1.bf16.msra.mxu0 %v2800
        %2818 = vmatprep.subr.bf16.mxu0 %v2805
        %2819 = vmatpush1.bf16.msra.mxu0 %v2804
        %2820 = vmatprep.subr.bf16.mxu0 0
        %2821 = vmatpush1.bf16.msra.mxu0 0
        %2822 = vmatprep.subr.bf16.mxu0 0
        %2823 = vmatpush1.bf16.msra.mxu0 0
        %2824 = vmatprep.subr.bf16.mxu0 0
        %2825 = vmatpush1.bf16.msra.mxu0 0
        %2826 = vmatprep.subr.bf16.mxu0 0
        %2827 = vmatpush1.bf16.msra.mxu0 0
        %2828 = vmatprep.subr.bf16.mxu0 0
        %2829 = vmatpush1.bf16.msra.mxu0 0
        %2830 = vmatprep.subr.bf16.mxu0 0
        %2831 = vmatpush1.bf16.msra.mxu0 0
        %2832 = vmatprep.subr.bf16.mxu0 0
        %2833 = vmatpush1.bf16.msra.mxu0 0
        %2834 = vmatprep.subr.bf16.mxu0 0
        %2835 = vmatpush1.bf16.msra.mxu0 0
        %2836 = vmatprep.subr.bf16.mxu0 0
        %2837 = vmatpush1.bf16.msra.mxu0 0
        %2838 = vmatprep.subr.bf16.mxu0 0
        %2839 = vmatpush1.bf16.msra.mxu0 0
        %2840 = vmatprep.subr.bf16.mxu0 0
        %2841 = vmatpush1.bf16.msra.mxu0 0
        %2842 = vmatprep.subr.bf16.mxu0 0
        %2843 = vmatpush1.bf16.msra.mxu0 0
        %2844 = vmatprep.subr.bf16.mxu0 0
        %2845 = vmatpush1.bf16.msra.mxu0 0
        %2846 = vmatprep.subr.bf16.mxu0 0
        %2847 = vmatpush1.bf16.msra.mxu0 0
        %2848 = vmatprep.mubr.bf16.mxu0 0
        %2849 = vmatmul.mubr.bf16.gmra.mrb[0].mxu0 %v1822
        %v2850 = vpop.f32.mrb[0].mxu0
        %v2851 = vadd.f32 %v2759, %v2850
        %v2852 = vpop.f32.mrb[0].mxu0
        %v2853 = vadd.f32 %v2763, %v2852
        %v2854 = vpop.f32.mrb[0].mxu0
        %v2855 = vpop.f32.mrb[0].mxu0
        %2856 = vdwg.mxu0
        %2857 = vmatprep.subr.bf16.mxu0 %v2803
        %2858 = vmatpush1.bf16.msra.mxu0 %v2802
        %2859 = vmatprep.subr.bf16.mxu0 %v2807
        %2860 = vmatpush1.bf16.msra.mxu0 %v2806
        %2861 = vmatprep.subr.bf16.mxu0 0
        %2862 = vmatpush1.bf16.msra.mxu0 0
        %2863 = vmatprep.subr.bf16.mxu0 0
        %2864 = vmatpush1.bf16.msra.mxu0 0
        %2865 = vmatprep.subr.bf16.mxu0 0
        %2866 = vmatpush1.bf16.msra.mxu0 0
        %2867 = vmatprep.subr.bf16.mxu0 0
        %2868 = vmatpush1.bf16.msra.mxu0 0
        %2869 = vmatprep.subr.bf16.mxu0 0
        %2870 = vmatpush1.bf16.msra.mxu0 0
        %2871 = vmatprep.subr.bf16.mxu0 0
        %2872 = vmatpush1.bf16.msra.mxu0 0
        %2873 = vmatprep.subr.bf16.mxu0 0
        %2874 = vmatpush1.bf16.msra.mxu0 0
        %2875 = vmatprep.subr.bf16.mxu0 0
        %2876 = vmatpush1.bf16.msra.mxu0 0
        %2877 = vmatprep.subr.bf16.mxu0 0
        %2878 = vmatpush1.bf16.msra.mxu0 0
        %2879 = vmatprep.subr.bf16.mxu0 0
        %2880 = vmatpush1.bf16.msra.mxu0 0
        %2881 = vmatprep.subr.bf16.mxu0 0
        %2882 = vmatpush1.bf16.msra.mxu0 0
        %2883 = vmatprep.subr.bf16.mxu0 0
        %2884 = vmatpush1.bf16.msra.mxu0 0
        %2885 = vmatprep.subr.bf16.mxu0 0
        %2886 = vmatpush1.bf16.msra.mxu0 0
        %2887 = vmatprep.subr.bf16.mxu0 0
        %2888 = vmatpush1.bf16.msra.mxu0 0
        %2889 = vmatprep.mubr.bf16.mxu0 0
        %2890 = vmatmul.mubr.bf16.gmra.mrb[0].mxu0 %v1822
        %v2891 = vpop.f32.mrb[0].mxu0
        %v2892 = vadd.f32 %v2767, %v2891
        %v2893 = vpop.f32.mrb[0].mxu0
        %v2894 = vadd.f32 %v2771, %v2893
        %v2895 = vpop.f32.mrb[0].mxu0
        %v2896 = vpop.f32.mrb[0].mxu0
        %2897 = vdwg.mxu0
        %v2898 = vmax.f32 %v2851, 0.0
        %v2899 = vmax.f32 %v2853, 0.0
        %v2900 = vmax.f32 %v2892, 0.0
        %v2901 = vmax.f32 %v2894, 0.0
        %v2902 = vpack.c.bf16 %v2898, %v2898
        %v2903 = vpack.c.bf16 %v2899, %v2899
        %v2904 = vpack.c.bf16 %v2900, %v2900
        %v2905 = vpack.c.bf16 %v2901, %v2901
        %v2906 = vld [vmem:[%s910 + $0x200] sm:$0xf]
        %v2907 = vld [vmem:[%s910 + $0x204] sm:$0xf]
        %v2908 = vld [vmem:[%s910 + $0x208] sm:$0xf]
        %v2909 = vld [vmem:[%s910 + $0x20c] sm:$0xf]
        %v2910 = vld [vmem:[%s910 + $0x210] sm:$0xf]
        %v2911 = vld [vmem:[%s910 + $0x214] sm:$0xf]
        %v2912 = vld [vmem:[%s910 + $0x218] sm:$0xf]
        %v2913 = vld [vmem:[%s910 + $0x21c] sm:$0xf]
        %v2914 = vld [vmem:[%s910 + $0x220] sm:$0xf]
        %v2915 = vld [vmem:[%s910 + $0x224] sm:$0xf]
        %v2916 = vld [vmem:[%s910 + $0x228] sm:$0xf]
        %v2917 = vld [vmem:[%s910 + $0x22c] sm:$0xf]
        %v2918 = vld [vmem:[%s910 + $0x230] sm:$0xf]
        %v2919 = vld [vmem:[%s910 + $0x234] sm:$0xf]
        %v2920 = vld [vmem:[%s910 + $0x238] sm:$0xf]
        %v2921 = vld [vmem:[%s910 + $0x23c] sm:$0xf]
        %v2922 = vld [vmem:[%s910 + $0x240] sm:$0xf]
        %v2923 = vld [vmem:[%s910 + $0x244] sm:$0xf]
        %v2924 = vld [vmem:[%s910 + $0x248] sm:$0xf]
        %v2925 = vld [vmem:[%s910 + $0x24c] sm:$0xf]
        %v2926 = vld [vmem:[%s910 + $0x250] sm:$0xf]
        %v2927 = vld [vmem:[%s910 + $0x254] sm:$0xf]
        %v2928 = vld [vmem:[%s910 + $0x258] sm:$0xf]
        %v2929 = vld [vmem:[%s910 + $0x25c] sm:$0xf]
        %v2930 = vld [vmem:[%s910 + $0x260] sm:$0xf]
        %v2931 = vld [vmem:[%s910 + $0x264] sm:$0xf]
        %v2932 = vld [vmem:[%s910 + $0x268] sm:$0xf]
        %v2933 = vld [vmem:[%s910 + $0x26c] sm:$0xf]
        %v2934 = vld [vmem:[%s910 + $0x270] sm:$0xf]
        %v2935 = vld [vmem:[%s910 + $0x274] sm:$0xf]
        %v2936 = vld [vmem:[%s910 + $0x278] sm:$0xf]
        %v2937 = vld [vmem:[%s910 + $0x27c] sm:$0xf]
        %v2938 = vld [vmem:[%s910 + $0x280] sm:$0xf]
        %v2939 = vld [vmem:[%s910 + $0x284] sm:$0xf]
        %v2940 = vld [vmem:[%s910 + $0x288] sm:$0xf]
        %v2941 = vld [vmem:[%s910 + $0x28c] sm:$0xf]
        %v2942 = vld [vmem:[%s910 + $0x290] sm:$0xf]
        %v2943 = vld [vmem:[%s910 + $0x294] sm:$0xf]
        %v2944 = vld [vmem:[%s910 + $0x298] sm:$0xf]
        %v2945 = vld [vmem:[%s910 + $0x29c] sm:$0xf]
        %v2946 = vld [vmem:[%s910 + $0x2a0] sm:$0xf]
        %v2947 = vld [vmem:[%s910 + $0x2a4] sm:$0xf]
        %v2948 = vld [vmem:[%s910 + $0x2a8] sm:$0xf]
        %v2949 = vld [vmem:[%s910 + $0x2ac] sm:$0xf]
        %v2950 = vld [vmem:[%s910 + $0x2b0] sm:$0xf]
        %v2951 = vld [vmem:[%s910 + $0x2b4] sm:$0xf]
        %v2952 = vld [vmem:[%s910 + $0x2b8] sm:$0xf]
        %v2953 = vld [vmem:[%s910 + $0x2bc] sm:$0xf]
        %v2954 = vld [vmem:[%s910 + $0x2c0] sm:$0xf]
        %v2955 = vld [vmem:[%s910 + $0x2c4] sm:$0xf]
        %v2956 = vld [vmem:[%s910 + $0x2c8] sm:$0xf]
        %v2957 = vld [vmem:[%s910 + $0x2cc] sm:$0xf]
        %v2958 = vld [vmem:[%s910 + $0x2d0] sm:$0xf]
        %v2959 = vld [vmem:[%s910 + $0x2d4] sm:$0xf]
        %v2960 = vld [vmem:[%s910 + $0x2d8] sm:$0xf]
        %v2961 = vld [vmem:[%s910 + $0x2dc] sm:$0xf]
        %v2962 = vld [vmem:[%s910 + $0x2e0] sm:$0xf]
        %v2963 = vld [vmem:[%s910 + $0x2e4] sm:$0xf]
        %v2964 = vld [vmem:[%s910 + $0x2e8] sm:$0xf]
        %v2965 = vld [vmem:[%s910 + $0x2ec] sm:$0xf]
        %v2966 = vld [vmem:[%s910 + $0x2f0] sm:$0xf]
        %v2967 = vld [vmem:[%s910 + $0x2f4] sm:$0xf]
        %v2968 = vld [vmem:[%s910 + $0x2f8] sm:$0xf]
        %v2969 = vld [vmem:[%s910 + $0x2fc] sm:$0xf]
        %v3034 = vunpack.c.l.b16 %v2906
        %v3035 = vunpack.c.l.b16 %v2907
        %v3036 = vunpack.c.l.b16 %v2908
        %v3037 = vunpack.c.l.b16 %v2909
        %v3038 = vunpack.c.l.b16 %v2910
        %v3039 = vunpack.c.l.b16 %v2911
        %v3040 = vunpack.c.l.b16 %v2912
        %v3041 = vunpack.c.l.b16 %v2913
        %v3042 = vunpack.c.l.b16 %v2914
        %v3043 = vunpack.c.l.b16 %v2915
        %v3044 = vunpack.c.l.b16 %v2916
        %v3045 = vunpack.c.l.b16 %v2917
        %v3046 = vunpack.c.l.b16 %v2918
        %v3047 = vunpack.c.l.b16 %v2919
        %v3048 = vunpack.c.l.b16 %v2920
        %v3049 = vunpack.c.l.b16 %v2921
        %v3050 = vunpack.c.l.b16 %v2922
        %v3051 = vunpack.c.l.b16 %v2923
        %v3052 = vunpack.c.l.b16 %v2924
        %v3053 = vunpack.c.l.b16 %v2925
        %v3054 = vunpack.c.l.b16 %v2926
        %v3055 = vunpack.c.l.b16 %v2927
        %v3056 = vunpack.c.l.b16 %v2928
        %v3057 = vunpack.c.l.b16 %v2929
        %v3058 = vunpack.c.l.b16 %v2930
        %v3059 = vunpack.c.l.b16 %v2931
        %v3060 = vunpack.c.l.b16 %v2932
        %v3061 = vunpack.c.l.b16 %v2933
        %v3062 = vunpack.c.l.b16 %v2934
        %v3063 = vunpack.c.l.b16 %v2935
        %v3064 = vunpack.c.l.b16 %v2936
        %v3065 = vunpack.c.l.b16 %v2937
        %v3066 = vunpack.c.l.b16 %v2938
        %v3067 = vunpack.c.l.b16 %v2939
        %v3068 = vunpack.c.l.b16 %v2940
        %v3069 = vunpack.c.l.b16 %v2941
        %v3070 = vunpack.c.l.b16 %v2942
        %v3071 = vunpack.c.l.b16 %v2943
        %v3072 = vunpack.c.l.b16 %v2944
        %v3073 = vunpack.c.l.b16 %v2945
        %v3074 = vunpack.c.l.b16 %v2946
        %v3075 = vunpack.c.l.b16 %v2947
        %v3076 = vunpack.c.l.b16 %v2948
        %v3077 = vunpack.c.l.b16 %v2949
        %v3078 = vunpack.c.l.b16 %v2950
        %v3079 = vunpack.c.l.b16 %v2951
        %v3080 = vunpack.c.l.b16 %v2952
        %v3081 = vunpack.c.l.b16 %v2953
        %v3082 = vunpack.c.l.b16 %v2954
        %v3083 = vunpack.c.l.b16 %v2955
        %v3084 = vunpack.c.l.b16 %v2956
        %v3085 = vunpack.c.l.b16 %v2957
        %v3086 = vunpack.c.l.b16 %v2958
        %v3087 = vunpack.c.l.b16 %v2959
        %v3088 = vunpack.c.l.b16 %v2960
        %v3089 = vunpack.c.l.b16 %v2961
        %v3090 = vunpack.c.l.b16 %v2962
        %v3091 = vunpack.c.l.b16 %v2963
        %v3092 = vunpack.c.l.b16 %v2964
        %v3093 = vunpack.c.l.b16 %v2965
        %v3094 = vunpack.c.l.b16 %v2966
        %v3095 = vunpack.c.l.b16 %v2967
        %v3096 = vunpack.c.l.b16 %v2968
        %v3097 = vunpack.c.l.b16 %v2969
        %v3098 = vpack.c.b16 %v3035, %v3034
        %v3099 = vpack.c.b16 %v3037, %v3036
        %v3100 = vpack.c.b16 %v3039, %v3038
        %v3101 = vpack.c.b16 %v3041, %v3040
        %v3102 = vpack.c.b16 %v3043, %v3042
        %v3103 = vpack.c.b16 %v3045, %v3044
        %v3104 = vpack.c.b16 %v3047, %v3046
        %v3105 = vpack.c.b16 %v3049, %v3048
        %v3106 = vpack.c.b16 %v3051, %v3050
        %v3107 = vpack.c.b16 %v3053, %v3052
        %v3108 = vpack.c.b16 %v3055, %v3054
        %v3109 = vpack.c.b16 %v3057, %v3056
        %v3110 = vpack.c.b16 %v3059, %v3058
        %v3111 = vpack.c.b16 %v3061, %v3060
        %v3112 = vpack.c.b16 %v3063, %v3062
        %v3113 = vpack.c.b16 %v3065, %v3064
        %v3114 = vpack.c.b16 %v3067, %v3066
        %v3115 = vpack.c.b16 %v3069, %v3068
        %v3116 = vpack.c.b16 %v3071, %v3070
        %v3117 = vpack.c.b16 %v3073, %v3072
        %v3118 = vpack.c.b16 %v3075, %v3074
        %v3119 = vpack.c.b16 %v3077, %v3076
        %v3120 = vpack.c.b16 %v3079, %v3078
        %v3121 = vpack.c.b16 %v3081, %v3080
        %v3122 = vpack.c.b16 %v3083, %v3082
        %v3123 = vpack.c.b16 %v3085, %v3084
        %v3124 = vpack.c.b16 %v3087, %v3086
        %v3125 = vpack.c.b16 %v3089, %v3088
        %v3126 = vpack.c.b16 %v3091, %v3090
        %v3127 = vpack.c.b16 %v3093, %v3092
        %v3128 = vpack.c.b16 %v3095, %v3094
        %v3129 = vpack.c.b16 %v3097, %v3096
        %3162 = vmatprep.subr.bf16.mxu0 0
        %3163 = vmatpush1.bf16.msra.mxu0 %v3098
        %3164 = vmatprep.subr.bf16.mxu0 0
        %3165 = vmatpush1.bf16.msra.mxu0 %v3099
        %3166 = vmatprep.subr.bf16.mxu0 0
        %3167 = vmatpush1.bf16.msra.mxu0 %v3100
        %3168 = vmatprep.subr.bf16.mxu0 0
        %3169 = vmatpush1.bf16.msra.mxu0 %v3101
        %3170 = vmatprep.subr.bf16.mxu0 0
        %3171 = vmatpush1.bf16.msra.mxu0 %v3102
        %3172 = vmatprep.subr.bf16.mxu0 0
        %3173 = vmatpush1.bf16.msra.mxu0 %v3103
        %3174 = vmatprep.subr.bf16.mxu0 0
        %3175 = vmatpush1.bf16.msra.mxu0 %v3104
        %3176 = vmatprep.subr.bf16.mxu0 0
        %3177 = vmatpush1.bf16.msra.mxu0 %v3105
        %3178 = vmatprep.subr.bf16.mxu0 0
        %3179 = vmatpush1.bf16.msra.mxu0 %v3106
        %3180 = vmatprep.subr.bf16.mxu0 0
        %3181 = vmatpush1.bf16.msra.mxu0 %v3107
        %3182 = vmatprep.subr.bf16.mxu0 0
        %3183 = vmatpush1.bf16.msra.mxu0 %v3108
        %3184 = vmatprep.subr.bf16.mxu0 0
        %3185 = vmatpush1.bf16.msra.mxu0 %v3109
        %3186 = vmatprep.subr.bf16.mxu0 0
        %3187 = vmatpush1.bf16.msra.mxu0 %v3110
        %3188 = vmatprep.subr.bf16.mxu0 0
        %3189 = vmatpush1.bf16.msra.mxu0 %v3111
        %3190 = vmatprep.subr.bf16.mxu0 0
        %3191 = vmatpush1.bf16.msra.mxu0 %v3112
        %3192 = vmatprep.subr.bf16.mxu0 0
        %3193 = vmatpush1.bf16.msra.mxu0 %v3113
        %3194 = vmatprep.mubr.bf16.mxu0 %v2903
        %3195 = vmatmul.mubr.bf16.gmra.mrb[0].mxu0 %v2902
        %v3196 = vpop.f32.mrb[0].mxu0
        %v3197 = vadd.f32 0.0, %v3196
        %v3198 = vpop.f32.mrb[0].mxu0
        %v3199 = vpop.f32.mrb[0].mxu0
        %v3200 = vpop.f32.mrb[0].mxu0
        %3201 = vdwg.mxu0
        %3202 = vmatprep.subr.bf16.mxu0 0
        %3203 = vmatpush1.bf16.msra.mxu0 %v3114
        %3204 = vmatprep.subr.bf16.mxu0 0
        %3205 = vmatpush1.bf16.msra.mxu0 %v3115
        %3206 = vmatprep.subr.bf16.mxu0 0
        %3207 = vmatpush1.bf16.msra.mxu0 %v3116
        %3208 = vmatprep.subr.bf16.mxu0 0
        %3209 = vmatpush1.bf16.msra.mxu0 %v3117
        %3210 = vmatprep.subr.bf16.mxu0 0
        %3211 = vmatpush1.bf16.msra.mxu0 %v3118
        %3212 = vmatprep.subr.bf16.mxu0 0
        %3213 = vmatpush1.bf16.msra.mxu0 %v3119
        %3214 = vmatprep.subr.bf16.mxu0 0
        %3215 = vmatpush1.bf16.msra.mxu0 %v3120
        %3216 = vmatprep.subr.bf16.mxu0 0
        %3217 = vmatpush1.bf16.msra.mxu0 %v3121
        %3218 = vmatprep.subr.bf16.mxu0 0
        %3219 = vmatpush1.bf16.msra.mxu0 %v3122
        %3220 = vmatprep.subr.bf16.mxu0 0
        %3221 = vmatpush1.bf16.msra.mxu0 %v3123
        %3222 = vmatprep.subr.bf16.mxu0 0
        %3223 = vmatpush1.bf16.msra.mxu0 %v3124
        %3224 = vmatprep.subr.bf16.mxu0 0
        %3225 = vmatpush1.bf16.msra.mxu0 %v3125
        %3226 = vmatprep.subr.bf16.mxu0 0
        %3227 = vmatpush1.bf16.msra.mxu0 %v3126
        %3228 = vmatprep.subr.bf16.mxu0 0
        %3229 = vmatpush1.bf16.msra.mxu0 %v3127
        %3230 = vmatprep.subr.bf16.mxu0 0
        %3231 = vmatpush1.bf16.msra.mxu0 %v3128
        %3232 = vmatprep.subr.bf16.mxu0 0
        %3233 = vmatpush1.bf16.msra.mxu0 %v3129
        %3234 = vmatprep.mubr.bf16.mxu0 %v2905
        %3235 = vmatmul.mubr.bf16.gmra.mrb[0].mxu0 %v2904
        %v3236 = vpop.f32.mrb[0].mxu0
        %v3237 = vadd.f32 %v3197, %v3236
        %v3238 = vpop.f32.mrb[0].mxu0
        %v3239 = vpop.f32.mrb[0].mxu0
        %v3240 = vpop.f32.mrb[0].mxu0
        %3241 = vdwg.mxu0
        %v3242 = vadd.f32 %v2741, %v3237
        %v3243 = vld [vmem:[%s892 + $0x30] sm:$0xff]
        %v3244 = vld [vmem:[%s892 + $0x38] sm:$0xff]
        %v3245 = vld [vmem:[%s892 + $0x70] sm:$0xff]
        %v3246 = vld [vmem:[%s892 + $0x78] sm:$0xff]
        %v3247 = vld [vmem:[%s892 + $0xb0] sm:$0xff]
        %v3248 = vld [vmem:[%s892 + $0xb8] sm:$0xff]
        %v3249 = vld [vmem:[%s892 + $0xf0] sm:$0xff]
        %v3250 = vld [vmem:[%s892 + $0xf8] sm:$0xff]
        %v3251 = vld [vmem:[%s901 + $0xc] sm:$0xf]
        %v3253 = vlaneseq
        %v3254 = vshrl.u32 %v3253, 7
        %v3255 = vsub.s32 0, %v3254
        %v3256 = vrot.slane %v3251, %v3255
        %v3257 = vlaneseq
        %v3258 = vshrl.u32 %v3257, 7
        %v3259 = vsub.s32 1, %v3258
        %v3260 = vrot.slane %v3251, %v3259
        %v3261 = vlaneseq
        %v3262 = vshrl.u32 %v3261, 7
        %v3263 = vsub.s32 2, %v3262
        %v3264 = vrot.slane %v3251, %v3263
        %v3265 = vlaneseq
        %v3266 = vshrl.u32 %v3265, 7
        %v3267 = vsub.s32 3, %v3266
        %v3268 = vrot.slane %v3251, %v3267
        %v3281 = vunpack.c.l.b16 %v3243
        %v3282 = vunpack.c.h.b16 %v3243
        %v3283 = vunpack.c.l.b16 %v3244
        %v3284 = vunpack.c.h.b16 %v3244
        %v3285 = vunpack.c.l.b16 %v3245
        %v3286 = vunpack.c.h.b16 %v3245
        %v3287 = vunpack.c.l.b16 %v3246
        %v3288 = vunpack.c.h.b16 %v3246
        %v3289 = vunpack.c.l.b16 %v3247
        %v3290 = vunpack.c.h.b16 %v3247
        %v3291 = vunpack.c.l.b16 %v3248
        %v3292 = vunpack.c.h.b16 %v3248
        %v3293 = vunpack.c.l.b16 %v3249
        %v3294 = vunpack.c.h.b16 %v3249
        %v3295 = vunpack.c.l.b16 %v3250
        %v3296 = vunpack.c.h.b16 %v3250
        %v3297 = vpack.c.b16 %v3285, %v3281
        %v3298 = vpack.c.b16 %v3286, %v3282
        %v3299 = vpack.c.b16 %v3287, %v3283
        %v3300 = vpack.c.b16 %v3288, %v3284
        %v3301 = vpack.c.b16 %v3293, %v3289
        %v3302 = vpack.c.b16 %v3294, %v3290
        %v3303 = vpack.c.b16 %v3295, %v3291
        %v3304 = vpack.c.b16 %v3296, %v3292
        %3313 = vmatprep.subr.bf16.mxu0 %v3298
        %3314 = vmatpush1.bf16.msra.mxu0 %v3297
        %3315 = vmatprep.subr.bf16.mxu0 %v3302
        %3316 = vmatpush1.bf16.msra.mxu0 %v3301
        %3317 = vmatprep.subr.bf16.mxu0 0
        %3318 = vmatpush1.bf16.msra.mxu0 0
        %3319 = vmatprep.subr.bf16.mxu0 0
        %3320 = vmatpush1.bf16.msra.mxu0 0
        %3321 = vmatprep.subr.bf16.mxu0 0
        %3322 = vmatpush1.bf16.msra.mxu0 0
        %3323 = vmatprep.subr.bf16.mxu0 0
        %3324 = vmatpush1.bf16.msra.mxu0 0
        %3325 = vmatprep.subr.bf16.mxu0 0
        %3326 = vmatpush1.bf16.msra.mxu0 0
        %3327 = vmatprep.subr.bf16.mxu0 0
        %3328 = vmatpush1.bf16.msra.mxu0 0
        %3329 = vmatprep.subr.bf16.mxu0 0
        %3330 = vmatpush1.bf16.msra.mxu0 0
        %3331 = vmatprep.subr.bf16.mxu0 0
        %3332 = vmatpush1.bf16.msra.mxu0 0
        %3333 = vmatprep.subr.bf16.mxu0 0
        %3334 = vmatpush1.bf16.msra.mxu0 0
        %3335 = vmatprep.subr.bf16.mxu0 0
        %3336 = vmatpush1.bf16.msra.mxu0 0
        %3337 = vmatprep.subr.bf16.mxu0 0
        %3338 = vmatpush1.bf16.msra.mxu0 0
        %3339 = vmatprep.subr.bf16.mxu0 0
        %3340 = vmatpush1.bf16.msra.mxu0 0
        %3341 = vmatprep.subr.bf16.mxu0 0
        %3342 = vmatpush1.bf16.msra.mxu0 0
        %3343 = vmatprep.subr.bf16.mxu0 0
        %3344 = vmatpush1.bf16.msra.mxu0 0
        %3345 = vmatprep.mubr.bf16.mxu0 0
        %3346 = vmatmul.mubr.bf16.gmra.mrb[0].mxu0 %v1822
        %v3347 = vpop.f32.mrb[0].mxu0
        %v3348 = vadd.f32 %v3256, %v3347
        %v3349 = vpop.f32.mrb[0].mxu0
        %v3350 = vadd.f32 %v3260, %v3349
        %v3351 = vpop.f32.mrb[0].mxu0
        %v3352 = vpop.f32.mrb[0].mxu0
        %3353 = vdwg.mxu0
        %3354 = vmatprep.subr.bf16.mxu0 %v3300
        %3355 = vmatpush1.bf16.msra.mxu0 %v3299
        %3356 = vmatprep.subr.bf16.mxu0 %v3304
        %3357 = vmatpush1.bf16.msra.mxu0 %v3303
        %3358 = vmatprep.subr.bf16.mxu0 0
        %3359 = vmatpush1.bf16.msra.mxu0 0
        %3360 = vmatprep.subr.bf16.mxu0 0
        %3361 = vmatpush1.bf16.msra.mxu0 0
        %3362 = vmatprep.subr.bf16.mxu0 0
        %3363 = vmatpush1.bf16.msra.mxu0 0
        %3364 = vmatprep.subr.bf16.mxu0 0
        %3365 = vmatpush1.bf16.msra.mxu0 0
        %3366 = vmatprep.subr.bf16.mxu0 0
        %3367 = vmatpush1.bf16.msra.mxu0 0
        %3368 = vmatprep.subr.bf16.mxu0 0
        %3369 = vmatpush1.bf16.msra.mxu0 0
        %3370 = vmatprep.subr.bf16.mxu0 0
        %3371 = vmatpush1.bf16.msra.mxu0 0
        %3372 = vmatprep.subr.bf16.mxu0 0
        %3373 = vmatpush1.bf16.msra.mxu0 0
        %3374 = vmatprep.subr.bf16.mxu0 0
        %3375 = vmatpush1.bf16.msra.mxu0 0
        %3376 = vmatprep.subr.bf16.mxu0 0
        %3377 = vmatpush1.bf16.msra.mxu0 0
        %3378 = vmatprep.subr.bf16.mxu0 0
        %3379 = vmatpush1.bf16.msra.mxu0 0
        %3380 = vmatprep.subr.bf16.mxu0 0
        %3381 = vmatpush1.bf16.msra.mxu0 0
        %3382 = vmatprep.subr.bf16.mxu0 0
        %3383 = vmatpush1.bf16.msra.mxu0 0
        %3384 = vmatprep.subr.bf16.mxu0 0
        %3385 = vmatpush1.bf16.msra.mxu0 0
        %3386 = vmatprep.mubr.bf16.mxu0 0
        %3387 = vmatmul.mubr.bf16.gmra.mrb[0].mxu0 %v1822
        %v3388 = vpop.f32.mrb[0].mxu0
        %v3389 = vadd.f32 %v3264, %v3388
        %v3390 = vpop.f32.mrb[0].mxu0
        %v3391 = vadd.f32 %v3268, %v3390
        %v3392 = vpop.f32.mrb[0].mxu0
        %v3393 = vpop.f32.mrb[0].mxu0
        %3394 = vdwg.mxu0
        %v3395 = vmax.f32 %v3348, 0.0
        %v3396 = vmax.f32 %v3350, 0.0
        %v3397 = vmax.f32 %v3389, 0.0
        %v3398 = vmax.f32 %v3391, 0.0
        %v3399 = vpack.c.bf16 %v3395, %v3395
        %v3400 = vpack.c.bf16 %v3396, %v3396
        %v3401 = vpack.c.bf16 %v3397, %v3397
        %v3402 = vpack.c.bf16 %v3398, %v3398
        %v3403 = vld [vmem:[%s910 + $0x300] sm:$0xf]
        %v3404 = vld [vmem:[%s910 + $0x304] sm:$0xf]
        %v3405 = vld [vmem:[%s910 + $0x308] sm:$0xf]
        %v3406 = vld [vmem:[%s910 + $0x30c] sm:$0xf]
        %v3407 = vld [vmem:[%s910 + $0x310] sm:$0xf]
        %v3408 = vld [vmem:[%s910 + $0x314] sm:$0xf]
        %v3409 = vld [vmem:[%s910 + $0x318] sm:$0xf]
        %v3410 = vld [vmem:[%s910 + $0x31c] sm:$0xf]
        %v3411 = vld [vmem:[%s910 + $0x320] sm:$0xf]
        %v3412 = vld [vmem:[%s910 + $0x324] sm:$0xf]
        %v3413 = vld [vmem:[%s910 + $0x328] sm:$0xf]
        %v3414 = vld [vmem:[%s910 + $0x32c] sm:$0xf]
        %v3415 = vld [vmem:[%s910 + $0x330] sm:$0xf]
        %v3416 = vld [vmem:[%s910 + $0x334] sm:$0xf]
        %v3417 = vld [vmem:[%s910 + $0x338] sm:$0xf]
        %v3418 = vld [vmem:[%s910 + $0x33c] sm:$0xf]
        %v3419 = vld [vmem:[%s910 + $0x340] sm:$0xf]
        %v3420 = vld [vmem:[%s910 + $0x344] sm:$0xf]
        %v3421 = vld [vmem:[%s910 + $0x348] sm:$0xf]
        %v3422 = vld [vmem:[%s910 + $0x34c] sm:$0xf]
        %v3423 = vld [vmem:[%s910 + $0x350] sm:$0xf]
        %v3424 = vld [vmem:[%s910 + $0x354] sm:$0xf]
        %v3425 = vld [vmem:[%s910 + $0x358] sm:$0xf]
        %v3426 = vld [vmem:[%s910 + $0x35c] sm:$0xf]
        %v3427 = vld [vmem:[%s910 + $0x360] sm:$0xf]
        %v3428 = vld [vmem:[%s910 + $0x364] sm:$0xf]
        %v3429 = vld [vmem:[%s910 + $0x368] sm:$0xf]
        %v3430 = vld [vmem:[%s910 + $0x36c] sm:$0xf]
        %v3431 = vld [vmem:[%s910 + $0x370] sm:$0xf]
        %v3432 = vld [vmem:[%s910 + $0x374] sm:$0xf]
        %v3433 = vld [vmem:[%s910 + $0x378] sm:$0xf]
        %v3434 = vld [vmem:[%s910 + $0x37c] sm:$0xf]
        %v3435 = vld [vmem:[%s910 + $0x380] sm:$0xf]
        %v3436 = vld [vmem:[%s910 + $0x384] sm:$0xf]
        %v3437 = vld [vmem:[%s910 + $0x388] sm:$0xf]
        %v3438 = vld [vmem:[%s910 + $0x38c] sm:$0xf]
        %v3439 = vld [vmem:[%s910 + $0x390] sm:$0xf]
        %v3440 = vld [vmem:[%s910 + $0x394] sm:$0xf]
        %v3441 = vld [vmem:[%s910 + $0x398] sm:$0xf]
        %v3442 = vld [vmem:[%s910 + $0x39c] sm:$0xf]
        %v3443 = vld [vmem:[%s910 + $0x3a0] sm:$0xf]
        %v3444 = vld [vmem:[%s910 + $0x3a4] sm:$0xf]
        %v3445 = vld [vmem:[%s910 + $0x3a8] sm:$0xf]
        %v3446 = vld [vmem:[%s910 + $0x3ac] sm:$0xf]
        %v3447 = vld [vmem:[%s910 + $0x3b0] sm:$0xf]
        %v3448 = vld [vmem:[%s910 + $0x3b4] sm:$0xf]
        %v3449 = vld [vmem:[%s910 + $0x3b8] sm:$0xf]
        %v3450 = vld [vmem:[%s910 + $0x3bc] sm:$0xf]
        %v3451 = vld [vmem:[%s910 + $0x3c0] sm:$0xf]
        %v3452 = vld [vmem:[%s910 + $0x3c4] sm:$0xf]
        %v3453 = vld [vmem:[%s910 + $0x3c8] sm:$0xf]
        %v3454 = vld [vmem:[%s910 + $0x3cc] sm:$0xf]
        %v3455 = vld [vmem:[%s910 + $0x3d0] sm:$0xf]
        %v3456 = vld [vmem:[%s910 + $0x3d4] sm:$0xf]
        %v3457 = vld [vmem:[%s910 + $0x3d8] sm:$0xf]
        %v3458 = vld [vmem:[%s910 + $0x3dc] sm:$0xf]
        %v3459 = vld [vmem:[%s910 + $0x3e0] sm:$0xf]
        %v3460 = vld [vmem:[%s910 + $0x3e4] sm:$0xf]
        %v3461 = vld [vmem:[%s910 + $0x3e8] sm:$0xf]
        %v3462 = vld [vmem:[%s910 + $0x3ec] sm:$0xf]
        %v3463 = vld [vmem:[%s910 + $0x3f0] sm:$0xf]
        %v3464 = vld [vmem:[%s910 + $0x3f4] sm:$0xf]
        %v3465 = vld [vmem:[%s910 + $0x3f8] sm:$0xf]
        %v3466 = vld [vmem:[%s910 + $0x3fc] sm:$0xf]
        %v3531 = vunpack.c.l.b16 %v3403
        %v3532 = vunpack.c.l.b16 %v3404
        %v3533 = vunpack.c.l.b16 %v3405
        %v3534 = vunpack.c.l.b16 %v3406
        %v3535 = vunpack.c.l.b16 %v3407
        %v3536 = vunpack.c.l.b16 %v3408
        %v3537 = vunpack.c.l.b16 %v3409
        %v3538 = vunpack.c.l.b16 %v3410
        %v3539 = vunpack.c.l.b16 %v3411
        %v3540 = vunpack.c.l.b16 %v3412
        %v3541 = vunpack.c.l.b16 %v3413
        %v3542 = vunpack.c.l.b16 %v3414
        %v3543 = vunpack.c.l.b16 %v3415
        %v3544 = vunpack.c.l.b16 %v3416
        %v3545 = vunpack.c.l.b16 %v3417
        %v3546 = vunpack.c.l.b16 %v3418
        %v3547 = vunpack.c.l.b16 %v3419
        %v3548 = vunpack.c.l.b16 %v3420
        %v3549 = vunpack.c.l.b16 %v3421
        %v3550 = vunpack.c.l.b16 %v3422
        %v3551 = vunpack.c.l.b16 %v3423
        %v3552 = vunpack.c.l.b16 %v3424
        %v3553 = vunpack.c.l.b16 %v3425
        %v3554 = vunpack.c.l.b16 %v3426
        %v3555 = vunpack.c.l.b16 %v3427
        %v3556 = vunpack.c.l.b16 %v3428
        %v3557 = vunpack.c.l.b16 %v3429
        %v3558 = vunpack.c.l.b16 %v3430
        %v3559 = vunpack.c.l.b16 %v3431
        %v3560 = vunpack.c.l.b16 %v3432
        %v3561 = vunpack.c.l.b16 %v3433
        %v3562 = vunpack.c.l.b16 %v3434
        %v3563 = vunpack.c.l.b16 %v3435
        %v3564 = vunpack.c.l.b16 %v3436
        %v3565 = vunpack.c.l.b16 %v3437
        %v3566 = vunpack.c.l.b16 %v3438
        %v3567 = vunpack.c.l.b16 %v3439
        %v3568 = vunpack.c.l.b16 %v3440
        %v3569 = vunpack.c.l.b16 %v3441
        %v3570 = vunpack.c.l.b16 %v3442
        %v3571 = vunpack.c.l.b16 %v3443
        %v3572 = vunpack.c.l.b16 %v3444
        %v3573 = vunpack.c.l.b16 %v3445
        %v3574 = vunpack.c.l.b16 %v3446
        %v3575 = vunpack.c.l.b16 %v3447
        %v3576 = vunpack.c.l.b16 %v3448
        %v3577 = vunpack.c.l.b16 %v3449
        %v3578 = vunpack.c.l.b16 %v3450
        %v3579 = vunpack.c.l.b16 %v3451
        %v3580 = vunpack.c.l.b16 %v3452
        %v3581 = vunpack.c.l.b16 %v3453
        %v3582 = vunpack.c.l.b16 %v3454
        %v3583 = vunpack.c.l.b16 %v3455
        %v3584 = vunpack.c.l.b16 %v3456
        %v3585 = vunpack.c.l.b16 %v3457
        %v3586 = vunpack.c.l.b16 %v3458
        %v3587 = vunpack.c.l.b16 %v3459
        %v3588 = vunpack.c.l.b16 %v3460
        %v3589 = vunpack.c.l.b16 %v3461
        %v3590 = vunpack.c.l.b16 %v3462
        %v3591 = vunpack.c.l.b16 %v3463
        %v3592 = vunpack.c.l.b16 %v3464
        %v3593 = vunpack.c.l.b16 %v3465
        %v3594 = vunpack.c.l.b16 %v3466
        %v3595 = vpack.c.b16 %v3532, %v3531
        %v3596 = vpack.c.b16 %v3534, %v3533
        %v3597 = vpack.c.b16 %v3536, %v3535
        %v3598 = vpack.c.b16 %v3538, %v3537
        %v3599 = vpack.c.b16 %v3540, %v3539
        %v3600 = vpack.c.b16 %v3542, %v3541
        %v3601 = vpack.c.b16 %v3544, %v3543
        %v3602 = vpack.c.b16 %v3546, %v3545
        %v3603 = vpack.c.b16 %v3548, %v3547
        %v3604 = vpack.c.b16 %v3550, %v3549
        %v3605 = vpack.c.b16 %v3552, %v3551
        %v3606 = vpack.c.b16 %v3554, %v3553
        %v3607 = vpack.c.b16 %v3556, %v3555
        %v3608 = vpack.c.b16 %v3558, %v3557
        %v3609 = vpack.c.b16 %v3560, %v3559
        %v3610 = vpack.c.b16 %v3562, %v3561
        %v3611 = vpack.c.b16 %v3564, %v3563
        %v3612 = vpack.c.b16 %v3566, %v3565
        %v3613 = vpack.c.b16 %v3568, %v3567
        %v3614 = vpack.c.b16 %v3570, %v3569
        %v3615 = vpack.c.b16 %v3572, %v3571
        %v3616 = vpack.c.b16 %v3574, %v3573
        %v3617 = vpack.c.b16 %v3576, %v3575
        %v3618 = vpack.c.b16 %v3578, %v3577
        %v3619 = vpack.c.b16 %v3580, %v3579
        %v3620 = vpack.c.b16 %v3582, %v3581
        %v3621 = vpack.c.b16 %v3584, %v3583
        %v3622 = vpack.c.b16 %v3586, %v3585
        %v3623 = vpack.c.b16 %v3588, %v3587
        %v3624 = vpack.c.b16 %v3590, %v3589
        %v3625 = vpack.c.b16 %v3592, %v3591
        %v3626 = vpack.c.b16 %v3594, %v3593
        %3659 = vmatprep.subr.bf16.mxu0 0
        %3660 = vmatpush1.bf16.msra.mxu0 %v3595
        %3661 = vmatprep.subr.bf16.mxu0 0
        %3662 = vmatpush1.bf16.msra.mxu0 %v3596
        %3663 = vmatprep.subr.bf16.mxu0 0
        %3664 = vmatpush1.bf16.msra.mxu0 %v3597
        %3665 = vmatprep.subr.bf16.mxu0 0
        %3666 = vmatpush1.bf16.msra.mxu0 %v3598
        %3667 = vmatprep.subr.bf16.mxu0 0
        %3668 = vmatpush1.bf16.msra.mxu0 %v3599
        %3669 = vmatprep.subr.bf16.mxu0 0
        %3670 = vmatpush1.bf16.msra.mxu0 %v3600
        %3671 = vmatprep.subr.bf16.mxu0 0
        %3672 = vmatpush1.bf16.msra.mxu0 %v3601
        %3673 = vmatprep.subr.bf16.mxu0 0
        %3674 = vmatpush1.bf16.msra.mxu0 %v3602
        %3675 = vmatprep.subr.bf16.mxu0 0
        %3676 = vmatpush1.bf16.msra.mxu0 %v3603
        %3677 = vmatprep.subr.bf16.mxu0 0
        %3678 = vmatpush1.bf16.msra.mxu0 %v3604
        %3679 = vmatprep.subr.bf16.mxu0 0
        %3680 = vmatpush1.bf16.msra.mxu0 %v3605
        %3681 = vmatprep.subr.bf16.mxu0 0
        %3682 = vmatpush1.bf16.msra.mxu0 %v3606
        %3683 = vmatprep.subr.bf16.mxu0 0
        %3684 = vmatpush1.bf16.msra.mxu0 %v3607
        %3685 = vmatprep.subr.bf16.mxu0 0
        %3686 = vmatpush1.bf16.msra.mxu0 %v3608
        %3687 = vmatprep.subr.bf16.mxu0 0
        %3688 = vmatpush1.bf16.msra.mxu0 %v3609
        %3689 = vmatprep.subr.bf16.mxu0 0
        %3690 = vmatpush1.bf16.msra.mxu0 %v3610
        %3691 = vmatprep.mubr.bf16.mxu0 %v3400
        %3692 = vmatmul.mubr.bf16.gmra.mrb[0].mxu0 %v3399
        %v3693 = vpop.f32.mrb[0].mxu0
        %v3694 = vadd.f32 0.0, %v3693
        %v3695 = vpop.f32.mrb[0].mxu0
        %v3696 = vpop.f32.mrb[0].mxu0
        %v3697 = vpop.f32.mrb[0].mxu0
        %3698 = vdwg.mxu0
        %3699 = vmatprep.subr.bf16.mxu0 0
        %3700 = vmatpush1.bf16.msra.mxu0 %v3611
        %3701 = vmatprep.subr.bf16.mxu0 0
        %3702 = vmatpush1.bf16.msra.mxu0 %v3612
        %3703 = vmatprep.subr.bf16.mxu0 0
        %3704 = vmatpush1.bf16.msra.mxu0 %v3613
        %3705 = vmatprep.subr.bf16.mxu0 0
        %3706 = vmatpush1.bf16.msra.mxu0 %v3614
        %3707 = vmatprep.subr.bf16.mxu0 0
        %3708 = vmatpush1.bf16.msra.mxu0 %v3615
        %3709 = vmatprep.subr.bf16.mxu0 0
        %3710 = vmatpush1.bf16.msra.mxu0 %v3616
        %3711 = vmatprep.subr.bf16.mxu0 0
        %3712 = vmatpush1.bf16.msra.mxu0 %v3617
        %3713 = vmatprep.subr.bf16.mxu0 0
        %3714 = vmatpush1.bf16.msra.mxu0 %v3618
        %3715 = vmatprep.subr.bf16.mxu0 0
        %3716 = vmatpush1.bf16.msra.mxu0 %v3619
        %3717 = vmatprep.subr.bf16.mxu0 0
        %3718 = vmatpush1.bf16.msra.mxu0 %v3620
        %3719 = vmatprep.subr.bf16.mxu0 0
        %3720 = vmatpush1.bf16.msra.mxu0 %v3621
        %3721 = vmatprep.subr.bf16.mxu0 0
        %3722 = vmatpush1.bf16.msra.mxu0 %v3622
        %3723 = vmatprep.subr.bf16.mxu0 0
        %3724 = vmatpush1.bf16.msra.mxu0 %v3623
        %3725 = vmatprep.subr.bf16.mxu0 0
        %3726 = vmatpush1.bf16.msra.mxu0 %v3624
        %3727 = vmatprep.subr.bf16.mxu0 0
        %3728 = vmatpush1.bf16.msra.mxu0 %v3625
        %3729 = vmatprep.subr.bf16.mxu0 0
        %3730 = vmatpush1.bf16.msra.mxu0 %v3626
        %3731 = vmatprep.mubr.bf16.mxu0 %v3402
        %3732 = vmatmul.mubr.bf16.gmra.mrb[0].mxu0 %v3401
        %v3733 = vpop.f32.mrb[0].mxu0
        %v3734 = vadd.f32 %v3694, %v3733
        %v3735 = vpop.f32.mrb[0].mxu0
        %v3736 = vpop.f32.mrb[0].mxu0
        %v3737 = vpop.f32.mrb[0].mxu0
        %3738 = vdwg.mxu0
        %v3739 = vadd.f32 %v3242, %v3734
        %v3740 = vld [vmem:[%s918] sm:$0x1]
        %v3742 = vlaneseq
        %v3743 = vshrl.u32 %v3742, 7
        %v3744 = vsub.s32 0, %v3743
        %v3745 = vrot.slane %v3740, %v3744
        %v3747 = vadd.f32 %v3739, %v3745
        %v3748 = vadd.f32 %v1749, %v3747
        %v3749 = vld [vmem:[%s926] sm:$0x1]
        %v3750 = vld [vmem:[%s934] sm:$0x1]
        %v3751 = vsel %vm1136, %v3748, 0.0
        %3752 = vadd.xlane.f32.xlu0 %v3751
        %v3753 = vpop.xlane.xlu0 %3752
        %v3754 = vmul.f32 %v3753, %v1725
        %v3755 = vsub.f32 %v3748, %v3754
        %v3756 = vmul.f32 %v3755, %v3755
        %v3757 = vsel %vm1136, %v3756, 0.0
        %3758 = vadd.xlane.f32.xlu0 %v3757
        %v3759 = vpop.xlane.xlu0 %3758
        %v3760 = vmul.f32 %v3759, %v1725
        %v3761 = vadd.f32 %v3760, 1e-05
        %v3762 = vrsqrt.pop %v3761
        %v3763 = vmul.f32 %v3755, %v3762
        %v3765 = vlaneseq
        %v3766 = vshrl.u32 %v3765, 7
        %v3767 = vsub.s32 0, %v3766
        %v3768 = vrot.slane %v3749, %v3767
        %v3770 = vmul.f32 %v3763, %v3768
        %v3772 = vlaneseq
        %v3773 = vshrl.u32 %v3772, 7
        %v3774 = vsub.s32 0, %v3773
        %v3775 = vrot.slane %v3750, %v3774
        %v3777 = vadd.f32 %v3770, %v3775
        %3778 = vst.msk [vmem:[#allocation2] sm:$0xff] %vm1136, %v3777
        %p3779 = scmp.eq.s32.totalorder %s59, 1
        // Predicated region
        $region161: #{transformer_time_series_forward.1} parent=87 // pred_check
          %p3780 = pneg %p3779
        $region162: #{transformer_time_series_forward.1} parent=87 // pred_check_branch
          %3782 = sbr.rel (%p3780) target = $region164
        $region163: #{transformer_time_series_forward.1} parent=87 // pred_region
          %v3783 = vpack.c.bf16 %v3777, %v3777
          %v3784 = vld [vmem:[#allocation28] sm:$0xf]
          %v3785 = vld [vmem:[#allocation28 + $0x4] sm:$0xf]
          %v3786 = vld [vmem:[#allocation28 + $0x8] sm:$0xf]
          %v3787 = vld [vmem:[#allocation28 + $0xc] sm:$0xf]
          %v3788 = vld [vmem:[#allocation30] sm:$0x1]
          %v3790 = vlaneseq
          %v3791 = vshrl.u32 %v3790, 7
          %v3792 = vsub.s32 0, %v3791
          %v3793 = vrot.slane %v3788, %v3792
          %v3799 = vunpack.c.l.b16 %v3784
          %v3800 = vunpack.c.l.b16 %v3785
          %v3801 = vunpack.c.l.b16 %v3786
          %v3802 = vunpack.c.l.b16 %v3787
          %v3803 = vpack.c.b16 %v3800, %v3799
          %v3804 = vpack.c.b16 %v3802, %v3801
          %v3808 = vsel %vm1136, %v3783, 0
          %3810 = vmatprep.subr.bf16.mxu0 0
          %3811 = vmatpush1.bf16.msra.mxu0 %v3803
          %3812 = vmatprep.subr.bf16.mxu0 0
          %3813 = vmatpush1.bf16.msra.mxu0 %v3804
          %3814 = vmatprep.subr.bf16.mxu0 0
          %3815 = vmatpush1.bf16.msra.mxu0 0
          %3816 = vmatprep.subr.bf16.mxu0 0
          %3817 = vmatpush1.bf16.msra.mxu0 0
          %3818 = vmatprep.subr.bf16.mxu0 0
          %3819 = vmatpush1.bf16.msra.mxu0 0
          %3820 = vmatprep.subr.bf16.mxu0 0
          %3821 = vmatpush1.bf16.msra.mxu0 0
          %3822 = vmatprep.subr.bf16.mxu0 0
          %3823 = vmatpush1.bf16.msra.mxu0 0
          %3824 = vmatprep.subr.bf16.mxu0 0
          %3825 = vmatpush1.bf16.msra.mxu0 0
          %3826 = vmatprep.subr.bf16.mxu0 0
          %3827 = vmatpush1.bf16.msra.mxu0 0
          %3828 = vmatprep.subr.bf16.mxu0 0
          %3829 = vmatpush1.bf16.msra.mxu0 0
          %3830 = vmatprep.subr.bf16.mxu0 0
          %3831 = vmatpush1.bf16.msra.mxu0 0
          %3832 = vmatprep.subr.bf16.mxu0 0
          %3833 = vmatpush1.bf16.msra.mxu0 0
          %3834 = vmatprep.subr.bf16.mxu0 0
          %3835 = vmatpush1.bf16.msra.mxu0 0
          %3836 = vmatprep.subr.bf16.mxu0 0
          %3837 = vmatpush1.bf16.msra.mxu0 0
          %3838 = vmatprep.subr.bf16.mxu0 0
          %3839 = vmatpush1.bf16.msra.mxu0 0
          %3840 = vmatprep.subr.bf16.mxu0 0
          %3841 = vmatpush1.bf16.msra.mxu0 0
          %3842 = vmatprep.mubr.bf16.mxu0 0
          %3843 = vmatmul.mubr.bf16.gmra.mrb[0].mxu0 %v3808
          %v3844 = vpop.f32.mrb[0].mxu0
          %v3845 = vadd.f32 %v3793, %v3844
          %v3846 = vpop.f32.mrb[0].mxu0
          %v3847 = vpop.f32.mrb[0].mxu0
          %v3848 = vpop.f32.mrb[0].mxu0
          %3849 = vdwg.mxu0
          %3850 = vst [vmem:[%s1045] sm:$0xff] %v3845
        $region164: #{transformer_time_series_forward.1} parent=87 // pred_fallthru
          _
        %s3851 = sand.u32 %s496, 1
        %s3852 = scalar_lea.sflag [#allocation6], %s3851
        %s3853 = sand.u32 %s496, 1
        %s3854 = smul.addr %s3853, 8
        %s3855 = scalar_lea.vmem [#allocation31], %s3854
        // Predicated region
        $region165: #{transformer_time_series_forward.1} parent=87 // pred_check
          %p3856 = pneg %p506
        $region166: #{transformer_time_series_forward.1} parent=87 // pred_check_branch
          %3858 = sbr.rel (%p3856) target = $region168
        $region167: #{transformer_time_series_forward.1} parent=87 // pred_region
          %s3860 = ssub.s32 128, 128
          %3861 = vsyncadd %s3852, %s3860
          %s3862 = smul.addr %s58, 128
          %s3863 = scalar_lea.hbm %s17, %s3862
          %s3865 = sshll.u32 %s3855, 4
          %s3866 = int_to_ptr.vmem [resolvable:$true] %s3865
          %3868 = dma.vmem_to_hbm [thread:$0]  %s3866, 128, %s3863, %s3852
        $region168: #{transformer_time_series_forward.1} parent=87 // pred_fallthru
          _
      $region88: #{transformer_time_series_forward.1} parent=5 // pred_fallthru
        _
      %p3869 = scmp.le.s32.totalorder 2, %s49
      // Predicated region
      $region169: #{transformer_time_series_forward.1} parent=5 // pred_check
        %p3870 = pneg %p3869
      $region170: #{transformer_time_series_forward.1} parent=5 // pred_check_branch
        %3872 = sbr.rel (%p3870) target = $region172
      $region171: #{transformer_time_series_forward.1} parent=5 // pred_region
        %s3873 = ssub.s32 %s49, 2
        // Predicated region
        $region173: #{transformer_time_series_forward.1} parent=171 // pred_check
          %p3874 = pneg %p512
        $region174: #{transformer_time_series_forward.1} parent=171 // pred_check_branch
          %3876 = sbr.rel (%p3874) target = $region176
        $region175: #{transformer_time_series_forward.1} parent=171 // pred_region
          %s3877 = sand.u32 %s497, 1
          %s3878 = scalar_lea.sflag [#allocation6], %s3877
          %s3879 = sand.u32 %s497, 1
          %s3880 = smul.addr %s3879, 8
          %s3881 = scalar_lea.vmem [#allocation31], %s3880
          %3882 = dma.done %s3878, 128
        $region176: #{transformer_time_series_forward.1} parent=171 // pred_fallthru
          _
      $region172: #{transformer_time_series_forward.1} parent=5 // pred_fallthru
        _
    $region6: #{transformer_time_series_forward.1} parent=1 // loop_footer
      %s53 = sadd.s32 1, %s49
    $region7: #{transformer_time_series_forward.1} parent=1 // loop_footer_branch
      %48 = sbr.rel target = $region3
    $region8: #{transformer_time_series_forward.1} parent=1 // loop_exit
      _
    %3883 = vsyncpa [#allocation5], 1
    %s3884 = scalar_lea.sflag [#allocation5], 1
    %3885 = vsyncpa %s3884, 1
    %3886 = vsyncpa [#allocation8], 1
    %3887 = vsyncpa [#allocation11], 1
    %s3888 = scalar_lea.sflag [#allocation11], 1
    %3889 = vsyncpa %s3888, 1
    %3890 = vsyncpa [#allocation14], 1
    %s3891 = scalar_lea.sflag [#allocation14], 1
    %3892 = vsyncpa %s3891, 1
    %3893 = vsyncpa [#allocation17], 1
    %s3894 = scalar_lea.sflag [#allocation17], 1
    %3895 = vsyncpa %s3894, 1
    %3896 = vsyncpa [#allocation20], 1
    %s3897 = scalar_lea.sflag [#allocation20], 1
    %3898 = vsyncpa %s3897, 1
    %3899 = vsyncpa [#allocation23], 1
    %s3900 = scalar_lea.sflag [#allocation23], 1
    %3901 = vsyncpa %s3900, 1
    %3902 = vsyncpa [#allocation26], 1
    %s3903 = scalar_lea.sflag [#allocation26], 1
    %3904 = vsyncpa %s3903, 1
    %3905 = vsyncpa [#allocation29], 1
    %3906 = vsyncpa [#allocation6], 1
    %s3907 = scalar_lea.sflag [#allocation6], 1
    %3908 = vsyncpa %s3907, 1

</llo_original>
